<compile_context>
chip_gen: v7x
topology: tpu7x:2x2x1
jax: 0.10.0
libtpu: 0.0.40
codegen_flags: <defaults>
</compile_context>

<pallas_src>
import math
from functools import partial

import jax
import jax.numpy as jnp
from jax.experimental import pallas as pl
from jax.experimental.pallas import tpu as pltpu

_LN_EPS = 1e-5


# ----------------------------------------------------------------------------
# In-kernel helpers (traced inline; everything stays in VMEM / vregs)
# ----------------------------------------------------------------------------
def _layernorm(y, g, b, eps):
    """y: [M, D] f32, g/b: [1, D]."""
    mu = jnp.mean(y, axis=-1, keepdims=True)
    var = jnp.mean(jnp.square(y - mu), axis=-1, keepdims=True)
    return (y - mu) * jax.lax.rsqrt(var + eps) * g + b


def _mha_heads(q, k, v, mask, nhead):
    """q: [Tq, D], k/v: [Tk, D] (f32), mask: [Tq, Tk] additive or None -> [Tq, D] f32.

    1/sqrt(Dh) is already folded into the q projection weights.
    """
    _, d_model = q.shape
    dh = d_model // nhead
    outs = []
    for h in range(nhead):  # static unrolled loop over heads, all in VMEM
        sl = slice(h * dh, (h + 1) * dh)
        s = jnp.dot(q[:, sl], k[:, sl].T, preferred_element_type=jnp.float32)
        if mask is not None:
            s = s + mask
        s = s - jnp.max(s, axis=-1, keepdims=True)
        p = jnp.exp(s)
        p = p * pl.reciprocal(jnp.sum(p, axis=-1, keepdims=True), approx=True)
        outs.append(jnp.dot(p, v[:, sl], preferred_element_type=jnp.float32))
    return jnp.concatenate(outs, axis=-1)


# ----------------------------------------------------------------------------
# Fully fused decoder-layer kernel
# ----------------------------------------------------------------------------
def _make_layer_kernel(nhead, eps, with_mask):
    # Fused per layer: self-attn (q/k joint [D,2D] proj, v proj, per-head softmax+PV,
    # out proj, residual, LN1)  ->  image cross-attn (+LN3)  ->  FFN (+LN4),
    # plus the decoder-level norm as a second output (for return_intermediate / final norm).
    #
    # TODO(synk): for very long image memory, stream K/V over Tk blocks flash-style
    # (online softmax) instead of materializing full [T, S] scores in VMEM.
    def kernel(*refs):
        x_ref, qp_ref, mk_ref, mv_ref = refs[:4]
        idx = 4
        if with_mask:
            mask = refs[4][...].astype(jnp.float32)
            idx = 5
        else:
            mask = None
        (wqk, bqk, wv1, bv1, wo1, bo1, g1, bn1,
         wq2, bq2, wk2, bk2, wv2, bv2, wo2, bo2, g3, bn3,
         w1, bf1, w2, bf2, g4, bn4, ng, nb) = refs[idx:idx + 26]
        o_ref, n_ref = refs[idx + 26:]

        x = x_ref[0].astype(jnp.float32)               # [T, D]
        qp = qp_ref[0].astype(jnp.float32)             # [T, D]
        d_model = x.shape[-1]

        # --- self-attention + LN1 -------------------------------------------------
        u = x + qp                                     # q/k input: tgt + query_pos
        qk = jnp.dot(u, wqk[...], preferred_element_type=jnp.float32) + bqk[...]
        v = jnp.dot(x, wv1[...], preferred_element_type=jnp.float32) + bv1[...]
        attn = _mha_heads(qk[:, :d_model], qk[:, d_model:], v, mask, nhead)
        proj = jnp.dot(attn, wo1[...], preferred_element_type=jnp.float32) + bo1[...]
        x = _layernorm(x + proj, g1[...], bn1[...], eps)

        # --- cross-attention over image memory + LN3 ------------------------------
        u = x + qp
        q = jnp.dot(u, wq2[...], preferred_element_type=jnp.float32) + bq2[...]
        k = jnp.dot(mk_ref[0], wk2[...], preferred_element_type=jnp.float32) + bk2[...]
        v = jnp.dot(mv_ref[0], wv2[...], preferred_element_type=jnp.float32) + bv2[...]
        attn = _mha_heads(q, k, v, None, nhead)
        proj = jnp.dot(attn, wo2[...], preferred_element_type=jnp.float32) + bo2[...]
        x = _layernorm(x + proj, g3[...], bn3[...], eps)

        # --- FFN + LN4 --------------------------------------------------------------
        h = jnp.maximum(jnp.dot(x, w1[...], preferred_element_type=jnp.float32) + bf1[...], 0.0)
        y = _layernorm(x + jnp.dot(h, w2[...], preferred_element_type=jnp.float32) + bf2[...],
                       g4[...], bn4[...], eps)

        o_ref[0] = y.astype(o_ref.dtype)
        n_ref[0] = _layernorm(y, ng[...], nb[...], eps).astype(n_ref.dtype)

    return kernel


# ----------------------------------------------------------------------------
# pallas_call wrapper
# ----------------------------------------------------------------------------
def _rep_spec(a):
    """Replicated (same block every grid step) full-array BlockSpec."""
    nd = a.ndim
    return pl.BlockSpec(a.shape, lambda *_: (0,) * nd)


def fused_decoder_layer(x, query_pos, mem_k_in, mem_v_in, attn_mask, lp,
                        norm_g, norm_b, nhead, eps=_LN_EPS):
    """x, query_pos: [B, T, D]; mem_k_in (= memory+pos), mem_v_in (= memory): [B, S, D];
    attn_mask: [T, T] additive or None.  Returns (layer_out, decoder_norm(layer_out))."""
    B, T, D = x.shape
    S = mem_k_in.shape[1]
    with_mask = attn_mask is not None
    tgt_spec = pl.BlockSpec((1, T, D), lambda b: (b, 0, 0))
    mem_spec = pl.BlockSpec((1, S, D), lambda b: (b, 0, 0))

    sa, ca, ffn = lp["self_attn"], lp["cross_attn"], lp["ffn"]
    tensor_args = [x, query_pos, mem_k_in, mem_v_in]
    tensor_specs = [tgt_spec, tgt_spec, mem_spec, mem_spec]
    if with_mask:
        tensor_args.append(attn_mask)
        tensor_specs.append(_rep_spec(attn_mask))

    weights = [sa["wqk"], sa["bqk"], sa["wv"], sa["bv"], sa["wo"], sa["bo"], sa["g"], sa["b"],
               ca["wq"], ca["bq"], ca["wk"], ca["bk"], ca["wv"], ca["bv"],
               ca["wo"], ca["bo"], ca["g"], ca["b"],
               ffn["w1"], ffn["b1"], ffn["w2"], ffn["b2"], ffn["g"], ffn["b"],
               norm_g, norm_b]

    out, normed = pl.pallas_call(
        _make_layer_kernel(nhead, eps, with_mask),
        out_shape=(jax.ShapeDtypeStruct((B, T, D), x.dtype),
                   jax.ShapeDtypeStruct((B, T, D), x.dtype)),
        grid=(B,),
        in_specs=tensor_specs + [_rep_spec(w) for w in weights],
        out_specs=(tgt_spec, tgt_spec),
        compiler_params=pltpu.CompilerParams(
            dimension_semantics=("parallel",),
            vmem_limit_bytes=64 * 1024 * 1024),
    )(*tensor_args, *weights)
    return out, normed


# ----------------------------------------------------------------------------
# Decoder forward (layout conversion done once; 1 pallas_call per layer)
# ----------------------------------------------------------------------------
def transformer_decoder_forward(prepared, tgt, memory, text_memory=None,
                                tgt_mask=None, pos=None, query_pos=None,
                                nhead=4, return_intermediate=True):
    # TODO(synk): memory_mask / key-padding masks of the torch signature are not implemented
    # (unused in the UniTAB decoder path); text_memory is threaded but not attended to here.
    x = jnp.transpose(tgt, (1, 0, 2))                          # [B, T, D]
    mem = jnp.transpose(memory, (1, 0, 2))                     # [B, S, D]
    qpos = (jnp.transpose(query_pos, (1, 0, 2)) if query_pos is not None
            else jnp.zeros_like(x))
    mem_k_in = (mem + jnp.transpose(pos, (1, 0, 2))) if pos is not None else mem

    intermediates = []
    for lp in prepared["layers"]:
        x, normed = fused_decoder_layer(x, qpos, mem_k_in, mem, tgt_mask, lp,
                                        prepared["norm_g"], prepared["norm_b"], nhead)
        intermediates.append(normed)                           # = decoder_norm(layer output)

    if return_intermediate:
        # torch: intermediate[-1] is replaced by norm(final output) -> identical value already.
        stacked = jnp.stack(intermediates)                     # [L, B, T, D]
        return jnp.transpose(stacked, (0, 2, 1, 3))            # [L, T, B, D]
    return jnp.transpose(intermediates[-1], (1, 0, 2))         # [T, B, D]


# ----------------------------------------------------------------------------
# Parameter init (raw, torch-like) and one-time prep (fusion / scale folding)
# ----------------------------------------------------------------------------
def _init_linear(key, in_dim, out_dim):
    k1, k2 = jax.random.split(key)
    w = jax.random.normal(k1, (in_dim, out_dim), jnp.float32) * 0.02
    b = jax.random.normal(k2, (out_dim,), jnp.float32) * 0.02
    return w, b


def _init_attn(key, d_model):
    ks = jax.random.split(key, 4)
    wq, bq = _init_linear(ks[0], d_model, d_model)
    wk, bk = _init_linear(ks[1], d_model, d_model)
    wv, bv = _init_linear(ks[2], d_model, d_model)
    wo, bo = _init_linear(ks[3], d_model, d_model)
    return dict(wq=wq, bq=bq, wk=wk, bk=bk, wv=wv, bv=bv, wo=wo, bo=bo)


def init_decoder_params(key, num_layers, d_model, dim_ff):
    layers = []
    for _ in range(num_layers):
        key, k_sa, k_ca, k_f1, k_f2 = jax.random.split(key, 5)
        w1, b1 = _init_linear(k_f1, d_model, dim_ff)
        w2, b2 = _init_linear(k_f2, dim_ff, d_model)
        layers.append(dict(
            self_attn=_init_attn(k_sa, d_model),
            cross_attn=_init_attn(k_ca, d_model),
            w1=w1, b1=b1, w2=w2, b2=b2,
            norm1_g=jnp.ones((d_model,), jnp.float32), norm1_b=jnp.zeros((d_model,), jnp.float32),
            norm3_g=jnp.ones((d_model,), jnp.float32), norm3_b=jnp.zeros((d_model,), jnp.float32),
            norm4_g=jnp.ones((d_model,), jnp.float32), norm4_b=jnp.zeros((d_model,), jnp.float32),
        ))
    return dict(layers=layers,
                norm_g=jnp.ones((d_model,), jnp.float32),
                norm_b=jnp.zeros((d_model,), jnp.float32))


def prepare_decoder_params(params, nhead):
    """One-time prep: fuse Wq|Wk, fold 1/sqrt(Dh) into Wq/bq, reshape biases/norms to [1, N]."""
    d_model = params["norm_g"].shape[0]
    scale = 1.0 / math.sqrt(d_model // nhead)
    layers = []
    for lp in params["layers"]:
        sa, ca = lp["self_attn"], lp["cross_attn"]
        self_attn = dict(
            wqk=jnp.concatenate([sa["wq"] * scale, sa["wk"]], axis=1),
            bqk=jnp.concatenate([sa["bq"] * scale, sa["bk"]]).reshape(1, 2 * d_model),
            wv=sa["wv"], bv=sa["bv"].reshape(1, d_model),
            wo=sa["wo"], bo=sa["bo"].reshape(1, d_model),
            g=lp["norm1_g"].reshape(1, d_model), b=lp["norm1_b"].reshape(1, d_model),
        )
        cross_attn = dict(
            wq=ca["wq"] * scale, bq=(ca["bq"] * scale).reshape(1, d_model),
            wk=ca["wk"], bk=ca["bk"].reshape(1, d_model),
            wv=ca["wv"], bv=ca["bv"].reshape(1, d_model),
            wo=ca["wo"], bo=ca["bo"].reshape(1, d_model),
            g=lp["norm3_g"].reshape(1, d_model), b=lp["norm3_b"].reshape(1, d_model),
        )
        ffn = dict(
            w1=lp["w1"], b1=lp["b1"].reshape(1, -1),
            w2=lp["w2"], b2=lp["b2"].reshape(1, d_model),
            g=lp["norm4_g"].reshape(1, d_model), b=lp["norm4_b"].reshape(1, d_model),
        )
        layers.append(dict(self_attn=self_attn, cross_attn=cross_attn, ffn=ffn))
    return dict(layers=layers,
                norm_g=params["norm_g"].reshape(1, d_model),
                norm_b=params["norm_b"].reshape(1, d_model))


# ----------------------------------------------------------------------------
# Demo
# ----------------------------------------------------------------------------
if __name__ == "__main__":
    B = 2            # batch
    D = 32           # d_model
    NHEAD = 4
    FF = 64          # dim_feedforward
    LAYERS = 2
    T = 8            # target (query) sequence length
    S_MEM = 16       # image-memory tokens
    S_TXT = 6        # text-memory tokens (threaded, unused by layer)

    root = jax.random.PRNGKey(0)
    kp, k1, k2, k3, k4, k5 = jax.random.split(root, 6)

    raw_params = init_decoder_params(kp, LAYERS, D, FF)
    prepared = prepare_decoder_params(raw_params, NHEAD)

    tgt = jax.random.normal(k1, (T, B, D), jnp.float32)
    memory = jax.random.normal(k2, (S_MEM, B, D), jnp.float32)
    text_memory = jax.random.normal(k3, (S_TXT, B, D), jnp.float32)
    query_pos = jax.random.normal(k4, (T, B, D), jnp.float32)
    pos = jax.random.normal(k5, (S_MEM, B, D), jnp.float32)

    # causal (autoregressive) target mask, additive form, [T, T] (NOT broadcast to heads)
    causal = jnp.where(jnp.tril(jnp.ones((T, T), jnp.bool_)), 0.0, -1e9).astype(jnp.float32)

    fwd = jax.jit(partial(transformer_decoder_forward, nhead=NHEAD, return_intermediate=True))
    out = fwd(prepared, tgt, memory, text_memory,
              tgt_mask=causal, pos=pos, query_pos=query_pos)
    out = jax.block_until_ready(out)

    assert out.shape == (LAYERS, T, B, D)
    assert bool(jnp.all(jnp.isfinite(out)))
    print("KERNEL_OK")
</pallas_src>

<mosaic_0001>
module attributes {stable_mosaic.version = 11 : i64} {
  func.func @kernel(%arg0: i32, %arg1: memref<1x8x32xf32, #tpu.memory_space<vmem>>, %arg2: memref<1x8x32xf32, #tpu.memory_space<vmem>>, %arg3: memref<1x16x32xf32, #tpu.memory_space<vmem>>, %arg4: memref<1x16x32xf32, #tpu.memory_space<vmem>>, %arg5: memref<8x8xf32, #tpu.memory_space<vmem>>, %arg6: memref<32x64xf32, #tpu.memory_space<vmem>>, %arg7: memref<1x64xf32, #tpu.memory_space<vmem>>, %arg8: memref<32x32xf32, #tpu.memory_space<vmem>>, %arg9: memref<1x32xf32, #tpu.memory_space<vmem>>, %arg10: memref<32x32xf32, #tpu.memory_space<vmem>>, %arg11: memref<1x32xf32, #tpu.memory_space<vmem>>, %arg12: memref<1x32xf32, #tpu.memory_space<vmem>>, %arg13: memref<1x32xf32, #tpu.memory_space<vmem>>, %arg14: memref<32x32xf32, #tpu.memory_space<vmem>>, %arg15: memref<1x32xf32, #tpu.memory_space<vmem>>, %arg16: memref<32x32xf32, #tpu.memory_space<vmem>>, %arg17: memref<1x32xf32, #tpu.memory_space<vmem>>, %arg18: memref<32x32xf32, #tpu.memory_space<vmem>>, %arg19: memref<1x32xf32, #tpu.memory_space<vmem>>, %arg20: memref<32x32xf32, #tpu.memory_space<vmem>>, %arg21: memref<1x32xf32, #tpu.memory_space<vmem>>, %arg22: memref<1x32xf32, #tpu.memory_space<vmem>>, %arg23: memref<1x32xf32, #tpu.memory_space<vmem>>, %arg24: memref<32x64xf32, #tpu.memory_space<vmem>>, %arg25: memref<1x64xf32, #tpu.memory_space<vmem>>, %arg26: memref<64x32xf32, #tpu.memory_space<vmem>>, %arg27: memref<1x32xf32, #tpu.memory_space<vmem>>, %arg28: memref<1x32xf32, #tpu.memory_space<vmem>>, %arg29: memref<1x32xf32, #tpu.memory_space<vmem>>, %arg30: memref<1x32xf32, #tpu.memory_space<vmem>>, %arg31: memref<1x32xf32, #tpu.memory_space<vmem>>, %arg32: memref<1x8x32xf32, #tpu.memory_space<vmem>>, %arg33: memref<1x8x32xf32, #tpu.memory_space<vmem>>) attributes {dimension_semantics = [#tpu.dimension_semantics<parallel>], iteration_bounds = array<i64: 2>, scalar_prefetch = 0 : i64, scratch_operands = 0 : i64, tpu.core_type = #tpu.core_type<tc>, window_params = [{transform_indices = @transform_0, window_bounds = array<i64: 1, 8, 32>}, {transform_indices = @transform_1, window_bounds = array<i64: 1, 8, 32>}, {transform_indices = @transform_2, window_bounds = array<i64: 1, 16, 32>}, {transform_indices = @transform_3, window_bounds = array<i64: 1, 16, 32>}, {pipeline_mode = #tpu.pipeline_mode<synchronous>, transform_indices = @transform_4, window_bounds = array<i64: 8, 8>}, {pipeline_mode = #tpu.pipeline_mode<synchronous>, transform_indices = @transform_5, window_bounds = array<i64: 32, 64>}, {pipeline_mode = #tpu.pipeline_mode<synchronous>, transform_indices = @transform_6, window_bounds = array<i64: 1, 64>}, {pipeline_mode = #tpu.pipeline_mode<synchronous>, transform_indices = @transform_7, window_bounds = array<i64: 32, 32>}, {pipeline_mode = #tpu.pipeline_mode<synchronous>, transform_indices = @transform_8, window_bounds = array<i64: 1, 32>}, {pipeline_mode = #tpu.pipeline_mode<synchronous>, transform_indices = @transform_9, window_bounds = array<i64: 32, 32>}, {pipeline_mode = #tpu.pipeline_mode<synchronous>, transform_indices = @transform_10, window_bounds = array<i64: 1, 32>}, {pipeline_mode = #tpu.pipeline_mode<synchronous>, transform_indices = @transform_11, window_bounds = array<i64: 1, 32>}, {pipeline_mode = #tpu.pipeline_mode<synchronous>, transform_indices = @transform_12, window_bounds = array<i64: 1, 32>}, {pipeline_mode = #tpu.pipeline_mode<synchronous>, transform_indices = @transform_13, window_bounds = array<i64: 32, 32>}, {pipeline_mode = #tpu.pipeline_mode<synchronous>, transform_indices = @transform_14, window_bounds = array<i64: 1, 32>}, {pipeline_mode = #tpu.pipeline_mode<synchronous>, transform_indices = @transform_15, window_bounds = array<i64: 32, 32>}, {pipeline_mode = #tpu.pipeline_mode<synchronous>, transform_indices = @transform_16, window_bounds = array<i64: 1, 32>}, {pipeline_mode = #tpu.pipeline_mode<synchronous>, transform_indices = @transform_17, window_bounds = array<i64: 32, 32>}, {pipeline_mode = #tpu.pipeline_mode<synchronous>, transform_indices = @transform_18, window_bounds = array<i64: 1, 32>}, {pipeline_mode = #tpu.pipeline_mode<synchronous>, transform_indices = @transform_19, window_bounds = array<i64: 32, 32>}, {pipeline_mode = #tpu.pipeline_mode<synchronous>, transform_indices = @transform_20, window_bounds = array<i64: 1, 32>}, {pipeline_mode = #tpu.pipeline_mode<synchronous>, transform_indices = @transform_21, window_bounds = array<i64: 1, 32>}, {pipeline_mode = #tpu.pipeline_mode<synchronous>, transform_indices = @transform_22, window_bounds = array<i64: 1, 32>}, {pipeline_mode = #tpu.pipeline_mode<synchronous>, transform_indices = @transform_23, window_bounds = array<i64: 32, 64>}, {pipeline_mode = #tpu.pipeline_mode<synchronous>, transform_indices = @transform_24, window_bounds = array<i64: 1, 64>}, {pipeline_mode = #tpu.pipeline_mode<synchronous>, transform_indices = @transform_25, window_bounds = array<i64: 64, 32>}, {pipeline_mode = #tpu.pipeline_mode<synchronous>, transform_indices = @transform_26, window_bounds = array<i64: 1, 32>}, {pipeline_mode = #tpu.pipeline_mode<synchronous>, transform_indices = @transform_27, window_bounds = array<i64: 1, 32>}, {pipeline_mode = #tpu.pipeline_mode<synchronous>, transform_indices = @transform_28, window_bounds = array<i64: 1, 32>}, {pipeline_mode = #tpu.pipeline_mode<synchronous>, transform_indices = @transform_29, window_bounds = array<i64: 1, 32>}, {pipeline_mode = #tpu.pipeline_mode<synchronous>, transform_indices = @transform_30, window_bounds = array<i64: 1, 32>}, {transform_indices = @transform_31, window_bounds = array<i64: 1, 8, 32>}, {transform_indices = @transform_32, window_bounds = array<i64: 1, 8, 32>}]} {
    %c0 = arith.constant 0 : index
    %c0_0 = arith.constant 0 : index
    %0 = vector.load %arg5[%c0, %c0_0] : memref<8x8xf32, #tpu.memory_space<vmem>>, vector<8x8xf32>
    %c0_1 = arith.constant 0 : index
    %c0_2 = arith.constant 0 : index
    %c0_3 = arith.constant 0 : index
    %1 = vector.load %arg1[%c0_1, %c0_2, %c0_3] : memref<1x8x32xf32, #tpu.memory_space<vmem>>, vector<1x8x32xf32>
    %2 = vector.shape_cast %1 : vector<1x8x32xf32> to vector<8x32xf32>
    %c0_4 = arith.constant 0 : index
    %c0_5 = arith.constant 0 : index
    %c0_6 = arith.constant 0 : index
    %3 = vector.load %arg2[%c0_4, %c0_5, %c0_6] : memref<1x8x32xf32, #tpu.memory_space<vmem>>, vector<1x8x32xf32>
    %4 = vector.shape_cast %3 : vector<1x8x32xf32> to vector<8x32xf32>
    %5 = arith.addf %2, %4 : vector<8x32xf32>
    %c0_7 = arith.constant 0 : index
    %c0_8 = arith.constant 0 : index
    %6 = vector.load %arg6[%c0_7, %c0_8] : memref<32x64xf32, #tpu.memory_space<vmem>>, vector<32x64xf32>
    %cst = arith.constant dense<0.000000e+00> : vector<8x64xf32>
    %7 = tpu.matmul %5, %6, %cst {dimension_numbers = #tpu.dot_dimension_numbers<[1], [0], [0], [1], [0, 0, 1, 1], [], []>} : vector<8x32xf32>, vector<32x64xf32>, vector<8x64xf32> -> vector<8x64xf32>
    %c0_9 = arith.constant 0 : index
    %c0_10 = arith.constant 0 : index
    %8 = vector.load %arg7[%c0_9, %c0_10] : memref<1x64xf32, #tpu.memory_space<vmem>>, vector<1x64xf32>
    %9 = vector.broadcast %8 : vector<1x64xf32> to vector<8x64xf32>
    %10 = arith.addf %7, %9 : vector<8x64xf32>
    %c0_11 = arith.constant 0 : index
    %c0_12 = arith.constant 0 : index
    %11 = vector.load %arg8[%c0_11, %c0_12] : memref<32x32xf32, #tpu.memory_space<vmem>>, vector<32x32xf32>
    %cst_13 = arith.constant dense<0.000000e+00> : vector<8x32xf32>
    %12 = tpu.matmul %2, %11, %cst_13 {dimension_numbers = #tpu.dot_dimension_numbers<[1], [0], [0], [1], [0, 0, 1, 1], [], []>} : vector<8x32xf32>, vector<32x32xf32>, vector<8x32xf32> -> vector<8x32xf32>
    %c0_14 = arith.constant 0 : index
    %c0_15 = arith.constant 0 : index
    %13 = vector.load %arg9[%c0_14, %c0_15] : memref<1x32xf32, #tpu.memory_space<vmem>>, vector<1x32xf32>
    %14 = vector.broadcast %13 : vector<1x32xf32> to vector<8x32xf32>
    %15 = arith.addf %12, %14 : vector<8x32xf32>
    %16 = vector.extract_strided_slice %10 {offsets = [0, 0], sizes = [8, 32], strides = [1, 1]} : vector<8x64xf32> to vector<8x32xf32>
    %17 = vector.extract_strided_slice %10 {offsets = [0, 32], sizes = [8, 32], strides = [1, 1]} : vector<8x64xf32> to vector<8x32xf32>
    %18 = vector.extract_strided_slice %16 {offsets = [0, 0], sizes = [8, 8], strides = [1, 1]} : vector<8x32xf32> to vector<8x8xf32>
    %19 = vector.extract_strided_slice %17 {offsets = [0, 0], sizes = [8, 8], strides = [1, 1]} : vector<8x32xf32> to vector<8x8xf32>
    %20 = tpu.transpose %19, [1, 0] : vector<8x8xf32> -> vector<8x8xf32>
    %cst_16 = arith.constant dense<0.000000e+00> : vector<8x8xf32>
    %21 = tpu.matmul %18, %20, %cst_16 {dimension_numbers = #tpu.dot_dimension_numbers<[1], [0], [0], [1], [0, 0, 1, 1], [], []>} : vector<8x8xf32>, vector<8x8xf32>, vector<8x8xf32> -> vector<8x8xf32>
    %22 = arith.addf %21, %0 : vector<8x8xf32>
    %cst_17 = arith.constant dense<0xFF800000> : vector<8xf32>
    %23 = vector.multi_reduction <maximumf>, %22, %cst_17 [1] : vector<8x8xf32> to vector<8xf32>
    %24 = vector.shape_cast %23 : vector<8xf32> to vector<8x1xf32>
    %25 = vector.broadcast %24 : vector<8x1xf32> to vector<8x8xf32>
    %26 = arith.subf %22, %25 : vector<8x8xf32>
    %27 = math.exp %26 : vector<8x8xf32>
    %cst_18 = arith.constant dense<0.000000e+00> : vector<8xf32>
    %28 = vector.multi_reduction <add>, %27, %cst_18 [1] : vector<8x8xf32> to vector<8xf32>
    %29 = vector.shape_cast %28 : vector<8xf32> to vector<8x1xf32>
    %30 = tpu.reciprocal %29 {approx = true} : vector<8x1xf32> -> vector<8x1xf32>
    %31 = vector.broadcast %30 : vector<8x1xf32> to vector<8x8xf32>
    %32 = arith.mulf %27, %31 : vector<8x8xf32>
    %33 = vector.extract_strided_slice %15 {offsets = [0, 0], sizes = [8, 8], strides = [1, 1]} : vector<8x32xf32> to vector<8x8xf32>
    %cst_19 = arith.constant dense<0.000000e+00> : vector<8x8xf32>
    %34 = tpu.matmul %32, %33, %cst_19 {dimension_numbers = #tpu.dot_dimension_numbers<[1], [0], [0], [1], [0, 0, 1, 1], [], []>} : vector<8x8xf32>, vector<8x8xf32>, vector<8x8xf32> -> vector<8x8xf32>
    %35 = vector.extract_strided_slice %16 {offsets = [0, 8], sizes = [8, 8], strides = [1, 1]} : vector<8x32xf32> to vector<8x8xf32>
    %36 = vector.extract_strided_slice %17 {offsets = [0, 8], sizes = [8, 8], strides = [1, 1]} : vector<8x32xf32> to vector<8x8xf32>
    %37 = tpu.transpose %36, [1, 0] : vector<8x8xf32> -> vector<8x8xf32>
    %cst_20 = arith.constant dense<0.000000e+00> : vector<8x8xf32>
    %38 = tpu.matmul %35, %37, %cst_20 {dimension_numbers = #tpu.dot_dimension_numbers<[1], [0], [0], [1], [0, 0, 1, 1], [], []>} : vector<8x8xf32>, vector<8x8xf32>, vector<8x8xf32> -> vector<8x8xf32>
    %39 = arith.addf %38, %0 : vector<8x8xf32>
    %cst_21 = arith.constant dense<0xFF800000> : vector<8xf32>
    %40 = vector.multi_reduction <maximumf>, %39, %cst_21 [1] : vector<8x8xf32> to vector<8xf32>
    %41 = vector.shape_cast %40 : vector<8xf32> to vector<8x1xf32>
    %42 = vector.broadcast %41 : vector<8x1xf32> to vector<8x8xf32>
    %43 = arith.subf %39, %42 : vector<8x8xf32>
    %44 = math.exp %43 : vector<8x8xf32>
    %cst_22 = arith.constant dense<0.000000e+00> : vector<8xf32>
    %45 = vector.multi_reduction <add>, %44, %cst_22 [1] : vector<8x8xf32> to vector<8xf32>
    %46 = vector.shape_cast %45 : vector<8xf32> to vector<8x1xf32>
    %47 = tpu.reciprocal %46 {approx = true} : vector<8x1xf32> -> vector<8x1xf32>
    %48 = vector.broadcast %47 : vector<8x1xf32> to vector<8x8xf32>
    %49 = arith.mulf %44, %48 : vector<8x8xf32>
    %50 = vector.extract_strided_slice %15 {offsets = [0, 8], sizes = [8, 8], strides = [1, 1]} : vector<8x32xf32> to vector<8x8xf32>
    %cst_23 = arith.constant dense<0.000000e+00> : vector<8x8xf32>
    %51 = tpu.matmul %49, %50, %cst_23 {dimension_numbers = #tpu.dot_dimension_numbers<[1], [0], [0], [1], [0, 0, 1, 1], [], []>} : vector<8x8xf32>, vector<8x8xf32>, vector<8x8xf32> -> vector<8x8xf32>
    %52 = vector.extract_strided_slice %16 {offsets = [0, 16], sizes = [8, 8], strides = [1, 1]} : vector<8x32xf32> to vector<8x8xf32>
    %53 = vector.extract_strided_slice %17 {offsets = [0, 16], sizes = [8, 8], strides = [1, 1]} : vector<8x32xf32> to vector<8x8xf32>
    %54 = tpu.transpose %53, [1, 0] : vector<8x8xf32> -> vector<8x8xf32>
    %cst_24 = arith.constant dense<0.000000e+00> : vector<8x8xf32>
    %55 = tpu.matmul %52, %54, %cst_24 {dimension_numbers = #tpu.dot_dimension_numbers<[1], [0], [0], [1], [0, 0, 1, 1], [], []>} : vector<8x8xf32>, vector<8x8xf32>, vector<8x8xf32> -> vector<8x8xf32>
    %56 = arith.addf %55, %0 : vector<8x8xf32>
    %cst_25 = arith.constant dense<0xFF800000> : vector<8xf32>
    %57 = vector.multi_reduction <maximumf>, %56, %cst_25 [1] : vector<8x8xf32> to vector<8xf32>
    %58 = vector.shape_cast %57 : vector<8xf32> to vector<8x1xf32>
    %59 = vector.broadcast %58 : vector<8x1xf32> to vector<8x8xf32>
    %60 = arith.subf %56, %59 : vector<8x8xf32>
    %61 = math.exp %60 : vector<8x8xf32>
    %cst_26 = arith.constant dense<0.000000e+00> : vector<8xf32>
    %62 = vector.multi_reduction <add>, %61, %cst_26 [1] : vector<8x8xf32> to vector<8xf32>
    %63 = vector.shape_cast %62 : vector<8xf32> to vector<8x1xf32>
    %64 = tpu.reciprocal %63 {approx = true} : vector<8x1xf32> -> vector<8x1xf32>
    %65 = vector.broadcast %64 : vector<8x1xf32> to vector<8x8xf32>
    %66 = arith.mulf %61, %65 : vector<8x8xf32>
    %67 = vector.extract_strided_slice %15 {offsets = [0, 16], sizes = [8, 8], strides = [1, 1]} : vector<8x32xf32> to vector<8x8xf32>
    %cst_27 = arith.constant dense<0.000000e+00> : vector<8x8xf32>
    %68 = tpu.matmul %66, %67, %cst_27 {dimension_numbers = #tpu.dot_dimension_numbers<[1], [0], [0], [1], [0, 0, 1, 1], [], []>} : vector<8x8xf32>, vector<8x8xf32>, vector<8x8xf32> -> vector<8x8xf32>
    %69 = vector.extract_strided_slice %16 {offsets = [0, 24], sizes = [8, 8], strides = [1, 1]} : vector<8x32xf32> to vector<8x8xf32>
    %70 = vector.extract_strided_slice %17 {offsets = [0, 24], sizes = [8, 8], strides = [1, 1]} : vector<8x32xf32> to vector<8x8xf32>
    %71 = tpu.transpose %70, [1, 0] : vector<8x8xf32> -> vector<8x8xf32>
    %cst_28 = arith.constant dense<0.000000e+00> : vector<8x8xf32>
    %72 = tpu.matmul %69, %71, %cst_28 {dimension_numbers = #tpu.dot_dimension_numbers<[1], [0], [0], [1], [0, 0, 1, 1], [], []>} : vector<8x8xf32>, vector<8x8xf32>, vector<8x8xf32> -> vector<8x8xf32>
    %73 = arith.addf %72, %0 : vector<8x8xf32>
    %cst_29 = arith.constant dense<0xFF800000> : vector<8xf32>
    %74 = vector.multi_reduction <maximumf>, %73, %cst_29 [1] : vector<8x8xf32> to vector<8xf32>
    %75 = vector.shape_cast %74 : vector<8xf32> to vector<8x1xf32>
    %76 = vector.broadcast %75 : vector<8x1xf32> to vector<8x8xf32>
    %77 = arith.subf %73, %76 : vector<8x8xf32>
    %78 = math.exp %77 : vector<8x8xf32>
    %cst_30 = arith.constant dense<0.000000e+00> : vector<8xf32>
    %79 = vector.multi_reduction <add>, %78, %cst_30 [1] : vector<8x8xf32> to vector<8xf32>
    %80 = vector.shape_cast %79 : vector<8xf32> to vector<8x1xf32>
    %81 = tpu.reciprocal %80 {approx = true} : vector<8x1xf32> -> vector<8x1xf32>
    %82 = vector.broadcast %81 : vector<8x1xf32> to vector<8x8xf32>
    %83 = arith.mulf %78, %82 : vector<8x8xf32>
    %84 = vector.extract_strided_slice %15 {offsets = [0, 24], sizes = [8, 8], strides = [1, 1]} : vector<8x32xf32> to vector<8x8xf32>
    %cst_31 = arith.constant dense<0.000000e+00> : vector<8x8xf32>
    %85 = tpu.matmul %83, %84, %cst_31 {dimension_numbers = #tpu.dot_dimension_numbers<[1], [0], [0], [1], [0, 0, 1, 1], [], []>} : vector<8x8xf32>, vector<8x8xf32>, vector<8x8xf32> -> vector<8x8xf32>
    %86 = tpu.concatenate %34, %51, %68, %85 in 1 : vector<8x8xf32>, vector<8x8xf32>, vector<8x8xf32>, vector<8x8xf32> -> vector<8x32xf32>
    %c0_32 = arith.constant 0 : index
    %c0_33 = arith.constant 0 : index
    %87 = vector.load %arg10[%c0_32, %c0_33] : memref<32x32xf32, #tpu.memory_space<vmem>>, vector<32x32xf32>
    %cst_34 = arith.constant dense<0.000000e+00> : vector<8x32xf32>
    %88 = tpu.matmul %86, %87, %cst_34 {dimension_numbers = #tpu.dot_dimension_numbers<[1], [0], [0], [1], [0, 0, 1, 1], [], []>} : vector<8x32xf32>, vector<32x32xf32>, vector<8x32xf32> -> vector<8x32xf32>
    %c0_35 = arith.constant 0 : index
    %c0_36 = arith.constant 0 : index
    %89 = vector.load %arg11[%c0_35, %c0_36] : memref<1x32xf32, #tpu.memory_space<vmem>>, vector<1x32xf32>
    %90 = vector.broadcast %89 : vector<1x32xf32> to vector<8x32xf32>
    %91 = arith.addf %88, %90 : vector<8x32xf32>
    %92 = arith.addf %2, %91 : vector<8x32xf32>
    %c0_37 = arith.constant 0 : index
    %c0_38 = arith.constant 0 : index
    %93 = vector.load %arg12[%c0_37, %c0_38] : memref<1x32xf32, #tpu.memory_space<vmem>>, vector<1x32xf32>
    %c0_39 = arith.constant 0 : index
    %c0_40 = arith.constant 0 : index
    %94 = vector.load %arg13[%c0_39, %c0_40] : memref<1x32xf32, #tpu.memory_space<vmem>>, vector<1x32xf32>
    %cst_41 = arith.constant dense<0.000000e+00> : vector<8xf32>
    %95 = vector.multi_reduction <add>, %92, %cst_41 [1] : vector<8x32xf32> to vector<8xf32>
    %96 = vector.shape_cast %95 : vector<8xf32> to vector<8x1xf32>
    %cst_42 = arith.constant 3.200000e+01 : f32
    %97 = vector.broadcast %cst_42 : f32 to vector<8x1xf32>
    %98 = arith.divf %96, %97 : vector<8x1xf32>
    %99 = vector.broadcast %98 : vector<8x1xf32> to vector<8x32xf32>
    %100 = arith.subf %92, %99 : vector<8x32xf32>
    %101 = arith.mulf %100, %100 : vector<8x32xf32>
    %cst_43 = arith.constant dense<0.000000e+00> : vector<8xf32>
    %102 = vector.multi_reduction <add>, %101, %cst_43 [1] : vector<8x32xf32> to vector<8xf32>
    %103 = vector.shape_cast %102 : vector<8xf32> to vector<8x1xf32>
    %cst_44 = arith.constant 3.200000e+01 : f32
    %104 = vector.broadcast %cst_44 : f32 to vector<8x1xf32>
    %105 = arith.divf %103, %104 : vector<8x1xf32>
    %106 = vector.broadcast %98 : vector<8x1xf32> to vector<8x32xf32>
    %107 = arith.subf %92, %106 : vector<8x32xf32>
    %cst_45 = arith.constant 9.99999974E-6 : f32
    %108 = vector.broadcast %cst_45 : f32 to vector<8x1xf32>
    %109 = arith.addf %105, %108 : vector<8x1xf32>
    %110 = math.rsqrt %109 : vector<8x1xf32>
    %111 = vector.broadcast %110 : vector<8x1xf32> to vector<8x32xf32>
    %112 = arith.mulf %107, %111 : vector<8x32xf32>
    %113 = vector.broadcast %93 : vector<1x32xf32> to vector<8x32xf32>
    %114 = arith.mulf %112, %113 : vector<8x32xf32>
    %115 = vector.broadcast %94 : vector<1x32xf32> to vector<8x32xf32>
    %116 = arith.addf %114, %115 : vector<8x32xf32>
    %117 = arith.addf %116, %4 : vector<8x32xf32>
    %c0_46 = arith.constant 0 : index
    %c0_47 = arith.constant 0 : index
    %118 = vector.load %arg14[%c0_46, %c0_47] : memref<32x32xf32, #tpu.memory_space<vmem>>, vector<32x32xf32>
    %cst_48 = arith.constant dense<0.000000e+00> : vector<8x32xf32>
    %119 = tpu.matmul %117, %118, %cst_48 {dimension_numbers = #tpu.dot_dimension_numbers<[1], [0], [0], [1], [0, 0, 1, 1], [], []>} : vector<8x32xf32>, vector<32x32xf32>, vector<8x32xf32> -> vector<8x32xf32>
    %c0_49 = arith.constant 0 : index
    %c0_50 = arith.constant 0 : index
    %120 = vector.load %arg15[%c0_49, %c0_50] : memref<1x32xf32, #tpu.memory_space<vmem>>, vector<1x32xf32>
    %121 = vector.broadcast %120 : vector<1x32xf32> to vector<8x32xf32>
    %122 = arith.addf %119, %121 : vector<8x32xf32>
    %c0_51 = arith.constant 0 : index
    %c0_52 = arith.constant 0 : index
    %c0_53 = arith.constant 0 : index
    %123 = vector.load %arg3[%c0_51, %c0_52, %c0_53] : memref<1x16x32xf32, #tpu.memory_space<vmem>>, vector<1x16x32xf32>
    %124 = vector.shape_cast %123 : vector<1x16x32xf32> to vector<16x32xf32>
    %c0_54 = arith.constant 0 : index
    %c0_55 = arith.constant 0 : index
    %125 = vector.load %arg16[%c0_54, %c0_55] : memref<32x32xf32, #tpu.memory_space<vmem>>, vector<32x32xf32>
    %cst_56 = arith.constant dense<0.000000e+00> : vector<16x32xf32>
    %126 = tpu.matmul %124, %125, %cst_56 {dimension_numbers = #tpu.dot_dimension_numbers<[1], [0], [0], [1], [0, 0, 1, 1], [], []>} : vector<16x32xf32>, vector<32x32xf32>, vector<16x32xf32> -> vector<16x32xf32>
    %c0_57 = arith.constant 0 : index
    %c0_58 = arith.constant 0 : index
    %127 = vector.load %arg17[%c0_57, %c0_58] : memref<1x32xf32, #tpu.memory_space<vmem>>, vector<1x32xf32>
    %128 = vector.broadcast %127 : vector<1x32xf32> to vector<16x32xf32>
    %129 = arith.addf %126, %128 : vector<16x32xf32>
    %c0_59 = arith.constant 0 : index
    %c0_60 = arith.constant 0 : index
    %c0_61 = arith.constant 0 : index
    %130 = vector.load %arg4[%c0_59, %c0_60, %c0_61] : memref<1x16x32xf32, #tpu.memory_space<vmem>>, vector<1x16x32xf32>
    %131 = vector.shape_cast %130 : vector<1x16x32xf32> to vector<16x32xf32>
    %c0_62 = arith.constant 0 : index
    %c0_63 = arith.constant 0 : index
    %132 = vector.load %arg18[%c0_62, %c0_63] : memref<32x32xf32, #tpu.memory_space<vmem>>, vector<32x32xf32>
    %cst_64 = arith.constant dense<0.000000e+00> : vector<16x32xf32>
    %133 = tpu.matmul %131, %132, %cst_64 {dimension_numbers = #tpu.dot_dimension_numbers<[1], [0], [0], [1], [0, 0, 1, 1], [], []>} : vector<16x32xf32>, vector<32x32xf32>, vector<16x32xf32> -> vector<16x32xf32>
    %c0_65 = arith.constant 0 : index
    %c0_66 = arith.constant 0 : index
    %134 = vector.load %arg19[%c0_65, %c0_66] : memref<1x32xf32, #tpu.memory_space<vmem>>, vector<1x32xf32>
    %135 = vector.broadcast %134 : vector<1x32xf32> to vector<16x32xf32>
    %136 = arith.addf %133, %135 : vector<16x32xf32>
    %137 = vector.extract_strided_slice %122 {offsets = [0, 0], sizes = [8, 8], strides = [1, 1]} : vector<8x32xf32> to vector<8x8xf32>
    %138 = vector.extract_strided_slice %129 {offsets = [0, 0], sizes = [16, 8], strides = [1, 1]} : vector<16x32xf32> to vector<16x8xf32>
    %139 = tpu.transpose %138, [1, 0] : vector<16x8xf32> -> vector<8x16xf32>
    %cst_67 = arith.constant dense<0.000000e+00> : vector<8x16xf32>
    %140 = tpu.matmul %137, %139, %cst_67 {dimension_numbers = #tpu.dot_dimension_numbers<[1], [0], [0], [1], [0, 0, 1, 1], [], []>} : vector<8x8xf32>, vector<8x16xf32>, vector<8x16xf32> -> vector<8x16xf32>
    %cst_68 = arith.constant dense<0xFF800000> : vector<8xf32>
    %141 = vector.multi_reduction <maximumf>, %140, %cst_68 [1] : vector<8x16xf32> to vector<8xf32>
    %142 = vector.shape_cast %141 : vector<8xf32> to vector<8x1xf32>
    %143 = vector.broadcast %142 : vector<8x1xf32> to vector<8x16xf32>
    %144 = arith.subf %140, %143 : vector<8x16xf32>
    %145 = math.exp %144 : vector<8x16xf32>
    %cst_69 = arith.constant dense<0.000000e+00> : vector<8xf32>
    %146 = vector.multi_reduction <add>, %145, %cst_69 [1] : vector<8x16xf32> to vector<8xf32>
    %147 = vector.shape_cast %146 : vector<8xf32> to vector<8x1xf32>
    %148 = tpu.reciprocal %147 {approx = true} : vector<8x1xf32> -> vector<8x1xf32>
    %149 = vector.broadcast %148 : vector<8x1xf32> to vector<8x16xf32>
    %150 = arith.mulf %145, %149 : vector<8x16xf32>
    %151 = vector.extract_strided_slice %136 {offsets = [0, 0], sizes = [16, 8], strides = [1, 1]} : vector<16x32xf32> to vector<16x8xf32>
    %cst_70 = arith.constant dense<0.000000e+00> : vector<8x8xf32>
    %152 = tpu.matmul %150, %151, %cst_70 {dimension_numbers = #tpu.dot_dimension_numbers<[1], [0], [0], [1], [0, 0, 1, 1], [], []>} : vector<8x16xf32>, vector<16x8xf32>, vector<8x8xf32> -> vector<8x8xf32>
    %153 = vector.extract_strided_slice %122 {offsets = [0, 8], sizes = [8, 8], strides = [1, 1]} : vector<8x32xf32> to vector<8x8xf32>
    %154 = vector.extract_strided_slice %129 {offsets = [0, 8], sizes = [16, 8], strides = [1, 1]} : vector<16x32xf32> to vector<16x8xf32>
    %155 = tpu.transpose %154, [1, 0] : vector<16x8xf32> -> vector<8x16xf32>
    %cst_71 = arith.constant dense<0.000000e+00> : vector<8x16xf32>
    %156 = tpu.matmul %153, %155, %cst_71 {dimension_numbers = #tpu.dot_dimension_numbers<[1], [0], [0], [1], [0, 0, 1, 1], [], []>} : vector<8x8xf32>, vector<8x16xf32>, vector<8x16xf32> -> vector<8x16xf32>
    %cst_72 = arith.constant dense<0xFF800000> : vector<8xf32>
    %157 = vector.multi_reduction <maximumf>, %156, %cst_72 [1] : vector<8x16xf32> to vector<8xf32>
    %158 = vector.shape_cast %157 : vector<8xf32> to vector<8x1xf32>
    %159 = vector.broadcast %158 : vector<8x1xf32> to vector<8x16xf32>
    %160 = arith.subf %156, %159 : vector<8x16xf32>
    %161 = math.exp %160 : vector<8x16xf32>
    %cst_73 = arith.constant dense<0.000000e+00> : vector<8xf32>
    %162 = vector.multi_reduction <add>, %161, %cst_73 [1] : vector<8x16xf32> to vector<8xf32>
    %163 = vector.shape_cast %162 : vector<8xf32> to vector<8x1xf32>
    %164 = tpu.reciprocal %163 {approx = true} : vector<8x1xf32> -> vector<8x1xf32>
    %165 = vector.broadcast %164 : vector<8x1xf32> to vector<8x16xf32>
    %166 = arith.mulf %161, %165 : vector<8x16xf32>
    %167 = vector.extract_strided_slice %136 {offsets = [0, 8], sizes = [16, 8], strides = [1, 1]} : vector<16x32xf32> to vector<16x8xf32>
    %cst_74 = arith.constant dense<0.000000e+00> : vector<8x8xf32>
    %168 = tpu.matmul %166, %167, %cst_74 {dimension_numbers = #tpu.dot_dimension_numbers<[1], [0], [0], [1], [0, 0, 1, 1], [], []>} : vector<8x16xf32>, vector<16x8xf32>, vector<8x8xf32> -> vector<8x8xf32>
    %169 = vector.extract_strided_slice %122 {offsets = [0, 16], sizes = [8, 8], strides = [1, 1]} : vector<8x32xf32> to vector<8x8xf32>
    %170 = vector.extract_strided_slice %129 {offsets = [0, 16], sizes = [16, 8], strides = [1, 1]} : vector<16x32xf32> to vector<16x8xf32>
    %171 = tpu.transpose %170, [1, 0] : vector<16x8xf32> -> vector<8x16xf32>
    %cst_75 = arith.constant dense<0.000000e+00> : vector<8x16xf32>
    %172 = tpu.matmul %169, %171, %cst_75 {dimension_numbers = #tpu.dot_dimension_numbers<[1], [0], [0], [1], [0, 0, 1, 1], [], []>} : vector<8x8xf32>, vector<8x16xf32>, vector<8x16xf32> -> vector<8x16xf32>
    %cst_76 = arith.constant dense<0xFF800000> : vector<8xf32>
    %173 = vector.multi_reduction <maximumf>, %172, %cst_76 [1] : vector<8x16xf32> to vector<8xf32>
    %174 = vector.shape_cast %173 : vector<8xf32> to vector<8x1xf32>
    %175 = vector.broadcast %174 : vector<8x1xf32> to vector<8x16xf32>
    %176 = arith.subf %172, %175 : vector<8x16xf32>
    %177 = math.exp %176 : vector<8x16xf32>
    %cst_77 = arith.constant dense<0.000000e+00> : vector<8xf32>
    %178 = vector.multi_reduction <add>, %177, %cst_77 [1] : vector<8x16xf32> to vector<8xf32>
    %179 = vector.shape_cast %178 : vector<8xf32> to vector<8x1xf32>
    %180 = tpu.reciprocal %179 {approx = true} : vector<8x1xf32> -> vector<8x1xf32>
    %181 = vector.broadcast %180 : vector<8x1xf32> to vector<8x16xf32>
    %182 = arith.mulf %177, %181 : vector<8x16xf32>
    %183 = vector.extract_strided_slice %136 {offsets = [0, 16], sizes = [16, 8], strides = [1, 1]} : vector<16x32xf32> to vector<16x8xf32>
    %cst_78 = arith.constant dense<0.000000e+00> : vector<8x8xf32>
    %184 = tpu.matmul %182, %183, %cst_78 {dimension_numbers = #tpu.dot_dimension_numbers<[1], [0], [0], [1], [0, 0, 1, 1], [], []>} : vector<8x16xf32>, vector<16x8xf32>, vector<8x8xf32> -> vector<8x8xf32>
    %185 = vector.extract_strided_slice %122 {offsets = [0, 24], sizes = [8, 8], strides = [1, 1]} : vector<8x32xf32> to vector<8x8xf32>
    %186 = vector.extract_strided_slice %129 {offsets = [0, 24], sizes = [16, 8], strides = [1, 1]} : vector<16x32xf32> to vector<16x8xf32>
    %187 = tpu.transpose %186, [1, 0] : vector<16x8xf32> -> vector<8x16xf32>
    %cst_79 = arith.constant dense<0.000000e+00> : vector<8x16xf32>
    %188 = tpu.matmul %185, %187, %cst_79 {dimension_numbers = #tpu.dot_dimension_numbers<[1], [0], [0], [1], [0, 0, 1, 1], [], []>} : vector<8x8xf32>, vector<8x16xf32>, vector<8x16xf32> -> vector<8x16xf32>
    %cst_80 = arith.constant dense<0xFF800000> : vector<8xf32>
    %189 = vector.multi_reduction <maximumf>, %188, %cst_80 [1] : vector<8x16xf32> to vector<8xf32>
    %190 = vector.shape_cast %189 : vector<8xf32> to vector<8x1xf32>
    %191 = vector.broadcast %190 : vector<8x1xf32> to vector<8x16xf32>
    %192 = arith.subf %188, %191 : vector<8x16xf32>
    %193 = math.exp %192 : vector<8x16xf32>
    %cst_81 = arith.constant dense<0.000000e+00> : vector<8xf32>
    %194 = vector.multi_reduction <add>, %193, %cst_81 [1] : vector<8x16xf32> to vector<8xf32>
    %195 = vector.shape_cast %194 : vector<8xf32> to vector<8x1xf32>
    %196 = tpu.reciprocal %195 {approx = true} : vector<8x1xf32> -> vector<8x1xf32>
    %197 = vector.broadcast %196 : vector<8x1xf32> to vector<8x16xf32>
    %198 = arith.mulf %193, %197 : vector<8x16xf32>
    %199 = vector.extract_strided_slice %136 {offsets = [0, 24], sizes = [16, 8], strides = [1, 1]} : vector<16x32xf32> to vector<16x8xf32>
    %cst_82 = arith.constant dense<0.000000e+00> : vector<8x8xf32>
    %200 = tpu.matmul %198, %199, %cst_82 {dimension_numbers = #tpu.dot_dimension_numbers<[1], [0], [0], [1], [0, 0, 1, 1], [], []>} : vector<8x16xf32>, vector<16x8xf32>, vector<8x8xf32> -> vector<8x8xf32>
    %201 = tpu.concatenate %152, %168, %184, %200 in 1 : vector<8x8xf32>, vector<8x8xf32>, vector<8x8xf32>, vector<8x8xf32> -> vector<8x32xf32>
    %c0_83 = arith.constant 0 : index
    %c0_84 = arith.constant 0 : index
    %202 = vector.load %arg20[%c0_83, %c0_84] : memref<32x32xf32, #tpu.memory_space<vmem>>, vector<32x32xf32>
    %cst_85 = arith.constant dense<0.000000e+00> : vector<8x32xf32>
    %203 = tpu.matmul %201, %202, %cst_85 {dimension_numbers = #tpu.dot_dimension_numbers<[1], [0], [0], [1], [0, 0, 1, 1], [], []>} : vector<8x32xf32>, vector<32x32xf32>, vector<8x32xf32> -> vector<8x32xf32>
    %c0_86 = arith.constant 0 : index
    %c0_87 = arith.constant 0 : index
    %204 = vector.load %arg21[%c0_86, %c0_87] : memref<1x32xf32, #tpu.memory_space<vmem>>, vector<1x32xf32>
    %205 = vector.broadcast %204 : vector<1x32xf32> to vector<8x32xf32>
    %206 = arith.addf %203, %205 : vector<8x32xf32>
    %207 = arith.addf %116, %206 : vector<8x32xf32>
    %c0_88 = arith.constant 0 : index
    %c0_89 = arith.constant 0 : index
    %208 = vector.load %arg22[%c0_88, %c0_89] : memref<1x32xf32, #tpu.memory_space<vmem>>, vector<1x32xf32>
    %c0_90 = arith.constant 0 : index
    %c0_91 = arith.constant 0 : index
    %209 = vector.load %arg23[%c0_90, %c0_91] : memref<1x32xf32, #tpu.memory_space<vmem>>, vector<1x32xf32>
    %cst_92 = arith.constant dense<0.000000e+00> : vector<8xf32>
    %210 = vector.multi_reduction <add>, %207, %cst_92 [1] : vector<8x32xf32> to vector<8xf32>
    %211 = vector.shape_cast %210 : vector<8xf32> to vector<8x1xf32>
    %cst_93 = arith.constant 3.200000e+01 : f32
    %212 = vector.broadcast %cst_93 : f32 to vector<8x1xf32>
    %213 = arith.divf %211, %212 : vector<8x1xf32>
    %214 = vector.broadcast %213 : vector<8x1xf32> to vector<8x32xf32>
    %215 = arith.subf %207, %214 : vector<8x32xf32>
    %216 = arith.mulf %215, %215 : vector<8x32xf32>
    %cst_94 = arith.constant dense<0.000000e+00> : vector<8xf32>
    %217 = vector.multi_reduction <add>, %216, %cst_94 [1] : vector<8x32xf32> to vector<8xf32>
    %218 = vector.shape_cast %217 : vector<8xf32> to vector<8x1xf32>
    %cst_95 = arith.constant 3.200000e+01 : f32
    %219 = vector.broadcast %cst_95 : f32 to vector<8x1xf32>
    %220 = arith.divf %218, %219 : vector<8x1xf32>
    %221 = vector.broadcast %213 : vector<8x1xf32> to vector<8x32xf32>
    %222 = arith.subf %207, %221 : vector<8x32xf32>
    %cst_96 = arith.constant 9.99999974E-6 : f32
    %223 = vector.broadcast %cst_96 : f32 to vector<8x1xf32>
    %224 = arith.addf %220, %223 : vector<8x1xf32>
    %225 = math.rsqrt %224 : vector<8x1xf32>
    %226 = vector.broadcast %225 : vector<8x1xf32> to vector<8x32xf32>
    %227 = arith.mulf %222, %226 : vector<8x32xf32>
    %228 = vector.broadcast %208 : vector<1x32xf32> to vector<8x32xf32>
    %229 = arith.mulf %227, %228 : vector<8x32xf32>
    %230 = vector.broadcast %209 : vector<1x32xf32> to vector<8x32xf32>
    %231 = arith.addf %229, %230 : vector<8x32xf32>
    %c0_97 = arith.constant 0 : index
    %c0_98 = arith.constant 0 : index
    %232 = vector.load %arg24[%c0_97, %c0_98] : memref<32x64xf32, #tpu.memory_space<vmem>>, vector<32x64xf32>
    %cst_99 = arith.constant dense<0.000000e+00> : vector<8x64xf32>
    %233 = tpu.matmul %231, %232, %cst_99 {dimension_numbers = #tpu.dot_dimension_numbers<[1], [0], [0], [1], [0, 0, 1, 1], [], []>} : vector<8x32xf32>, vector<32x64xf32>, vector<8x64xf32> -> vector<8x64xf32>
    %c0_100 = arith.constant 0 : index
    %c0_101 = arith.constant 0 : index
    %234 = vector.load %arg25[%c0_100, %c0_101] : memref<1x64xf32, #tpu.memory_space<vmem>>, vector<1x64xf32>
    %235 = vector.broadcast %234 : vector<1x64xf32> to vector<8x64xf32>
    %236 = arith.addf %233, %235 : vector<8x64xf32>
    %cst_102 = arith.constant 0.000000e+00 : f32
    %237 = vector.broadcast %cst_102 : f32 to vector<8x64xf32>
    %238 = arith.maximumf %236, %237 : vector<8x64xf32>
    %c0_103 = arith.constant 0 : index
    %c0_104 = arith.constant 0 : index
    %239 = vector.load %arg26[%c0_103, %c0_104] : memref<64x32xf32, #tpu.memory_space<vmem>>, vector<64x32xf32>
    %cst_105 = arith.constant dense<0.000000e+00> : vector<8x32xf32>
    %240 = tpu.matmul %238, %239, %cst_105 {dimension_numbers = #tpu.dot_dimension_numbers<[1], [0], [0], [1], [0, 0, 1, 1], [], []>} : vector<8x64xf32>, vector<64x32xf32>, vector<8x32xf32> -> vector<8x32xf32>
    %241 = arith.addf %231, %240 : vector<8x32xf32>
    %c0_106 = arith.constant 0 : index
    %c0_107 = arith.constant 0 : index
    %242 = vector.load %arg27[%c0_106, %c0_107] : memref<1x32xf32, #tpu.memory_space<vmem>>, vector<1x32xf32>
    %243 = vector.broadcast %242 : vector<1x32xf32> to vector<8x32xf32>
    %244 = arith.addf %241, %243 : vector<8x32xf32>
    %c0_108 = arith.constant 0 : index
    %c0_109 = arith.constant 0 : index
    %245 = vector.load %arg28[%c0_108, %c0_109] : memref<1x32xf32, #tpu.memory_space<vmem>>, vector<1x32xf32>
    %c0_110 = arith.constant 0 : index
    %c0_111 = arith.constant 0 : index
    %246 = vector.load %arg29[%c0_110, %c0_111] : memref<1x32xf32, #tpu.memory_space<vmem>>, vector<1x32xf32>
    %cst_112 = arith.constant dense<0.000000e+00> : vector<8xf32>
    %247 = vector.multi_reduction <add>, %244, %cst_112 [1] : vector<8x32xf32> to vector<8xf32>
    %248 = vector.shape_cast %247 : vector<8xf32> to vector<8x1xf32>
    %cst_113 = arith.constant 3.200000e+01 : f32
    %249 = vector.broadcast %cst_113 : f32 to vector<8x1xf32>
    %250 = arith.divf %248, %249 : vector<8x1xf32>
    %251 = vector.broadcast %250 : vector<8x1xf32> to vector<8x32xf32>
    %252 = arith.subf %244, %251 : vector<8x32xf32>
    %253 = arith.mulf %252, %252 : vector<8x32xf32>
    %cst_114 = arith.constant dense<0.000000e+00> : vector<8xf32>
    %254 = vector.multi_reduction <add>, %253, %cst_114 [1] : vector<8x32xf32> to vector<8xf32>
    %255 = vector.shape_cast %254 : vector<8xf32> to vector<8x1xf32>
    %cst_115 = arith.constant 3.200000e+01 : f32
    %256 = vector.broadcast %cst_115 : f32 to vector<8x1xf32>
    %257 = arith.divf %255, %256 : vector<8x1xf32>
    %258 = vector.broadcast %250 : vector<8x1xf32> to vector<8x32xf32>
    %259 = arith.subf %244, %258 : vector<8x32xf32>
    %cst_116 = arith.constant 9.99999974E-6 : f32
    %260 = vector.broadcast %cst_116 : f32 to vector<8x1xf32>
    %261 = arith.addf %257, %260 : vector<8x1xf32>
    %262 = math.rsqrt %261 : vector<8x1xf32>
    %263 = vector.broadcast %262 : vector<8x1xf32> to vector<8x32xf32>
    %264 = arith.mulf %259, %263 : vector<8x32xf32>
    %265 = vector.broadcast %245 : vector<1x32xf32> to vector<8x32xf32>
    %266 = arith.mulf %264, %265 : vector<8x32xf32>
    %267 = vector.broadcast %246 : vector<1x32xf32> to vector<8x32xf32>
    %268 = arith.addf %266, %267 : vector<8x32xf32>
    %c0_117 = arith.constant 0 : index
    %c0_118 = arith.constant 0 : index
    %c0_119 = arith.constant 0 : index
    %269 = vector.load %arg32[%c0_117, %c0_118, %c0_119] : memref<1x8x32xf32, #tpu.memory_space<vmem>>, vector<1x8x32xf32>
    %270 = vector.shape_cast %269 : vector<1x8x32xf32> to vector<8x32xf32>
    %271 = vector.shape_cast %268 : vector<8x32xf32> to vector<1x8x32xf32>
    tpu.vector_store %arg32[%c0_117, %c0_118, %c0_119], %271 {strides = array<i32>} : memref<1x8x32xf32, #tpu.memory_space<vmem>>, vector<1x8x32xf32>,
    %c0_120 = arith.constant 0 : index
    %c0_121 = arith.constant 0 : index
    %272 = vector.load %arg30[%c0_120, %c0_121] : memref<1x32xf32, #tpu.memory_space<vmem>>, vector<1x32xf32>
    %c0_122 = arith.constant 0 : index
    %c0_123 = arith.constant 0 : index
    %273 = vector.load %arg31[%c0_122, %c0_123] : memref<1x32xf32, #tpu.memory_space<vmem>>, vector<1x32xf32>
    %cst_124 = arith.constant dense<0.000000e+00> : vector<8xf32>
    %274 = vector.multi_reduction <add>, %268, %cst_124 [1] : vector<8x32xf32> to vector<8xf32>
    %275 = vector.shape_cast %274 : vector<8xf32> to vector<8x1xf32>
    %cst_125 = arith.constant 3.200000e+01 : f32
    %276 = vector.broadcast %cst_125 : f32 to vector<8x1xf32>
    %277 = arith.divf %275, %276 : vector<8x1xf32>
    %278 = vector.broadcast %277 : vector<8x1xf32> to vector<8x32xf32>
    %279 = arith.subf %268, %278 : vector<8x32xf32>
    %280 = arith.mulf %279, %279 : vector<8x32xf32>
    %cst_126 = arith.constant dense<0.000000e+00> : vector<8xf32>
    %281 = vector.multi_reduction <add>, %280, %cst_126 [1] : vector<8x32xf32> to vector<8xf32>
    %282 = vector.shape_cast %281 : vector<8xf32> to vector<8x1xf32>
    %cst_127 = arith.constant 3.200000e+01 : f32
    %283 = vector.broadcast %cst_127 : f32 to vector<8x1xf32>
    %284 = arith.divf %282, %283 : vector<8x1xf32>
    %285 = vector.broadcast %277 : vector<8x1xf32> to vector<8x32xf32>
    %286 = arith.subf %268, %285 : vector<8x32xf32>
    %cst_128 = arith.constant 9.99999974E-6 : f32
    %287 = vector.broadcast %cst_128 : f32 to vector<8x1xf32>
    %288 = arith.addf %284, %287 : vector<8x1xf32>
    %289 = math.rsqrt %288 : vector<8x1xf32>
    %290 = vector.broadcast %289 : vector<8x1xf32> to vector<8x32xf32>
    %291 = arith.mulf %286, %290 : vector<8x32xf32>
    %292 = vector.broadcast %272 : vector<1x32xf32> to vector<8x32xf32>
    %293 = arith.mulf %291, %292 : vector<8x32xf32>
    %294 = vector.broadcast %273 : vector<1x32xf32> to vector<8x32xf32>
    %295 = arith.addf %293, %294 : vector<8x32xf32>
    %c0_129 = arith.constant 0 : index
    %c0_130 = arith.constant 0 : index
    %c0_131 = arith.constant 0 : index
    %296 = vector.load %arg33[%c0_129, %c0_130, %c0_131] : memref<1x8x32xf32, #tpu.memory_space<vmem>>, vector<1x8x32xf32>
    %297 = vector.shape_cast %296 : vector<1x8x32xf32> to vector<8x32xf32>
    %298 = vector.shape_cast %295 : vector<8x32xf32> to vector<1x8x32xf32>
    tpu.vector_store %arg33[%c0_129, %c0_130, %c0_131], %298 {strides = array<i32>} : memref<1x8x32xf32, #tpu.memory_space<vmem>>, vector<1x8x32xf32>,
    return
  }
  func.func @transform_0(%arg0: i32) -> (i32, i32, i32) {
    %c0_i32 = arith.constant 0 : i32
    %c0_i32_0 = arith.constant 0 : i32
    %c0_i32_1 = arith.constant 0 : i32
    return %arg0, %c0_i32, %c0_i32_0 : i32, i32, i32
  }
  func.func @transform_1(%arg0: i32) -> (i32, i32, i32) {
    %c0_i32 = arith.constant 0 : i32
    %c0_i32_0 = arith.constant 0 : i32
    %c0_i32_1 = arith.constant 0 : i32
    return %arg0, %c0_i32, %c0_i32_0 : i32, i32, i32
  }
  func.func @transform_2(%arg0: i32) -> (i32, i32, i32) {
    %c0_i32 = arith.constant 0 : i32
    %c0_i32_0 = arith.constant 0 : i32
    %c0_i32_1 = arith.constant 0 : i32
    return %arg0, %c0_i32, %c0_i32_0 : i32, i32, i32
  }
  func.func @transform_3(%arg0: i32) -> (i32, i32, i32) {
    %c0_i32 = arith.constant 0 : i32
    %c0_i32_0 = arith.constant 0 : i32
    %c0_i32_1 = arith.constant 0 : i32
    return %arg0, %c0_i32, %c0_i32_0 : i32, i32, i32
  }
  func.func @transform_4(%arg0: i32) -> (i32, i32) {
    %c0_i32 = arith.constant 0 : i32
    %c0_i32_0 = arith.constant 0 : i32
    %c0_i32_1 = arith.constant 0 : i32
    return %c0_i32, %c0_i32_0 : i32, i32
  }
  func.func @transform_5(%arg0: i32) -> (i32, i32) {
    %c0_i32 = arith.constant 0 : i32
    %c0_i32_0 = arith.constant 0 : i32
    %c0_i32_1 = arith.constant 0 : i32
    return %c0_i32, %c0_i32_0 : i32, i32
  }
  func.func @transform_6(%arg0: i32) -> (i32, i32) {
    %c0_i32 = arith.constant 0 : i32
    %c0_i32_0 = arith.constant 0 : i32
    %c0_i32_1 = arith.constant 0 : i32
    return %c0_i32, %c0_i32_0 : i32, i32
  }
  func.func @transform_7(%arg0: i32) -> (i32, i32) {
    %c0_i32 = arith.constant 0 : i32
    %c0_i32_0 = arith.constant 0 : i32
    %c0_i32_1 = arith.constant 0 : i32
    return %c0_i32, %c0_i32_0 : i32, i32
  }
  func.func @transform_8(%arg0: i32) -> (i32, i32) {
    %c0_i32 = arith.constant 0 : i32
    %c0_i32_0 = arith.constant 0 : i32
    %c0_i32_1 = arith.constant 0 : i32
    return %c0_i32, %c0_i32_0 : i32, i32
  }
  func.func @transform_9(%arg0: i32) -> (i32, i32) {
    %c0_i32 = arith.constant 0 : i32
    %c0_i32_0 = arith.constant 0 : i32
    %c0_i32_1 = arith.constant 0 : i32
    return %c0_i32, %c0_i32_0 : i32, i32
  }
  func.func @transform_10(%arg0: i32) -> (i32, i32) {
    %c0_i32 = arith.constant 0 : i32
    %c0_i32_0 = arith.constant 0 : i32
    %c0_i32_1 = arith.constant 0 : i32
    return %c0_i32, %c0_i32_0 : i32, i32
  }
  func.func @transform_11(%arg0: i32) -> (i32, i32) {
    %c0_i32 = arith.constant 0 : i32
    %c0_i32_0 = arith.constant 0 : i32
    %c0_i32_1 = arith.constant 0 : i32
    return %c0_i32, %c0_i32_0 : i32, i32
  }
  func.func @transform_12(%arg0: i32) -> (i32, i32) {
    %c0_i32 = arith.constant 0 : i32
    %c0_i32_0 = arith.constant 0 : i32
    %c0_i32_1 = arith.constant 0 : i32
    return %c0_i32, %c0_i32_0 : i32, i32
  }
  func.func @transform_13(%arg0: i32) -> (i32, i32) {
    %c0_i32 = arith.constant 0 : i32
    %c0_i32_0 = arith.constant 0 : i32
    %c0_i32_1 = arith.constant 0 : i32
    return %c0_i32, %c0_i32_0 : i32, i32
  }
  func.func @transform_14(%arg0: i32) -> (i32, i32) {
    %c0_i32 = arith.constant 0 : i32
    %c0_i32_0 = arith.constant 0 : i32
    %c0_i32_1 = arith.constant 0 : i32
    return %c0_i32, %c0_i32_0 : i32, i32
  }
  func.func @transform_15(%arg0: i32) -> (i32, i32) {
    %c0_i32 = arith.constant 0 : i32
    %c0_i32_0 = arith.constant 0 : i32
    %c0_i32_1 = arith.constant 0 : i32
    return %c0_i32, %c0_i32_0 : i32, i32
  }
  func.func @transform_16(%arg0: i32) -> (i32, i32) {
    %c0_i32 = arith.constant 0 : i32
    %c0_i32_0 = arith.constant 0 : i32
    %c0_i32_1 = arith.constant 0 : i32
    return %c0_i32, %c0_i32_0 : i32, i32
  }
  func.func @transform_17(%arg0: i32) -> (i32, i32) {
    %c0_i32 = arith.constant 0 : i32
    %c0_i32_0 = arith.constant 0 : i32
    %c0_i32_1 = arith.constant 0 : i32
    return %c0_i32, %c0_i32_0 : i32, i32
  }
  func.func @transform_18(%arg0: i32) -> (i32, i32) {
    %c0_i32 = arith.constant 0 : i32
    %c0_i32_0 = arith.constant 0 : i32
    %c0_i32_1 = arith.constant 0 : i32
    return %c0_i32, %c0_i32_0 : i32, i32
  }
  func.func @transform_19(%arg0: i32) -> (i32, i32) {
    %c0_i32 = arith.constant 0 : i32
    %c0_i32_0 = arith.constant 0 : i32
    %c0_i32_1 = arith.constant 0 : i32
    return %c0_i32, %c0_i32_0 : i32, i32
  }
  func.func @transform_20(%arg0: i32) -> (i32, i32) {
    %c0_i32 = arith.constant 0 : i32
    %c0_i32_0 = arith.constant 0 : i32
    %c0_i32_1 = arith.constant 0 : i32
    return %c0_i32, %c0_i32_0 : i32, i32
  }
  func.func @transform_21(%arg0: i32) -> (i32, i32) {
    %c0_i32 = arith.constant 0 : i32
    %c0_i32_0 = arith.constant 0 : i32
    %c0_i32_1 = arith.constant 0 : i32
    return %c0_i32, %c0_i32_0 : i32, i32
  }
  func.func @transform_22(%arg0: i32) -> (i32, i32) {
    %c0_i32 = arith.constant 0 : i32
    %c0_i32_0 = arith.constant 0 : i32
    %c0_i32_1 = arith.constant 0 : i32
    return %c0_i32, %c0_i32_0 : i32, i32
  }
  func.func @transform_23(%arg0: i32) -> (i32, i32) {
    %c0_i32 = arith.constant 0 : i32
    %c0_i32_0 = arith.constant 0 : i32
    %c0_i32_1 = arith.constant 0 : i32
    return %c0_i32, %c0_i32_0 : i32, i32
  }
  func.func @transform_24(%arg0: i32) -> (i32, i32) {
    %c0_i32 = arith.constant 0 : i32
    %c0_i32_0 = arith.constant 0 : i32
    %c0_i32_1 = arith.constant 0 : i32
    return %c0_i32, %c0_i32_0 : i32, i32
  }
  func.func @transform_25(%arg0: i32) -> (i32, i32) {
    %c0_i32 = arith.constant 0 : i32
    %c0_i32_0 = arith.constant 0 : i32
    %c0_i32_1 = arith.constant 0 : i32
    return %c0_i32, %c0_i32_0 : i32, i32
  }
  func.func @transform_26(%arg0: i32) -> (i32, i32) {
    %c0_i32 = arith.constant 0 : i32
    %c0_i32_0 = arith.constant 0 : i32
    %c0_i32_1 = arith.constant 0 : i32
    return %c0_i32, %c0_i32_0 : i32, i32
  }
  func.func @transform_27(%arg0: i32) -> (i32, i32) {
    %c0_i32 = arith.constant 0 : i32
    %c0_i32_0 = arith.constant 0 : i32
    %c0_i32_1 = arith.constant 0 : i32
    return %c0_i32, %c0_i32_0 : i32, i32
  }
  func.func @transform_28(%arg0: i32) -> (i32, i32) {
    %c0_i32 = arith.constant 0 : i32
    %c0_i32_0 = arith.constant 0 : i32
    %c0_i32_1 = arith.constant 0 : i32
    return %c0_i32, %c0_i32_0 : i32, i32
  }
  func.func @transform_29(%arg0: i32) -> (i32, i32) {
    %c0_i32 = arith.constant 0 : i32
    %c0_i32_0 = arith.constant 0 : i32
    %c0_i32_1 = arith.constant 0 : i32
    return %c0_i32, %c0_i32_0 : i32, i32
  }
  func.func @transform_30(%arg0: i32) -> (i32, i32) {
    %c0_i32 = arith.constant 0 : i32
    %c0_i32_0 = arith.constant 0 : i32
    %c0_i32_1 = arith.constant 0 : i32
    return %c0_i32, %c0_i32_0 : i32, i32
  }
  func.func @transform_31(%arg0: i32) -> (i32, i32, i32) {
    %c0_i32 = arith.constant 0 : i32
    %c0_i32_0 = arith.constant 0 : i32
    %c0_i32_1 = arith.constant 0 : i32
    return %arg0, %c0_i32, %c0_i32_0 : i32, i32, i32
  }
  func.func @transform_32(%arg0: i32) -> (i32, i32, i32) {
    %c0_i32 = arith.constant 0 : i32
    %c0_i32_0 = arith.constant 0 : i32
    %c0_i32_1 = arith.constant 0 : i32
    return %arg0, %c0_i32, %c0_i32_0 : i32, i32, i32
  }
}

</mosaic_0001>

<llo_original>
// kernel: transformer_decoder_forward.2
$region0: #{transformer_decoder_forward.2}
  #allocation0 [shape = 'u32[]', space=smem, size = 0x4, offset = 0x4, fixed_abs, tag = 'smem constant byte address 0x4 - core index']
  #allocation1 [shape = 'u32[144,128]{1,0:T(1,128)}', space=vmem, size = 0x12000, scoped, tag = 'internal scratch']
  %s0 = inlined_call_operand.smem [shape: u32[33], index: -1, kind: input, shape index: {}]
  %s1 = sld [smem:[%s0]]
  %s2 = scalar_lea.smem %s0, 1
  %s3 = sld [smem:[%s2]]
  %s4 = scalar_lea.smem %s0, 2
  %s5 = sld [smem:[%s4]]
  %s6 = scalar_lea.smem %s0, 3
  %s7 = sld [smem:[%s6]]
  %s8 = scalar_lea.smem %s0, 4
  %s9 = sld [smem:[%s8]]
  %s10 = scalar_lea.smem %s0, 5
  %s11 = sld [smem:[%s10]]
  %s12 = scalar_lea.smem %s0, 6
  %s13 = sld [smem:[%s12]]
  %s14 = scalar_lea.smem %s0, 7
  %s15 = sld [smem:[%s14]]
  %s16 = scalar_lea.smem %s0, 8
  %s17 = sld [smem:[%s16]]
  %s18 = scalar_lea.smem %s0, 9
  %s19 = sld [smem:[%s18]]
  %s20 = scalar_lea.smem %s0, 10
  %s21 = sld [smem:[%s20]]
  %s22 = scalar_lea.smem %s0, 11
  %s23 = sld [smem:[%s22]]
  %s24 = scalar_lea.smem %s0, 12
  %s25 = sld [smem:[%s24]]
  %s26 = scalar_lea.smem %s0, 13
  %s27 = sld [smem:[%s26]]
  %s28 = scalar_lea.smem %s0, 14
  %s29 = sld [smem:[%s28]]
  %s30 = scalar_lea.smem %s0, 15
  %s31 = sld [smem:[%s30]]
  %s32 = scalar_lea.smem %s0, 16
  %s33 = sld [smem:[%s32]]
  %s34 = scalar_lea.smem %s0, 17
  %s35 = sld [smem:[%s34]]
  %s36 = scalar_lea.smem %s0, 18
  %s37 = sld [smem:[%s36]]
  %s38 = scalar_lea.smem %s0, 19
  %s39 = sld [smem:[%s38]]
  %s40 = scalar_lea.smem %s0, 20
  %s41 = sld [smem:[%s40]]
  %s42 = scalar_lea.smem %s0, 21
  %s43 = sld [smem:[%s42]]
  %s44 = scalar_lea.smem %s0, 22
  %s45 = sld [smem:[%s44]]
  %s46 = scalar_lea.smem %s0, 23
  %s47 = sld [smem:[%s46]]
  %s48 = scalar_lea.smem %s0, 24
  %s49 = sld [smem:[%s48]]
  %s50 = scalar_lea.smem %s0, 25
  %s51 = sld [smem:[%s50]]
  %s52 = scalar_lea.smem %s0, 26
  %s53 = sld [smem:[%s52]]
  %s54 = scalar_lea.smem %s0, 27
  %s55 = sld [smem:[%s54]]
  %s56 = scalar_lea.smem %s0, 28
  %s57 = sld [smem:[%s56]]
  %s58 = scalar_lea.smem %s0, 29
  %s59 = sld [smem:[%s58]]
  %s60 = scalar_lea.smem %s0, 30
  %s61 = sld [smem:[%s60]]
  %s62 = scalar_lea.smem %s0, 31
  %s63 = sld [smem:[%s62]]
  %s64 = scalar_lea.smem %s0, 32
  %s65 = sld [smem:[%s64]]
  %66 = xla_tuple %s63, %s65
  %s67 = sld [smem:[#allocation0]]
  $region289: #{transformer_decoder_forward.2} parent=0
    _
  %s69 = ssub.s32 1, %s67
  %s70 = scalar_select 0, %s69, %s67
  $region1: #{transformer_decoder_forward.2} parent=0
    #allocation2 [shape = 'u8[8192]{0}', space=vmem, size = 0x2000, scoped, tag = 'input window, operand 0']
    #allocation3 [shape = 's32[2]{0}', space=sflag, size = 0x8, scoped, tag = 'scoped memory for transformer_decoder_forward.2']
    #allocation4 [shape = 's32[2]{0}', space=sflag, size = 0x8, scoped, tag = 'scoped memory for transformer_decoder_forward.2']
    #allocation5 [shape = 'u8[8192]{0}', space=vmem, size = 0x2000, scoped, tag = 'input window, operand 1']
    #allocation6 [shape = 's32[2]{0}', space=sflag, size = 0x8, scoped, tag = 'scoped memory for transformer_decoder_forward.2']
    #allocation7 [shape = 'u8[16384]{0}', space=vmem, size = 0x4000, scoped, tag = 'input window, operand 2']
    #allocation8 [shape = 'u8[16384]{0}', space=vmem, size = 0x4000, scoped, tag = 'input window, operand 3']
    #allocation9 [shape = 's32[2]{0}', space=sflag, size = 0x8, scoped, tag = 'scoped memory for transformer_decoder_forward.2']
    #allocation10 [shape = 'u8[4096]{0}', space=vmem, size = 0x1000, scoped, tag = 'input window, operand 4, single buffered']
    #allocation11 [shape = 'u8[16384]{0}', space=vmem, size = 0x4000, scoped, tag = 'input window, operand 5, single buffered']
    #allocation12 [shape = 's32[1]{0}', space=sflag, size = 0x4, scoped, tag = 'scoped memory for transformer_decoder_forward.2']
    #allocation13 [shape = 'u8[512]{0}', space=vmem, size = 0x400, scoped, tag = 'input window, operand 6, single buffered']
    #allocation14 [shape = 'u8[16384]{0}', space=vmem, size = 0x4000, scoped, tag = 'input window, operand 7, single buffered']
    #allocation15 [shape = 's32[1]{0}', space=sflag, size = 0x4, scoped, tag = 'scoped memory for transformer_decoder_forward.2']
    #allocation16 [shape = 'u8[512]{0}', space=vmem, size = 0x400, scoped, tag = 'input window, operand 8, single buffered']
    #allocation17 [shape = 'u8[16384]{0}', space=vmem, size = 0x4000, scoped, tag = 'input window, operand 9, single buffered']
    #allocation18 [shape = 's32[1]{0}', space=sflag, size = 0x4, scoped, tag = 'scoped memory for transformer_decoder_forward.2']
    #allocation19 [shape = 'u8[512]{0}', space=vmem, size = 0x400, scoped, tag = 'input window, operand 10, single buffered']
    #allocation20 [shape = 'u8[512]{0}', space=vmem, size = 0x400, scoped, tag = 'input window, operand 11, single buffered']
    #allocation21 [shape = 's32[1]{0}', space=sflag, size = 0x4, scoped, tag = 'scoped memory for transformer_decoder_forward.2']
    #allocation22 [shape = 'u8[512]{0}', space=vmem, size = 0x400, scoped, tag = 'input window, operand 12, single buffered']
    #allocation23 [shape = 'u8[16384]{0}', space=vmem, size = 0x4000, scoped, tag = 'input window, operand 13, single buffered']
    #allocation24 [shape = 's32[1]{0}', space=sflag, size = 0x4, scoped, tag = 'scoped memory for transformer_decoder_forward.2']
    #allocation25 [shape = 'u8[512]{0}', space=vmem, size = 0x400, scoped, tag = 'input window, operand 14, single buffered']
    #allocation26 [shape = 'u8[16384]{0}', space=vmem, size = 0x4000, scoped, tag = 'input window, operand 15, single buffered']
    #allocation27 [shape = 's32[1]{0}', space=sflag, size = 0x4, scoped, tag = 'scoped memory for transformer_decoder_forward.2']
    #allocation28 [shape = 'u8[512]{0}', space=vmem, size = 0x400, scoped, tag = 'input window, operand 16, single buffered']
    #allocation29 [shape = 'u8[16384]{0}', space=vmem, size = 0x4000, scoped, tag = 'input window, operand 17, single buffered']
    #allocation30 [shape = 's32[1]{0}', space=sflag, size = 0x4, scoped, tag = 'scoped memory for transformer_decoder_forward.2']
    #allocation31 [shape = 'u8[512]{0}', space=vmem, size = 0x400, scoped, tag = 'input window, operand 18, single buffered']
    #allocation32 [shape = 'u8[16384]{0}', space=vmem, size = 0x4000, scoped, tag = 'input window, operand 19, single buffered']
    #allocation33 [shape = 's32[1]{0}', space=sflag, size = 0x4, scoped, tag = 'scoped memory for transformer_decoder_forward.2']
    #allocation34 [shape = 'u8[512]{0}', space=vmem, size = 0x400, scoped, tag = 'input window, operand 20, single buffered']
    #allocation35 [shape = 'u8[512]{0}', space=vmem, size = 0x400, scoped, tag = 'input window, operand 21, single buffered']
    #allocation36 [shape = 's32[1]{0}', space=sflag, size = 0x4, scoped, tag = 'scoped memory for transformer_decoder_forward.2']
    #allocation37 [shape = 'u8[512]{0}', space=vmem, size = 0x400, scoped, tag = 'input window, operand 22, single buffered']
    #allocation38 [shape = 'u8[16384]{0}', space=vmem, size = 0x4000, scoped, tag = 'input window, operand 23, single buffered']
    #allocation39 [shape = 's32[1]{0}', space=sflag, size = 0x4, scoped, tag = 'scoped memory for transformer_decoder_forward.2']
    #allocation40 [shape = 'u8[512]{0}', space=vmem, size = 0x400, scoped, tag = 'input window, operand 24, single buffered']
    #allocation41 [shape = 'u8[32768]{0}', space=vmem, size = 0x8000, scoped, tag = 'input window, operand 25, single buffered']
    #allocation42 [shape = 's32[1]{0}', space=sflag, size = 0x4, scoped, tag = 'scoped memory for transformer_decoder_forward.2']
    #allocation43 [shape = 'u8[512]{0}', space=vmem, size = 0x400, scoped, tag = 'input window, operand 26, single buffered']
    #allocation44 [shape = 'u8[512]{0}', space=vmem, size = 0x400, scoped, tag = 'input window, operand 27, single buffered']
    #allocation45 [shape = 's32[1]{0}', space=sflag, size = 0x4, scoped, tag = 'scoped memory for transformer_decoder_forward.2']
    #allocation46 [shape = 'u8[512]{0}', space=vmem, size = 0x400, scoped, tag = 'input window, operand 28, single buffered']
    #allocation47 [shape = 'u8[512]{0}', space=vmem, size = 0x400, scoped, tag = 'input window, operand 29, single buffered']
    #allocation48 [shape = 's32[1]{0}', space=sflag, size = 0x4, scoped, tag = 'scoped memory for transformer_decoder_forward.2']
    #allocation49 [shape = 'u8[512]{0}', space=vmem, size = 0x400, scoped, tag = 'input window, operand 30, single buffered']
    #allocation50 [shape = 'u8[8192]{0}', space=vmem, size = 0x2000, scoped, tag = 'output window, operand 0']
    #allocation51 [shape = 'u8[8192]{0}', space=vmem, size = 0x2000, scoped, tag = 'output window, operand 1']
    #allocation52 [shape = 's32[2]{0}', space=sflag, size = 0x8, scoped, tag = 'scoped memory for transformer_decoder_forward.2']
    %71 = vsyncpa [#allocation3], 0
    %s72 = scalar_lea.sflag [#allocation3], 1
    %73 = vsyncpa %s72, 0
    %74 = vsyncpa [#allocation6], 0
    %s75 = scalar_lea.sflag [#allocation6], 1
    %76 = vsyncpa %s75, 0
    %77 = vsyncpa [#allocation9], 0
    %s78 = scalar_lea.sflag [#allocation9], 1
    %79 = vsyncpa %s78, 0
    %80 = vsyncpa [#allocation12], 0
    %81 = vsyncpa [#allocation15], 0
    %82 = vsyncpa [#allocation18], 0
    %83 = vsyncpa [#allocation21], 0
    %84 = vsyncpa [#allocation24], 0
    %85 = vsyncpa [#allocation27], 0
    %86 = vsyncpa [#allocation30], 0
    %87 = vsyncpa [#allocation33], 0
    %88 = vsyncpa [#allocation36], 0
    %89 = vsyncpa [#allocation39], 0
    %90 = vsyncpa [#allocation42], 0
    %91 = vsyncpa [#allocation45], 0
    %92 = vsyncpa [#allocation48], 0
    %93 = vsyncpa [#allocation4], 0
    %s94 = scalar_lea.sflag [#allocation4], 1
    %95 = vsyncpa %s94, 0
    %96 = vsyncpa [#allocation52], 0
    %s97 = scalar_lea.sflag [#allocation52], 1
    %98 = vsyncpa %s97, 0
    loop: start=0, step=1, limit=4
    $region2: #{transformer_decoder_forward.2} parent=1 // loop_pre_header
      _
    $region3: #{transformer_decoder_forward.2} parent=1 // loop_header
      %s100 = sphi 0, %s104
      %p101 = scmp.ge.s32.totalorder %s100, 4
      %s110 = sphi 0, %s112
      %s113 = sphi 0, %s110
      %s114 = sphi 0, %s113
      %s130 = sphi 0, %s114
      %s136 = sphi 0, %s138
      %s139 = sphi 0, %s136
      %s140 = sphi 0, %s139
      %s156 = sphi 0, %s140
      %s162 = sphi 0, %s164
      %s165 = sphi 0, %s162
      %s166 = sphi 0, %s165
      %s182 = sphi 0, %s166
      %s188 = sphi 0, %s190
      %s191 = sphi 0, %s188
      %s192 = sphi 0, %s191
      %s208 = sphi 0, %s192
      %s212 = sphi 0, %s212
      %s214 = sphi 0, %s212
      %s215 = sphi 0, %s214
      %s229 = sphi 0, %s215
      %s233 = sphi 0, %s233
      %s235 = sphi 0, %s233
      %s236 = sphi 0, %s235
      %s250 = sphi 0, %s236
      %s254 = sphi 0, %s254
      %s256 = sphi 0, %s254
      %s257 = sphi 0, %s256
      %s271 = sphi 0, %s257
      %s275 = sphi 0, %s275
      %s277 = sphi 0, %s275
      %s278 = sphi 0, %s277
      %s292 = sphi 0, %s278
      %s296 = sphi 0, %s296
      %s298 = sphi 0, %s296
      %s299 = sphi 0, %s298
      %s313 = sphi 0, %s299
      %s317 = sphi 0, %s317
      %s319 = sphi 0, %s317
      %s320 = sphi 0, %s319
      %s334 = sphi 0, %s320
      %s338 = sphi 0, %s338
      %s340 = sphi 0, %s338
      %s341 = sphi 0, %s340
      %s355 = sphi 0, %s341
      %s359 = sphi 0, %s359
      %s361 = sphi 0, %s359
      %s362 = sphi 0, %s361
      %s376 = sphi 0, %s362
      %s380 = sphi 0, %s380
      %s382 = sphi 0, %s380
      %s383 = sphi 0, %s382
      %s397 = sphi 0, %s383
      %s401 = sphi 0, %s401
      %s403 = sphi 0, %s401
      %s404 = sphi 0, %s403
      %s418 = sphi 0, %s404
      %s422 = sphi 0, %s422
      %s424 = sphi 0, %s422
      %s425 = sphi 0, %s424
      %s439 = sphi 0, %s425
      %s443 = sphi 0, %s443
      %s445 = sphi 0, %s443
      %s446 = sphi 0, %s445
      %s460 = sphi 0, %s446
      %s464 = sphi 0, %s464
      %s466 = sphi 0, %s464
      %s467 = sphi 0, %s466
      %s481 = sphi 0, %s467
      %s485 = sphi 0, %s485
      %s487 = sphi 0, %s485
      %s488 = sphi 0, %s487
      %s502 = sphi 0, %s488
      %s506 = sphi 0, %s506
      %s508 = sphi 0, %s506
      %s509 = sphi 0, %s508
      %s523 = sphi 0, %s509
      %s527 = sphi 0, %s527
      %s529 = sphi 0, %s527
      %s530 = sphi 0, %s529
      %s544 = sphi 0, %s530
      %s548 = sphi 0, %s548
      %s550 = sphi 0, %s548
      %s551 = sphi 0, %s550
      %s565 = sphi 0, %s551
      %s569 = sphi 0, %s569
      %s571 = sphi 0, %s569
      %s572 = sphi 0, %s571
      %s586 = sphi 0, %s572
      %s590 = sphi 0, %s590
      %s592 = sphi 0, %s590
      %s593 = sphi 0, %s592
      %s607 = sphi 0, %s593
      %s611 = sphi 0, %s611
      %s613 = sphi 0, %s611
      %s614 = sphi 0, %s613
      %s628 = sphi 0, %s614
      %s632 = sphi 0, %s632
      %s634 = sphi 0, %s632
      %s635 = sphi 0, %s634
      %s649 = sphi 0, %s635
      %s653 = sphi 0, %s653
      %s655 = sphi 0, %s653
      %s656 = sphi 0, %s655
      %s670 = sphi 0, %s656
      %s674 = sphi 0, %s674
      %s676 = sphi 0, %s674
      %s677 = sphi 0, %s676
      %s691 = sphi 0, %s677
      %s695 = sphi 0, %s695
      %s697 = sphi 0, %s695
      %s698 = sphi 0, %s697
      %s712 = sphi 0, %s698
      %s716 = sphi 0, %s716
      %s718 = sphi 0, %s716
      %s719 = sphi 0, %s718
      %s733 = sphi 0, %s719
      %s737 = sphi 0, %s737
      %s739 = sphi 0, %s737
      %s740 = sphi 0, %s739
      %s754 = sphi 0, %s740
      %s758 = sphi 0, %s758
      %s760 = sphi 0, %s758
      %s761 = sphi 0, %s760
      %s775 = sphi 0, %s761
      %s781 = sphi 0, %s783
      %s784 = sphi 0, %s781
      %s785 = sphi 0, %s784
      %s801 = sphi 0, %s785
      %s807 = sphi 0, %s809
      %s810 = sphi 0, %s807
      %s811 = sphi 0, %s810
      %s827 = sphi 0, %s811
    $region4: #{transformer_decoder_forward.2} parent=1 // loop_header_branch
      %103 = sbr.rel (%p101) target = $region8
    $region5: #{transformer_decoder_forward.2} parent=1 // loop_body
      %s105 = ssub.s32 %s100, 1
      %s106 = ssub.s32 %s100, 2
      %s107 = sadd.s32 %s100, 1
      %s108 = ssub.s32 %s100, %s107
      %p109 = scmp.eq.s32.totalorder %s108, 0
      %s111 = sadd.s32 %s110, 1
      %s112 = scalar_select %p109, %s110, %s111
      %p115 = pneg %p109
      %p116 = scmp.eq.s32.totalorder %s100, 1
      %p117 = por %p115, %p116
      %p118 = scmp.ne.s32.totalorder %s110, %s113
      %p119 = scmp.eq.s32.totalorder %s100, 0
      %p120 = por %p118, %p119
      %p121 = scmp.ne.s32.totalorder %s110, %s113
      %p122 = scmp.eq.s32.totalorder %s105, 1
      %p123 = por %p121, %p122
      %p124 = scmp.ne.s32.totalorder %s113, %s114
      %p125 = scmp.eq.s32.totalorder %s105, 0
      %p126 = por %p124, %p125
      %p127 = scmp.ne.s32.totalorder %s113, %s114
      %p128 = scmp.eq.s32.totalorder %s106, 1
      %p129 = por %p127, %p128
      %p131 = scmp.ne.s32.totalorder %s114, %s130
      %p132 = scmp.eq.s32.totalorder %s106, 0
      %p133 = por %p131, %p132
      %s134 = ssub.s32 %s100, %s107
      %p135 = scmp.eq.s32.totalorder %s134, 0
      %s137 = sadd.s32 %s136, 1
      %s138 = scalar_select %p135, %s136, %s137
      %p141 = pneg %p135
      %p142 = scmp.eq.s32.totalorder %s100, 1
      %p143 = por %p141, %p142
      %p144 = scmp.ne.s32.totalorder %s136, %s139
      %p145 = scmp.eq.s32.totalorder %s100, 0
      %p146 = por %p144, %p145
      %p147 = scmp.ne.s32.totalorder %s136, %s139
      %p148 = scmp.eq.s32.totalorder %s105, 1
      %p149 = por %p147, %p148
      %p150 = scmp.ne.s32.totalorder %s139, %s140
      %p151 = scmp.eq.s32.totalorder %s105, 0
      %p152 = por %p150, %p151
      %p153 = scmp.ne.s32.totalorder %s139, %s140
      %p154 = scmp.eq.s32.totalorder %s106, 1
      %p155 = por %p153, %p154
      %p157 = scmp.ne.s32.totalorder %s140, %s156
      %p158 = scmp.eq.s32.totalorder %s106, 0
      %p159 = por %p157, %p158
      %s160 = ssub.s32 %s100, %s107
      %p161 = scmp.eq.s32.totalorder %s160, 0
      %s163 = sadd.s32 %s162, 1
      %s164 = scalar_select %p161, %s162, %s163
      %p167 = pneg %p161
      %p168 = scmp.eq.s32.totalorder %s100, 1
      %p169 = por %p167, %p168
      %p170 = scmp.ne.s32.totalorder %s162, %s165
      %p171 = scmp.eq.s32.totalorder %s100, 0
      %p172 = por %p170, %p171
      %p173 = scmp.ne.s32.totalorder %s162, %s165
      %p174 = scmp.eq.s32.totalorder %s105, 1
      %p175 = por %p173, %p174
      %p176 = scmp.ne.s32.totalorder %s165, %s166
      %p177 = scmp.eq.s32.totalorder %s105, 0
      %p178 = por %p176, %p177
      %p179 = scmp.ne.s32.totalorder %s165, %s166
      %p180 = scmp.eq.s32.totalorder %s106, 1
      %p181 = por %p179, %p180
      %p183 = scmp.ne.s32.totalorder %s166, %s182
      %p184 = scmp.eq.s32.totalorder %s106, 0
      %p185 = por %p183, %p184
      %s186 = ssub.s32 %s100, %s107
      %p187 = scmp.eq.s32.totalorder %s186, 0
      %s189 = sadd.s32 %s188, 1
      %s190 = scalar_select %p187, %s188, %s189
      %p193 = pneg %p187
      %p194 = scmp.eq.s32.totalorder %s100, 1
      %p195 = por %p193, %p194
      %p196 = scmp.ne.s32.totalorder %s188, %s191
      %p197 = scmp.eq.s32.totalorder %s100, 0
      %p198 = por %p196, %p197
      %p199 = scmp.ne.s32.totalorder %s188, %s191
      %p200 = scmp.eq.s32.totalorder %s105, 1
      %p201 = por %p199, %p200
      %p202 = scmp.ne.s32.totalorder %s191, %s192
      %p203 = scmp.eq.s32.totalorder %s105, 0
      %p204 = por %p202, %p203
      %p205 = scmp.ne.s32.totalorder %s191, %s192
      %p206 = scmp.eq.s32.totalorder %s106, 1
      %p207 = por %p205, %p206
      %p209 = scmp.ne.s32.totalorder %s192, %s208
      %p210 = scmp.eq.s32.totalorder %s106, 0
      %p211 = por %p209, %p210
      %s213 = sadd.s32 %s212, 1
      %p216 = scmp.eq.s32.totalorder %s100, 1
      %p217 = scmp.ne.s32.totalorder %s212, %s214
      %p218 = scmp.eq.s32.totalorder %s100, 0
      %p219 = por %p217, %p218
      %p220 = scmp.ne.s32.totalorder %s212, %s214
      %p221 = scmp.eq.s32.totalorder %s105, 1
      %p222 = por %p220, %p221
      %p223 = scmp.ne.s32.totalorder %s214, %s215
      %p224 = scmp.eq.s32.totalorder %s105, 0
      %p225 = por %p223, %p224
      %p226 = scmp.ne.s32.totalorder %s214, %s215
      %p227 = scmp.eq.s32.totalorder %s106, 1
      %p228 = por %p226, %p227
      %p230 = scmp.ne.s32.totalorder %s215, %s229
      %p231 = scmp.eq.s32.totalorder %s106, 0
      %p232 = por %p230, %p231
      %s234 = sadd.s32 %s233, 1
      %p237 = scmp.eq.s32.totalorder %s100, 1
      %p238 = scmp.ne.s32.totalorder %s233, %s235
      %p239 = scmp.eq.s32.totalorder %s100, 0
      %p240 = por %p238, %p239
      %p241 = scmp.ne.s32.totalorder %s233, %s235
      %p242 = scmp.eq.s32.totalorder %s105, 1
      %p243 = por %p241, %p242
      %p244 = scmp.ne.s32.totalorder %s235, %s236
      %p245 = scmp.eq.s32.totalorder %s105, 0
      %p246 = por %p244, %p245
      %p247 = scmp.ne.s32.totalorder %s235, %s236
      %p248 = scmp.eq.s32.totalorder %s106, 1
      %p249 = por %p247, %p248
      %p251 = scmp.ne.s32.totalorder %s236, %s250
      %p252 = scmp.eq.s32.totalorder %s106, 0
      %p253 = por %p251, %p252
      %s255 = sadd.s32 %s254, 1
      %p258 = scmp.eq.s32.totalorder %s100, 1
      %p259 = scmp.ne.s32.totalorder %s254, %s256
      %p260 = scmp.eq.s32.totalorder %s100, 0
      %p261 = por %p259, %p260
      %p262 = scmp.ne.s32.totalorder %s254, %s256
      %p263 = scmp.eq.s32.totalorder %s105, 1
      %p264 = por %p262, %p263
      %p265 = scmp.ne.s32.totalorder %s256, %s257
      %p266 = scmp.eq.s32.totalorder %s105, 0
      %p267 = por %p265, %p266
      %p268 = scmp.ne.s32.totalorder %s256, %s257
      %p269 = scmp.eq.s32.totalorder %s106, 1
      %p270 = por %p268, %p269
      %p272 = scmp.ne.s32.totalorder %s257, %s271
      %p273 = scmp.eq.s32.totalorder %s106, 0
      %p274 = por %p272, %p273
      %s276 = sadd.s32 %s275, 1
      %p279 = scmp.eq.s32.totalorder %s100, 1
      %p280 = scmp.ne.s32.totalorder %s275, %s277
      %p281 = scmp.eq.s32.totalorder %s100, 0
      %p282 = por %p280, %p281
      %p283 = scmp.ne.s32.totalorder %s275, %s277
      %p284 = scmp.eq.s32.totalorder %s105, 1
      %p285 = por %p283, %p284
      %p286 = scmp.ne.s32.totalorder %s277, %s278
      %p287 = scmp.eq.s32.totalorder %s105, 0
      %p288 = por %p286, %p287
      %p289 = scmp.ne.s32.totalorder %s277, %s278
      %p290 = scmp.eq.s32.totalorder %s106, 1
      %p291 = por %p289, %p290
      %p293 = scmp.ne.s32.totalorder %s278, %s292
      %p294 = scmp.eq.s32.totalorder %s106, 0
      %p295 = por %p293, %p294
      %s297 = sadd.s32 %s296, 1
      %p300 = scmp.eq.s32.totalorder %s100, 1
      %p301 = scmp.ne.s32.totalorder %s296, %s298
      %p302 = scmp.eq.s32.totalorder %s100, 0
      %p303 = por %p301, %p302
      %p304 = scmp.ne.s32.totalorder %s296, %s298
      %p305 = scmp.eq.s32.totalorder %s105, 1
      %p306 = por %p304, %p305
      %p307 = scmp.ne.s32.totalorder %s298, %s299
      %p308 = scmp.eq.s32.totalorder %s105, 0
      %p309 = por %p307, %p308
      %p310 = scmp.ne.s32.totalorder %s298, %s299
      %p311 = scmp.eq.s32.totalorder %s106, 1
      %p312 = por %p310, %p311
      %p314 = scmp.ne.s32.totalorder %s299, %s313
      %p315 = scmp.eq.s32.totalorder %s106, 0
      %p316 = por %p314, %p315
      %s318 = sadd.s32 %s317, 1
      %p321 = scmp.eq.s32.totalorder %s100, 1
      %p322 = scmp.ne.s32.totalorder %s317, %s319
      %p323 = scmp.eq.s32.totalorder %s100, 0
      %p324 = por %p322, %p323
      %p325 = scmp.ne.s32.totalorder %s317, %s319
      %p326 = scmp.eq.s32.totalorder %s105, 1
      %p327 = por %p325, %p326
      %p328 = scmp.ne.s32.totalorder %s319, %s320
      %p329 = scmp.eq.s32.totalorder %s105, 0
      %p330 = por %p328, %p329
      %p331 = scmp.ne.s32.totalorder %s319, %s320
      %p332 = scmp.eq.s32.totalorder %s106, 1
      %p333 = por %p331, %p332
      %p335 = scmp.ne.s32.totalorder %s320, %s334
      %p336 = scmp.eq.s32.totalorder %s106, 0
      %p337 = por %p335, %p336
      %s339 = sadd.s32 %s338, 1
      %p342 = scmp.eq.s32.totalorder %s100, 1
      %p343 = scmp.ne.s32.totalorder %s338, %s340
      %p344 = scmp.eq.s32.totalorder %s100, 0
      %p345 = por %p343, %p344
      %p346 = scmp.ne.s32.totalorder %s338, %s340
      %p347 = scmp.eq.s32.totalorder %s105, 1
      %p348 = por %p346, %p347
      %p349 = scmp.ne.s32.totalorder %s340, %s341
      %p350 = scmp.eq.s32.totalorder %s105, 0
      %p351 = por %p349, %p350
      %p352 = scmp.ne.s32.totalorder %s340, %s341
      %p353 = scmp.eq.s32.totalorder %s106, 1
      %p354 = por %p352, %p353
      %p356 = scmp.ne.s32.totalorder %s341, %s355
      %p357 = scmp.eq.s32.totalorder %s106, 0
      %p358 = por %p356, %p357
      %s360 = sadd.s32 %s359, 1
      %p363 = scmp.eq.s32.totalorder %s100, 1
      %p364 = scmp.ne.s32.totalorder %s359, %s361
      %p365 = scmp.eq.s32.totalorder %s100, 0
      %p366 = por %p364, %p365
      %p367 = scmp.ne.s32.totalorder %s359, %s361
      %p368 = scmp.eq.s32.totalorder %s105, 1
      %p369 = por %p367, %p368
      %p370 = scmp.ne.s32.totalorder %s361, %s362
      %p371 = scmp.eq.s32.totalorder %s105, 0
      %p372 = por %p370, %p371
      %p373 = scmp.ne.s32.totalorder %s361, %s362
      %p374 = scmp.eq.s32.totalorder %s106, 1
      %p375 = por %p373, %p374
      %p377 = scmp.ne.s32.totalorder %s362, %s376
      %p378 = scmp.eq.s32.totalorder %s106, 0
      %p379 = por %p377, %p378
      %s381 = sadd.s32 %s380, 1
      %p384 = scmp.eq.s32.totalorder %s100, 1
      %p385 = scmp.ne.s32.totalorder %s380, %s382
      %p386 = scmp.eq.s32.totalorder %s100, 0
      %p387 = por %p385, %p386
      %p388 = scmp.ne.s32.totalorder %s380, %s382
      %p389 = scmp.eq.s32.totalorder %s105, 1
      %p390 = por %p388, %p389
      %p391 = scmp.ne.s32.totalorder %s382, %s383
      %p392 = scmp.eq.s32.totalorder %s105, 0
      %p393 = por %p391, %p392
      %p394 = scmp.ne.s32.totalorder %s382, %s383
      %p395 = scmp.eq.s32.totalorder %s106, 1
      %p396 = por %p394, %p395
      %p398 = scmp.ne.s32.totalorder %s383, %s397
      %p399 = scmp.eq.s32.totalorder %s106, 0
      %p400 = por %p398, %p399
      %s402 = sadd.s32 %s401, 1
      %p405 = scmp.eq.s32.totalorder %s100, 1
      %p406 = scmp.ne.s32.totalorder %s401, %s403
      %p407 = scmp.eq.s32.totalorder %s100, 0
      %p408 = por %p406, %p407
      %p409 = scmp.ne.s32.totalorder %s401, %s403
      %p410 = scmp.eq.s32.totalorder %s105, 1
      %p411 = por %p409, %p410
      %p412 = scmp.ne.s32.totalorder %s403, %s404
      %p413 = scmp.eq.s32.totalorder %s105, 0
      %p414 = por %p412, %p413
      %p415 = scmp.ne.s32.totalorder %s403, %s404
      %p416 = scmp.eq.s32.totalorder %s106, 1
      %p417 = por %p415, %p416
      %p419 = scmp.ne.s32.totalorder %s404, %s418
      %p420 = scmp.eq.s32.totalorder %s106, 0
      %p421 = por %p419, %p420
      %s423 = sadd.s32 %s422, 1
      %p426 = scmp.eq.s32.totalorder %s100, 1
      %p427 = scmp.ne.s32.totalorder %s422, %s424
      %p428 = scmp.eq.s32.totalorder %s100, 0
      %p429 = por %p427, %p428
      %p430 = scmp.ne.s32.totalorder %s422, %s424
      %p431 = scmp.eq.s32.totalorder %s105, 1
      %p432 = por %p430, %p431
      %p433 = scmp.ne.s32.totalorder %s424, %s425
      %p434 = scmp.eq.s32.totalorder %s105, 0
      %p435 = por %p433, %p434
      %p436 = scmp.ne.s32.totalorder %s424, %s425
      %p437 = scmp.eq.s32.totalorder %s106, 1
      %p438 = por %p436, %p437
      %p440 = scmp.ne.s32.totalorder %s425, %s439
      %p441 = scmp.eq.s32.totalorder %s106, 0
      %p442 = por %p440, %p441
      %s444 = sadd.s32 %s443, 1
      %p447 = scmp.eq.s32.totalorder %s100, 1
      %p448 = scmp.ne.s32.totalorder %s443, %s445
      %p449 = scmp.eq.s32.totalorder %s100, 0
      %p450 = por %p448, %p449
      %p451 = scmp.ne.s32.totalorder %s443, %s445
      %p452 = scmp.eq.s32.totalorder %s105, 1
      %p453 = por %p451, %p452
      %p454 = scmp.ne.s32.totalorder %s445, %s446
      %p455 = scmp.eq.s32.totalorder %s105, 0
      %p456 = por %p454, %p455
      %p457 = scmp.ne.s32.totalorder %s445, %s446
      %p458 = scmp.eq.s32.totalorder %s106, 1
      %p459 = por %p457, %p458
      %p461 = scmp.ne.s32.totalorder %s446, %s460
      %p462 = scmp.eq.s32.totalorder %s106, 0
      %p463 = por %p461, %p462
      %s465 = sadd.s32 %s464, 1
      %p468 = scmp.eq.s32.totalorder %s100, 1
      %p469 = scmp.ne.s32.totalorder %s464, %s466
      %p470 = scmp.eq.s32.totalorder %s100, 0
      %p471 = por %p469, %p470
      %p472 = scmp.ne.s32.totalorder %s464, %s466
      %p473 = scmp.eq.s32.totalorder %s105, 1
      %p474 = por %p472, %p473
      %p475 = scmp.ne.s32.totalorder %s466, %s467
      %p476 = scmp.eq.s32.totalorder %s105, 0
      %p477 = por %p475, %p476
      %p478 = scmp.ne.s32.totalorder %s466, %s467
      %p479 = scmp.eq.s32.totalorder %s106, 1
      %p480 = por %p478, %p479
      %p482 = scmp.ne.s32.totalorder %s467, %s481
      %p483 = scmp.eq.s32.totalorder %s106, 0
      %p484 = por %p482, %p483
      %s486 = sadd.s32 %s485, 1
      %p489 = scmp.eq.s32.totalorder %s100, 1
      %p490 = scmp.ne.s32.totalorder %s485, %s487
      %p491 = scmp.eq.s32.totalorder %s100, 0
      %p492 = por %p490, %p491
      %p493 = scmp.ne.s32.totalorder %s485, %s487
      %p494 = scmp.eq.s32.totalorder %s105, 1
      %p495 = por %p493, %p494
      %p496 = scmp.ne.s32.totalorder %s487, %s488
      %p497 = scmp.eq.s32.totalorder %s105, 0
      %p498 = por %p496, %p497
      %p499 = scmp.ne.s32.totalorder %s487, %s488
      %p500 = scmp.eq.s32.totalorder %s106, 1
      %p501 = por %p499, %p500
      %p503 = scmp.ne.s32.totalorder %s488, %s502
      %p504 = scmp.eq.s32.totalorder %s106, 0
      %p505 = por %p503, %p504
      %s507 = sadd.s32 %s506, 1
      %p510 = scmp.eq.s32.totalorder %s100, 1
      %p511 = scmp.ne.s32.totalorder %s506, %s508
      %p512 = scmp.eq.s32.totalorder %s100, 0
      %p513 = por %p511, %p512
      %p514 = scmp.ne.s32.totalorder %s506, %s508
      %p515 = scmp.eq.s32.totalorder %s105, 1
      %p516 = por %p514, %p515
      %p517 = scmp.ne.s32.totalorder %s508, %s509
      %p518 = scmp.eq.s32.totalorder %s105, 0
      %p519 = por %p517, %p518
      %p520 = scmp.ne.s32.totalorder %s508, %s509
      %p521 = scmp.eq.s32.totalorder %s106, 1
      %p522 = por %p520, %p521
      %p524 = scmp.ne.s32.totalorder %s509, %s523
      %p525 = scmp.eq.s32.totalorder %s106, 0
      %p526 = por %p524, %p525
      %s528 = sadd.s32 %s527, 1
      %p531 = scmp.eq.s32.totalorder %s100, 1
      %p532 = scmp.ne.s32.totalorder %s527, %s529
      %p533 = scmp.eq.s32.totalorder %s100, 0
      %p534 = por %p532, %p533
      %p535 = scmp.ne.s32.totalorder %s527, %s529
      %p536 = scmp.eq.s32.totalorder %s105, 1
      %p537 = por %p535, %p536
      %p538 = scmp.ne.s32.totalorder %s529, %s530
      %p539 = scmp.eq.s32.totalorder %s105, 0
      %p540 = por %p538, %p539
      %p541 = scmp.ne.s32.totalorder %s529, %s530
      %p542 = scmp.eq.s32.totalorder %s106, 1
      %p543 = por %p541, %p542
      %p545 = scmp.ne.s32.totalorder %s530, %s544
      %p546 = scmp.eq.s32.totalorder %s106, 0
      %p547 = por %p545, %p546
      %s549 = sadd.s32 %s548, 1
      %p552 = scmp.eq.s32.totalorder %s100, 1
      %p553 = scmp.ne.s32.totalorder %s548, %s550
      %p554 = scmp.eq.s32.totalorder %s100, 0
      %p555 = por %p553, %p554
      %p556 = scmp.ne.s32.totalorder %s548, %s550
      %p557 = scmp.eq.s32.totalorder %s105, 1
      %p558 = por %p556, %p557
      %p559 = scmp.ne.s32.totalorder %s550, %s551
      %p560 = scmp.eq.s32.totalorder %s105, 0
      %p561 = por %p559, %p560
      %p562 = scmp.ne.s32.totalorder %s550, %s551
      %p563 = scmp.eq.s32.totalorder %s106, 1
      %p564 = por %p562, %p563
      %p566 = scmp.ne.s32.totalorder %s551, %s565
      %p567 = scmp.eq.s32.totalorder %s106, 0
      %p568 = por %p566, %p567
      %s570 = sadd.s32 %s569, 1
      %p573 = scmp.eq.s32.totalorder %s100, 1
      %p574 = scmp.ne.s32.totalorder %s569, %s571
      %p575 = scmp.eq.s32.totalorder %s100, 0
      %p576 = por %p574, %p575
      %p577 = scmp.ne.s32.totalorder %s569, %s571
      %p578 = scmp.eq.s32.totalorder %s105, 1
      %p579 = por %p577, %p578
      %p580 = scmp.ne.s32.totalorder %s571, %s572
      %p581 = scmp.eq.s32.totalorder %s105, 0
      %p582 = por %p580, %p581
      %p583 = scmp.ne.s32.totalorder %s571, %s572
      %p584 = scmp.eq.s32.totalorder %s106, 1
      %p585 = por %p583, %p584
      %p587 = scmp.ne.s32.totalorder %s572, %s586
      %p588 = scmp.eq.s32.totalorder %s106, 0
      %p589 = por %p587, %p588
      %s591 = sadd.s32 %s590, 1
      %p594 = scmp.eq.s32.totalorder %s100, 1
      %p595 = scmp.ne.s32.totalorder %s590, %s592
      %p596 = scmp.eq.s32.totalorder %s100, 0
      %p597 = por %p595, %p596
      %p598 = scmp.ne.s32.totalorder %s590, %s592
      %p599 = scmp.eq.s32.totalorder %s105, 1
      %p600 = por %p598, %p599
      %p601 = scmp.ne.s32.totalorder %s592, %s593
      %p602 = scmp.eq.s32.totalorder %s105, 0
      %p603 = por %p601, %p602
      %p604 = scmp.ne.s32.totalorder %s592, %s593
      %p605 = scmp.eq.s32.totalorder %s106, 1
      %p606 = por %p604, %p605
      %p608 = scmp.ne.s32.totalorder %s593, %s607
      %p609 = scmp.eq.s32.totalorder %s106, 0
      %p610 = por %p608, %p609
      %s612 = sadd.s32 %s611, 1
      %p615 = scmp.eq.s32.totalorder %s100, 1
      %p616 = scmp.ne.s32.totalorder %s611, %s613
      %p617 = scmp.eq.s32.totalorder %s100, 0
      %p618 = por %p616, %p617
      %p619 = scmp.ne.s32.totalorder %s611, %s613
      %p620 = scmp.eq.s32.totalorder %s105, 1
      %p621 = por %p619, %p620
      %p622 = scmp.ne.s32.totalorder %s613, %s614
      %p623 = scmp.eq.s32.totalorder %s105, 0
      %p624 = por %p622, %p623
      %p625 = scmp.ne.s32.totalorder %s613, %s614
      %p626 = scmp.eq.s32.totalorder %s106, 1
      %p627 = por %p625, %p626
      %p629 = scmp.ne.s32.totalorder %s614, %s628
      %p630 = scmp.eq.s32.totalorder %s106, 0
      %p631 = por %p629, %p630
      %s633 = sadd.s32 %s632, 1
      %p636 = scmp.eq.s32.totalorder %s100, 1
      %p637 = scmp.ne.s32.totalorder %s632, %s634
      %p638 = scmp.eq.s32.totalorder %s100, 0
      %p639 = por %p637, %p638
      %p640 = scmp.ne.s32.totalorder %s632, %s634
      %p641 = scmp.eq.s32.totalorder %s105, 1
      %p642 = por %p640, %p641
      %p643 = scmp.ne.s32.totalorder %s634, %s635
      %p644 = scmp.eq.s32.totalorder %s105, 0
      %p645 = por %p643, %p644
      %p646 = scmp.ne.s32.totalorder %s634, %s635
      %p647 = scmp.eq.s32.totalorder %s106, 1
      %p648 = por %p646, %p647
      %p650 = scmp.ne.s32.totalorder %s635, %s649
      %p651 = scmp.eq.s32.totalorder %s106, 0
      %p652 = por %p650, %p651
      %s654 = sadd.s32 %s653, 1
      %p657 = scmp.eq.s32.totalorder %s100, 1
      %p658 = scmp.ne.s32.totalorder %s653, %s655
      %p659 = scmp.eq.s32.totalorder %s100, 0
      %p660 = por %p658, %p659
      %p661 = scmp.ne.s32.totalorder %s653, %s655
      %p662 = scmp.eq.s32.totalorder %s105, 1
      %p663 = por %p661, %p662
      %p664 = scmp.ne.s32.totalorder %s655, %s656
      %p665 = scmp.eq.s32.totalorder %s105, 0
      %p666 = por %p664, %p665
      %p667 = scmp.ne.s32.totalorder %s655, %s656
      %p668 = scmp.eq.s32.totalorder %s106, 1
      %p669 = por %p667, %p668
      %p671 = scmp.ne.s32.totalorder %s656, %s670
      %p672 = scmp.eq.s32.totalorder %s106, 0
      %p673 = por %p671, %p672
      %s675 = sadd.s32 %s674, 1
      %p678 = scmp.eq.s32.totalorder %s100, 1
      %p679 = scmp.ne.s32.totalorder %s674, %s676
      %p680 = scmp.eq.s32.totalorder %s100, 0
      %p681 = por %p679, %p680
      %p682 = scmp.ne.s32.totalorder %s674, %s676
      %p683 = scmp.eq.s32.totalorder %s105, 1
      %p684 = por %p682, %p683
      %p685 = scmp.ne.s32.totalorder %s676, %s677
      %p686 = scmp.eq.s32.totalorder %s105, 0
      %p687 = por %p685, %p686
      %p688 = scmp.ne.s32.totalorder %s676, %s677
      %p689 = scmp.eq.s32.totalorder %s106, 1
      %p690 = por %p688, %p689
      %p692 = scmp.ne.s32.totalorder %s677, %s691
      %p693 = scmp.eq.s32.totalorder %s106, 0
      %p694 = por %p692, %p693
      %s696 = sadd.s32 %s695, 1
      %p699 = scmp.eq.s32.totalorder %s100, 1
      %p700 = scmp.ne.s32.totalorder %s695, %s697
      %p701 = scmp.eq.s32.totalorder %s100, 0
      %p702 = por %p700, %p701
      %p703 = scmp.ne.s32.totalorder %s695, %s697
      %p704 = scmp.eq.s32.totalorder %s105, 1
      %p705 = por %p703, %p704
      %p706 = scmp.ne.s32.totalorder %s697, %s698
      %p707 = scmp.eq.s32.totalorder %s105, 0
      %p708 = por %p706, %p707
      %p709 = scmp.ne.s32.totalorder %s697, %s698
      %p710 = scmp.eq.s32.totalorder %s106, 1
      %p711 = por %p709, %p710
      %p713 = scmp.ne.s32.totalorder %s698, %s712
      %p714 = scmp.eq.s32.totalorder %s106, 0
      %p715 = por %p713, %p714
      %s717 = sadd.s32 %s716, 1
      %p720 = scmp.eq.s32.totalorder %s100, 1
      %p721 = scmp.ne.s32.totalorder %s716, %s718
      %p722 = scmp.eq.s32.totalorder %s100, 0
      %p723 = por %p721, %p722
      %p724 = scmp.ne.s32.totalorder %s716, %s718
      %p725 = scmp.eq.s32.totalorder %s105, 1
      %p726 = por %p724, %p725
      %p727 = scmp.ne.s32.totalorder %s718, %s719
      %p728 = scmp.eq.s32.totalorder %s105, 0
      %p729 = por %p727, %p728
      %p730 = scmp.ne.s32.totalorder %s718, %s719
      %p731 = scmp.eq.s32.totalorder %s106, 1
      %p732 = por %p730, %p731
      %p734 = scmp.ne.s32.totalorder %s719, %s733
      %p735 = scmp.eq.s32.totalorder %s106, 0
      %p736 = por %p734, %p735
      %s738 = sadd.s32 %s737, 1
      %p741 = scmp.eq.s32.totalorder %s100, 1
      %p742 = scmp.ne.s32.totalorder %s737, %s739
      %p743 = scmp.eq.s32.totalorder %s100, 0
      %p744 = por %p742, %p743
      %p745 = scmp.ne.s32.totalorder %s737, %s739
      %p746 = scmp.eq.s32.totalorder %s105, 1
      %p747 = por %p745, %p746
      %p748 = scmp.ne.s32.totalorder %s739, %s740
      %p749 = scmp.eq.s32.totalorder %s105, 0
      %p750 = por %p748, %p749
      %p751 = scmp.ne.s32.totalorder %s739, %s740
      %p752 = scmp.eq.s32.totalorder %s106, 1
      %p753 = por %p751, %p752
      %p755 = scmp.ne.s32.totalorder %s740, %s754
      %p756 = scmp.eq.s32.totalorder %s106, 0
      %p757 = por %p755, %p756
      %s759 = sadd.s32 %s758, 1
      %p762 = scmp.eq.s32.totalorder %s100, 1
      %p763 = scmp.ne.s32.totalorder %s758, %s760
      %p764 = scmp.eq.s32.totalorder %s100, 0
      %p765 = por %p763, %p764
      %p766 = scmp.ne.s32.totalorder %s758, %s760
      %p767 = scmp.eq.s32.totalorder %s105, 1
      %p768 = por %p766, %p767
      %p769 = scmp.ne.s32.totalorder %s760, %s761
      %p770 = scmp.eq.s32.totalorder %s105, 0
      %p771 = por %p769, %p770
      %p772 = scmp.ne.s32.totalorder %s760, %s761
      %p773 = scmp.eq.s32.totalorder %s106, 1
      %p774 = por %p772, %p773
      %p776 = scmp.ne.s32.totalorder %s761, %s775
      %p777 = scmp.eq.s32.totalorder %s106, 0
      %p778 = por %p776, %p777
      %s779 = ssub.s32 %s100, %s107
      %p780 = scmp.eq.s32.totalorder %s779, 0
      %s782 = sadd.s32 %s781, 1
      %s783 = scalar_select %p780, %s781, %s782
      %p786 = pneg %p780
      %p787 = scmp.eq.s32.totalorder %s100, 1
      %p788 = por %p786, %p787
      %p789 = scmp.ne.s32.totalorder %s781, %s784
      %p790 = scmp.eq.s32.totalorder %s100, 0
      %p791 = por %p789, %p790
      %p792 = scmp.ne.s32.totalorder %s781, %s784
      %p793 = scmp.eq.s32.totalorder %s105, 1
      %p794 = por %p792, %p793
      %p795 = scmp.ne.s32.totalorder %s784, %s785
      %p796 = scmp.eq.s32.totalorder %s105, 0
      %p797 = por %p795, %p796
      %p798 = scmp.ne.s32.totalorder %s784, %s785
      %p799 = scmp.eq.s32.totalorder %s106, 1
      %p800 = por %p798, %p799
      %p802 = scmp.ne.s32.totalorder %s785, %s801
      %p803 = scmp.eq.s32.totalorder %s106, 0
      %p804 = por %p802, %p803
      %s805 = ssub.s32 %s100, %s107
      %p806 = scmp.eq.s32.totalorder %s805, 0
      %s808 = sadd.s32 %s807, 1
      %s809 = scalar_select %p806, %s807, %s808
      %p812 = pneg %p806
      %p813 = scmp.eq.s32.totalorder %s100, 1
      %p814 = por %p812, %p813
      %p815 = scmp.ne.s32.totalorder %s807, %s810
      %p816 = scmp.eq.s32.totalorder %s100, 0
      %p817 = por %p815, %p816
      %p818 = scmp.ne.s32.totalorder %s807, %s810
      %p819 = scmp.eq.s32.totalorder %s105, 1
      %p820 = por %p818, %p819
      %p821 = scmp.ne.s32.totalorder %s810, %s811
      %p822 = scmp.eq.s32.totalorder %s105, 0
      %p823 = por %p821, %p822
      %p824 = scmp.ne.s32.totalorder %s810, %s811
      %p825 = scmp.eq.s32.totalorder %s106, 1
      %p826 = por %p824, %p825
      %p828 = scmp.ne.s32.totalorder %s811, %s827
      %p829 = scmp.eq.s32.totalorder %s106, 0
      %p830 = por %p828, %p829
      %p831 = scmp.le.s32.totalorder 1, %s100
      %p832 = scmp.lt.s32.totalorder %s100, 3
      %p833 = pnand %p831, %p832
      %p834 = pneg %p833
      // Predicated region
      $region9: #{transformer_decoder_forward.2} parent=5 // pred_check
        _
      $region10: #{transformer_decoder_forward.2} parent=5 // pred_check_branch
        %836 = sbr.rel (%p833) target = $region12
      $region11: #{transformer_decoder_forward.2} parent=5 // pred_region
        %s837 = ssub.s32 %s100, 1
        // Predicated region
        $region13: #{transformer_decoder_forward.2} parent=11 // pred_check
          %p838 = pneg %p225
        $region14: #{transformer_decoder_forward.2} parent=11 // pred_check_branch
          %840 = sbr.rel (%p838) target = $region16
        $region15: #{transformer_decoder_forward.2} parent=11 // pred_region
          %s842 = ssub.s32 128, 128
          %843 = vsyncadd [#allocation9], %s842
          %s845 = sshll.u32 [#allocation10], 4
          %s846 = int_to_ptr.vmem [resolvable:$true] %s845
          %848 = dma.hbm_to_vmem [thread:$0]  %s9, 128, %s846, [#allocation9]
        $region16: #{transformer_decoder_forward.2} parent=11 // pred_fallthru
          _
        // Predicated region
        $region17: #{transformer_decoder_forward.2} parent=11 // pred_check
          %p849 = pneg %p246
        $region18: #{transformer_decoder_forward.2} parent=11 // pred_check_branch
          %851 = sbr.rel (%p849) target = $region20
        $region19: #{transformer_decoder_forward.2} parent=11 // pred_region
          %s853 = ssub.s32 512, 512
          %854 = vsyncadd [#allocation12], %s853
          %s855 = sshll.u32 [#allocation11], 4
          %s856 = int_to_ptr.vmem [resolvable:$true] %s855
          %861 = dma.hbm_to_vmem [thread:$0]  %s11, 512, %s856, [#allocation12], 128, 128, 8
        $region20: #{transformer_decoder_forward.2} parent=11 // pred_fallthru
          _
        // Predicated region
        $region21: #{transformer_decoder_forward.2} parent=11 // pred_check
          %p862 = pneg %p267
        $region22: #{transformer_decoder_forward.2} parent=11 // pred_check_branch
          %864 = sbr.rel (%p862) target = $region24
        $region23: #{transformer_decoder_forward.2} parent=11 // pred_region
          %s866 = ssub.s32 16, 16
          %867 = vsyncadd [#allocation12], %s866
          %s869 = sshll.u32 [#allocation13], 4
          %s870 = int_to_ptr.vmem [resolvable:$true] %s869
          %872 = dma.hbm_to_vmem [thread:$0]  %s13, 16, %s870, [#allocation12]
        $region24: #{transformer_decoder_forward.2} parent=11 // pred_fallthru
          _
        // Predicated region
        $region25: #{transformer_decoder_forward.2} parent=11 // pred_check
          %p873 = pneg %p288
        $region26: #{transformer_decoder_forward.2} parent=11 // pred_check_branch
          %875 = sbr.rel (%p873) target = $region28
        $region27: #{transformer_decoder_forward.2} parent=11 // pred_region
          %s877 = ssub.s32 512, 512
          %878 = vsyncadd [#allocation15], %s877
          %s879 = sshll.u32 [#allocation14], 4
          %s880 = int_to_ptr.vmem [resolvable:$true] %s879
          %885 = dma.hbm_to_vmem [thread:$0]  %s15, 512, %s880, [#allocation15], 128, 128, 8
        $region28: #{transformer_decoder_forward.2} parent=11 // pred_fallthru
          _
        // Predicated region
        $region29: #{transformer_decoder_forward.2} parent=11 // pred_check
          %p886 = pneg %p309
        $region30: #{transformer_decoder_forward.2} parent=11 // pred_check_branch
          %888 = sbr.rel (%p886) target = $region32
        $region31: #{transformer_decoder_forward.2} parent=11 // pred_region
          %s890 = ssub.s32 16, 16
          %891 = vsyncadd [#allocation15], %s890
          %s893 = sshll.u32 [#allocation16], 4
          %s894 = int_to_ptr.vmem [resolvable:$true] %s893
          %896 = dma.hbm_to_vmem [thread:$0]  %s17, 16, %s894, [#allocation15]
        $region32: #{transformer_decoder_forward.2} parent=11 // pred_fallthru
          _
        // Predicated region
        $region33: #{transformer_decoder_forward.2} parent=11 // pred_check
          %p897 = pneg %p330
        $region34: #{transformer_decoder_forward.2} parent=11 // pred_check_branch
          %899 = sbr.rel (%p897) target = $region36
        $region35: #{transformer_decoder_forward.2} parent=11 // pred_region
          %s901 = ssub.s32 512, 512
          %902 = vsyncadd [#allocation18], %s901
          %s903 = sshll.u32 [#allocation17], 4
          %s904 = int_to_ptr.vmem [resolvable:$true] %s903
          %909 = dma.hbm_to_vmem [thread:$0]  %s19, 512, %s904, [#allocation18], 128, 128, 8
        $region36: #{transformer_decoder_forward.2} parent=11 // pred_fallthru
          _
        // Predicated region
        $region37: #{transformer_decoder_forward.2} parent=11 // pred_check
          %p910 = pneg %p351
        $region38: #{transformer_decoder_forward.2} parent=11 // pred_check_branch
          %912 = sbr.rel (%p910) target = $region40
        $region39: #{transformer_decoder_forward.2} parent=11 // pred_region
          %s914 = ssub.s32 16, 16
          %915 = vsyncadd [#allocation18], %s914
          %s917 = sshll.u32 [#allocation19], 4
          %s918 = int_to_ptr.vmem [resolvable:$true] %s917
          %920 = dma.hbm_to_vmem [thread:$0]  %s21, 16, %s918, [#allocation18]
        $region40: #{transformer_decoder_forward.2} parent=11 // pred_fallthru
          _
        // Predicated region
        $region41: #{transformer_decoder_forward.2} parent=11 // pred_check
          %p921 = pneg %p372
        $region42: #{transformer_decoder_forward.2} parent=11 // pred_check_branch
          %923 = sbr.rel (%p921) target = $region44
        $region43: #{transformer_decoder_forward.2} parent=11 // pred_region
          %s925 = ssub.s32 16, 16
          %926 = vsyncadd [#allocation21], %s925
          %s928 = sshll.u32 [#allocation20], 4
          %s929 = int_to_ptr.vmem [resolvable:$true] %s928
          %931 = dma.hbm_to_vmem [thread:$0]  %s23, 16, %s929, [#allocation21]
        $region44: #{transformer_decoder_forward.2} parent=11 // pred_fallthru
          _
        // Predicated region
        $region45: #{transformer_decoder_forward.2} parent=11 // pred_check
          %p932 = pneg %p393
        $region46: #{transformer_decoder_forward.2} parent=11 // pred_check_branch
          %934 = sbr.rel (%p932) target = $region48
        $region47: #{transformer_decoder_forward.2} parent=11 // pred_region
          %s936 = ssub.s32 16, 16
          %937 = vsyncadd [#allocation21], %s936
          %s939 = sshll.u32 [#allocation22], 4
          %s940 = int_to_ptr.vmem [resolvable:$true] %s939
          %942 = dma.hbm_to_vmem [thread:$0]  %s25, 16, %s940, [#allocation21]
        $region48: #{transformer_decoder_forward.2} parent=11 // pred_fallthru
          _
        // Predicated region
        $region49: #{transformer_decoder_forward.2} parent=11 // pred_check
          %p943 = pneg %p414
        $region50: #{transformer_decoder_forward.2} parent=11 // pred_check_branch
          %945 = sbr.rel (%p943) target = $region52
        $region51: #{transformer_decoder_forward.2} parent=11 // pred_region
          %s947 = ssub.s32 512, 512
          %948 = vsyncadd [#allocation24], %s947
          %s949 = sshll.u32 [#allocation23], 4
          %s950 = int_to_ptr.vmem [resolvable:$true] %s949
          %955 = dma.hbm_to_vmem [thread:$0]  %s27, 512, %s950, [#allocation24], 128, 128, 8
        $region52: #{transformer_decoder_forward.2} parent=11 // pred_fallthru
          _
        // Predicated region
        $region53: #{transformer_decoder_forward.2} parent=11 // pred_check
          %p956 = pneg %p435
        $region54: #{transformer_decoder_forward.2} parent=11 // pred_check_branch
          %958 = sbr.rel (%p956) target = $region56
        $region55: #{transformer_decoder_forward.2} parent=11 // pred_region
          %s960 = ssub.s32 16, 16
          %961 = vsyncadd [#allocation24], %s960
          %s963 = sshll.u32 [#allocation25], 4
          %s964 = int_to_ptr.vmem [resolvable:$true] %s963
          %966 = dma.hbm_to_vmem [thread:$0]  %s29, 16, %s964, [#allocation24]
        $region56: #{transformer_decoder_forward.2} parent=11 // pred_fallthru
          _
        // Predicated region
        $region57: #{transformer_decoder_forward.2} parent=11 // pred_check
          %p967 = pneg %p456
        $region58: #{transformer_decoder_forward.2} parent=11 // pred_check_branch
          %969 = sbr.rel (%p967) target = $region60
        $region59: #{transformer_decoder_forward.2} parent=11 // pred_region
          %s971 = ssub.s32 512, 512
          %972 = vsyncadd [#allocation27], %s971
          %s973 = sshll.u32 [#allocation26], 4
          %s974 = int_to_ptr.vmem [resolvable:$true] %s973
          %979 = dma.hbm_to_vmem [thread:$0]  %s31, 512, %s974, [#allocation27], 128, 128, 8
        $region60: #{transformer_decoder_forward.2} parent=11 // pred_fallthru
          _
        // Predicated region
        $region61: #{transformer_decoder_forward.2} parent=11 // pred_check
          %p980 = pneg %p477
        $region62: #{transformer_decoder_forward.2} parent=11 // pred_check_branch
          %982 = sbr.rel (%p980) target = $region64
        $region63: #{transformer_decoder_forward.2} parent=11 // pred_region
          %s984 = ssub.s32 16, 16
          %985 = vsyncadd [#allocation27], %s984
          %s987 = sshll.u32 [#allocation28], 4
          %s988 = int_to_ptr.vmem [resolvable:$true] %s987
          %990 = dma.hbm_to_vmem [thread:$0]  %s33, 16, %s988, [#allocation27]
        $region64: #{transformer_decoder_forward.2} parent=11 // pred_fallthru
          _
        // Predicated region
        $region65: #{transformer_decoder_forward.2} parent=11 // pred_check
          %p991 = pneg %p498
        $region66: #{transformer_decoder_forward.2} parent=11 // pred_check_branch
          %993 = sbr.rel (%p991) target = $region68
        $region67: #{transformer_decoder_forward.2} parent=11 // pred_region
          %s995 = ssub.s32 512, 512
          %996 = vsyncadd [#allocation30], %s995
          %s997 = sshll.u32 [#allocation29], 4
          %s998 = int_to_ptr.vmem [resolvable:$true] %s997
          %1003 = dma.hbm_to_vmem [thread:$0]  %s35, 512, %s998, [#allocation30], 128, 128, 8
        $region68: #{transformer_decoder_forward.2} parent=11 // pred_fallthru
          _
        // Predicated region
        $region69: #{transformer_decoder_forward.2} parent=11 // pred_check
          %p1004 = pneg %p519
        $region70: #{transformer_decoder_forward.2} parent=11 // pred_check_branch
          %1006 = sbr.rel (%p1004) target = $region72
        $region71: #{transformer_decoder_forward.2} parent=11 // pred_region
          %s1008 = ssub.s32 16, 16
          %1009 = vsyncadd [#allocation30], %s1008
          %s1011 = sshll.u32 [#allocation31], 4
          %s1012 = int_to_ptr.vmem [resolvable:$true] %s1011
          %1014 = dma.hbm_to_vmem [thread:$0]  %s37, 16, %s1012, [#allocation30]
        $region72: #{transformer_decoder_forward.2} parent=11 // pred_fallthru
          _
        // Predicated region
        $region73: #{transformer_decoder_forward.2} parent=11 // pred_check
          %p1015 = pneg %p540
        $region74: #{transformer_decoder_forward.2} parent=11 // pred_check_branch
          %1017 = sbr.rel (%p1015) target = $region76
        $region75: #{transformer_decoder_forward.2} parent=11 // pred_region
          %s1019 = ssub.s32 512, 512
          %1020 = vsyncadd [#allocation33], %s1019
          %s1021 = sshll.u32 [#allocation32], 4
          %s1022 = int_to_ptr.vmem [resolvable:$true] %s1021
          %1027 = dma.hbm_to_vmem [thread:$0]  %s39, 512, %s1022, [#allocation33], 128, 128, 8
        $region76: #{transformer_decoder_forward.2} parent=11 // pred_fallthru
          _
        // Predicated region
        $region77: #{transformer_decoder_forward.2} parent=11 // pred_check
          %p1028 = pneg %p561
        $region78: #{transformer_decoder_forward.2} parent=11 // pred_check_branch
          %1030 = sbr.rel (%p1028) target = $region80
        $region79: #{transformer_decoder_forward.2} parent=11 // pred_region
          %s1032 = ssub.s32 16, 16
          %1033 = vsyncadd [#allocation33], %s1032
          %s1035 = sshll.u32 [#allocation34], 4
          %s1036 = int_to_ptr.vmem [resolvable:$true] %s1035
          %1038 = dma.hbm_to_vmem [thread:$0]  %s41, 16, %s1036, [#allocation33]
        $region80: #{transformer_decoder_forward.2} parent=11 // pred_fallthru
          _
        // Predicated region
        $region81: #{transformer_decoder_forward.2} parent=11 // pred_check
          %p1039 = pneg %p582
        $region82: #{transformer_decoder_forward.2} parent=11 // pred_check_branch
          %1041 = sbr.rel (%p1039) target = $region84
        $region83: #{transformer_decoder_forward.2} parent=11 // pred_region
          %s1043 = ssub.s32 16, 16
          %1044 = vsyncadd [#allocation36], %s1043
          %s1046 = sshll.u32 [#allocation35], 4
          %s1047 = int_to_ptr.vmem [resolvable:$true] %s1046
          %1049 = dma.hbm_to_vmem [thread:$0]  %s43, 16, %s1047, [#allocation36]
        $region84: #{transformer_decoder_forward.2} parent=11 // pred_fallthru
          _
        // Predicated region
        $region85: #{transformer_decoder_forward.2} parent=11 // pred_check
          %p1050 = pneg %p603
        $region86: #{transformer_decoder_forward.2} parent=11 // pred_check_branch
          %1052 = sbr.rel (%p1050) target = $region88
        $region87: #{transformer_decoder_forward.2} parent=11 // pred_region
          %s1054 = ssub.s32 16, 16
          %1055 = vsyncadd [#allocation36], %s1054
          %s1057 = sshll.u32 [#allocation37], 4
          %s1058 = int_to_ptr.vmem [resolvable:$true] %s1057
          %1060 = dma.hbm_to_vmem [thread:$0]  %s45, 16, %s1058, [#allocation36]
        $region88: #{transformer_decoder_forward.2} parent=11 // pred_fallthru
          _
        // Predicated region
        $region89: #{transformer_decoder_forward.2} parent=11 // pred_check
          %p1061 = pneg %p624
        $region90: #{transformer_decoder_forward.2} parent=11 // pred_check_branch
          %1063 = sbr.rel (%p1061) target = $region92
        $region91: #{transformer_decoder_forward.2} parent=11 // pred_region
          %s1065 = ssub.s32 512, 512
          %1066 = vsyncadd [#allocation39], %s1065
          %s1067 = sshll.u32 [#allocation38], 4
          %s1068 = int_to_ptr.vmem [resolvable:$true] %s1067
          %1073 = dma.hbm_to_vmem [thread:$0]  %s47, 512, %s1068, [#allocation39], 128, 128, 8
        $region92: #{transformer_decoder_forward.2} parent=11 // pred_fallthru
          _
        // Predicated region
        $region93: #{transformer_decoder_forward.2} parent=11 // pred_check
          %p1074 = pneg %p645
        $region94: #{transformer_decoder_forward.2} parent=11 // pred_check_branch
          %1076 = sbr.rel (%p1074) target = $region96
        $region95: #{transformer_decoder_forward.2} parent=11 // pred_region
          %s1078 = ssub.s32 16, 16
          %1079 = vsyncadd [#allocation39], %s1078
          %s1081 = sshll.u32 [#allocation40], 4
          %s1082 = int_to_ptr.vmem [resolvable:$true] %s1081
          %1084 = dma.hbm_to_vmem [thread:$0]  %s49, 16, %s1082, [#allocation39]
        $region96: #{transformer_decoder_forward.2} parent=11 // pred_fallthru
          _
        // Predicated region
        $region97: #{transformer_decoder_forward.2} parent=11 // pred_check
          %p1085 = pneg %p666
        $region98: #{transformer_decoder_forward.2} parent=11 // pred_check_branch
          %1087 = sbr.rel (%p1085) target = $region100
        $region99: #{transformer_decoder_forward.2} parent=11 // pred_region
          %s1089 = ssub.s32 1024, 1024
          %1090 = vsyncadd [#allocation42], %s1089
          %s1091 = sshll.u32 [#allocation41], 4
          %s1092 = int_to_ptr.vmem [resolvable:$true] %s1091
          %1097 = dma.hbm_to_vmem [thread:$0]  %s51, 1024, %s1092, [#allocation42], 128, 128, 8
        $region100: #{transformer_decoder_forward.2} parent=11 // pred_fallthru
          _
        // Predicated region
        $region101: #{transformer_decoder_forward.2} parent=11 // pred_check
          %p1098 = pneg %p687
        $region102: #{transformer_decoder_forward.2} parent=11 // pred_check_branch
          %1100 = sbr.rel (%p1098) target = $region104
        $region103: #{transformer_decoder_forward.2} parent=11 // pred_region
          %s1102 = ssub.s32 16, 16
          %1103 = vsyncadd [#allocation42], %s1102
          %s1105 = sshll.u32 [#allocation43], 4
          %s1106 = int_to_ptr.vmem [resolvable:$true] %s1105
          %1108 = dma.hbm_to_vmem [thread:$0]  %s53, 16, %s1106, [#allocation42]
        $region104: #{transformer_decoder_forward.2} parent=11 // pred_fallthru
          _
        // Predicated region
        $region105: #{transformer_decoder_forward.2} parent=11 // pred_check
          %p1109 = pneg %p708
        $region106: #{transformer_decoder_forward.2} parent=11 // pred_check_branch
          %1111 = sbr.rel (%p1109) target = $region108
        $region107: #{transformer_decoder_forward.2} parent=11 // pred_region
          %s1113 = ssub.s32 16, 16
          %1114 = vsyncadd [#allocation45], %s1113
          %s1116 = sshll.u32 [#allocation44], 4
          %s1117 = int_to_ptr.vmem [resolvable:$true] %s1116
          %1119 = dma.hbm_to_vmem [thread:$0]  %s55, 16, %s1117, [#allocation45]
        $region108: #{transformer_decoder_forward.2} parent=11 // pred_fallthru
          _
        // Predicated region
        $region109: #{transformer_decoder_forward.2} parent=11 // pred_check
          %p1120 = pneg %p729
        $region110: #{transformer_decoder_forward.2} parent=11 // pred_check_branch
          %1122 = sbr.rel (%p1120) target = $region112
        $region111: #{transformer_decoder_forward.2} parent=11 // pred_region
          %s1124 = ssub.s32 16, 16
          %1125 = vsyncadd [#allocation45], %s1124
          %s1127 = sshll.u32 [#allocation46], 4
          %s1128 = int_to_ptr.vmem [resolvable:$true] %s1127
          %1130 = dma.hbm_to_vmem [thread:$0]  %s57, 16, %s1128, [#allocation45]
        $region112: #{transformer_decoder_forward.2} parent=11 // pred_fallthru
          _
        // Predicated region
        $region113: #{transformer_decoder_forward.2} parent=11 // pred_check
          %p1131 = pneg %p750
        $region114: #{transformer_decoder_forward.2} parent=11 // pred_check_branch
          %1133 = sbr.rel (%p1131) target = $region116
        $region115: #{transformer_decoder_forward.2} parent=11 // pred_region
          %s1135 = ssub.s32 16, 16
          %1136 = vsyncadd [#allocation48], %s1135
          %s1138 = sshll.u32 [#allocation47], 4
          %s1139 = int_to_ptr.vmem [resolvable:$true] %s1138
          %1141 = dma.hbm_to_vmem [thread:$0]  %s59, 16, %s1139, [#allocation48]
        $region116: #{transformer_decoder_forward.2} parent=11 // pred_fallthru
          _
        // Predicated region
        $region117: #{transformer_decoder_forward.2} parent=11 // pred_check
          %p1142 = pneg %p771
        $region118: #{transformer_decoder_forward.2} parent=11 // pred_check_branch
          %1144 = sbr.rel (%p1142) target = $region120
        $region119: #{transformer_decoder_forward.2} parent=11 // pred_region
          %s1146 = ssub.s32 16, 16
          %1147 = vsyncadd [#allocation48], %s1146
          %s1149 = sshll.u32 [#allocation49], 4
          %s1150 = int_to_ptr.vmem [resolvable:$true] %s1149
          %1152 = dma.hbm_to_vmem [thread:$0]  %s61, 16, %s1150, [#allocation48]
        $region120: #{transformer_decoder_forward.2} parent=11 // pred_fallthru
          _
      $region12: #{transformer_decoder_forward.2} parent=5 // pred_fallthru
        _
      %p1153 = scmp.lt.s32.totalorder %s100, 2
      // Predicated region
      $region121: #{transformer_decoder_forward.2} parent=5 // pred_check
        %p1154 = pneg %p1153
      $region122: #{transformer_decoder_forward.2} parent=5 // pred_check_branch
        %1156 = sbr.rel (%p1154) target = $region124
      $region123: #{transformer_decoder_forward.2} parent=5 // pred_region
        // Predicated region
        $region125: #{transformer_decoder_forward.2} parent=123 // pred_check
          %p1157 = pneg %p120
        $region126: #{transformer_decoder_forward.2} parent=123 // pred_check_branch
          %1159 = sbr.rel (%p1157) target = $region128
        $region127: #{transformer_decoder_forward.2} parent=123 // pred_region
          %s1160 = sand.u32 %s110, 1
          %s1161 = scalar_lea.sflag [#allocation3], %s1160
          %s1162 = sand.u32 %s110, 1
          %s1163 = smul.addr %s1162, 8
          %s1164 = scalar_lea.vmem [#allocation2], %s1163
          %s1166 = ssub.s32 128, 128
          %1167 = vsyncadd %s1161, %s1166
          %s1168 = smul.addr %s100, 128
          %s1169 = scalar_lea.hbm %s1, %s1168
          %s1171 = sshll.u32 %s1164, 4
          %s1172 = int_to_ptr.vmem [resolvable:$true] %s1171
          %1174 = dma.hbm_to_vmem [thread:$0]  %s1169, 128, %s1172, %s1161
        $region128: #{transformer_decoder_forward.2} parent=123 // pred_fallthru
          _
        // Predicated region
        $region129: #{transformer_decoder_forward.2} parent=123 // pred_check
          %p1175 = pneg %p146
        $region130: #{transformer_decoder_forward.2} parent=123 // pred_check_branch
          %1177 = sbr.rel (%p1175) target = $region132
        $region131: #{transformer_decoder_forward.2} parent=123 // pred_region
          %s1178 = sand.u32 %s100, 1
          %s1179 = scalar_lea.sflag [#allocation6], %s1178
          %s1180 = sand.u32 %s136, 1
          %s1181 = smul.addr %s1180, 8
          %s1182 = scalar_lea.vmem [#allocation5], %s1181
          %s1184 = ssub.s32 128, 128
          %1185 = vsyncadd %s1179, %s1184
          %s1186 = smul.addr %s100, 128
          %s1187 = scalar_lea.hbm %s3, %s1186
          %s1189 = sshll.u32 %s1182, 4
          %s1190 = int_to_ptr.vmem [resolvable:$true] %s1189
          %1192 = dma.hbm_to_vmem [thread:$0]  %s1187, 128, %s1190, %s1179
        $region132: #{transformer_decoder_forward.2} parent=123 // pred_fallthru
          _
        // Predicated region
        $region133: #{transformer_decoder_forward.2} parent=123 // pred_check
          %p1193 = pneg %p172
        $region134: #{transformer_decoder_forward.2} parent=123 // pred_check_branch
          %1195 = sbr.rel (%p1193) target = $region136
        $region135: #{transformer_decoder_forward.2} parent=123 // pred_region
          %s1196 = sand.u32 %s100, 1
          %s1197 = scalar_lea.sflag [#allocation6], %s1196
          %s1198 = sand.u32 %s162, 1
          %s1199 = smul.addr %s1198, 16
          %s1200 = scalar_lea.vmem [#allocation7], %s1199
          %s1202 = ssub.s32 256, 256
          %1203 = vsyncadd %s1197, %s1202
          %s1204 = smul.addr %s100, 2
          %s1205 = smul.addr %s1204, 128
          %s1206 = scalar_lea.hbm %s5, %s1205
          %s1207 = sshll.u32 %s1200, 4
          %s1208 = int_to_ptr.vmem [resolvable:$true] %s1207
          %1213 = dma.hbm_to_vmem [thread:$0]  %s1206, 256, %s1208, %s1197, 128, 128, 8
        $region136: #{transformer_decoder_forward.2} parent=123 // pred_fallthru
          _
        // Predicated region
        $region137: #{transformer_decoder_forward.2} parent=123 // pred_check
          %p1214 = pneg %p198
        $region138: #{transformer_decoder_forward.2} parent=123 // pred_check_branch
          %1216 = sbr.rel (%p1214) target = $region140
        $region139: #{transformer_decoder_forward.2} parent=123 // pred_region
          %s1217 = sand.u32 %s100, 1
          %s1218 = scalar_lea.sflag [#allocation9], %s1217
          %s1219 = sand.u32 %s188, 1
          %s1220 = smul.addr %s1219, 16
          %s1221 = scalar_lea.vmem [#allocation8], %s1220
          %s1223 = ssub.s32 256, 256
          %1224 = vsyncadd %s1218, %s1223
          %s1225 = smul.addr %s100, 2
          %s1226 = smul.addr %s1225, 128
          %s1227 = scalar_lea.hbm %s7, %s1226
          %s1228 = sshll.u32 %s1221, 4
          %s1229 = int_to_ptr.vmem [resolvable:$true] %s1228
          %1234 = dma.hbm_to_vmem [thread:$0]  %s1227, 256, %s1229, %s1218, 128, 128, 8
        $region140: #{transformer_decoder_forward.2} parent=123 // pred_fallthru
          _
      $region124: #{transformer_decoder_forward.2} parent=5 // pred_fallthru
        _
      %p1235 = scmp.le.s32.totalorder 1, %s100
      %p1236 = scmp.lt.s32.totalorder %s100, 3
      %p1237 = pnand %p1235, %p1236
      %p1238 = pneg %p1237
      // Predicated region
      $region141: #{transformer_decoder_forward.2} parent=5 // pred_check
        _
      $region142: #{transformer_decoder_forward.2} parent=5 // pred_check_branch
        %1240 = sbr.rel (%p1237) target = $region144
      $region143: #{transformer_decoder_forward.2} parent=5 // pred_region
        %s1241 = ssub.s32 %s100, 1
        %s1242 = sand.u32 %s113, 1
        %s1243 = scalar_lea.sflag [#allocation3], %s1242
        %s1244 = sand.u32 %s113, 1
        %s1245 = smul.addr %s1244, 8
        %s1246 = scalar_lea.vmem [#allocation2], %s1245
        // Predicated region
        $region145: #{transformer_decoder_forward.2} parent=143 // pred_check
          %p1247 = pneg %p126
        $region146: #{transformer_decoder_forward.2} parent=143 // pred_check_branch
          %1249 = sbr.rel (%p1247) target = $region148
        $region147: #{transformer_decoder_forward.2} parent=143 // pred_region
          %1250 = dma.done %s1243, 128
        $region148: #{transformer_decoder_forward.2} parent=143 // pred_fallthru
          _
        %s1251 = sand.u32 %s105, 1
        %s1252 = scalar_lea.sflag [#allocation6], %s1251
        %s1253 = sand.u32 %s139, 1
        %s1254 = smul.addr %s1253, 8
        %s1255 = scalar_lea.vmem [#allocation5], %s1254
        // Predicated region
        $region149: #{transformer_decoder_forward.2} parent=143 // pred_check
          %p1256 = pneg %p152
        $region150: #{transformer_decoder_forward.2} parent=143 // pred_check_branch
          %1258 = sbr.rel (%p1256) target = $region152
        $region151: #{transformer_decoder_forward.2} parent=143 // pred_region
          %1259 = dma.done %s1252, 128
        $region152: #{transformer_decoder_forward.2} parent=143 // pred_fallthru
          _
        %s1260 = sand.u32 %s105, 1
        %s1261 = scalar_lea.sflag [#allocation6], %s1260
        %s1262 = sand.u32 %s165, 1
        %s1263 = smul.addr %s1262, 16
        %s1264 = scalar_lea.vmem [#allocation7], %s1263
        // Predicated region
        $region153: #{transformer_decoder_forward.2} parent=143 // pred_check
          %p1265 = pneg %p178
        $region154: #{transformer_decoder_forward.2} parent=143 // pred_check_branch
          %1267 = sbr.rel (%p1265) target = $region156
        $region155: #{transformer_decoder_forward.2} parent=143 // pred_region
          %1268 = dma.done %s1261, 256
        $region156: #{transformer_decoder_forward.2} parent=143 // pred_fallthru
          _
        %s1269 = sand.u32 %s105, 1
        %s1270 = scalar_lea.sflag [#allocation9], %s1269
        %s1271 = sand.u32 %s191, 1
        %s1272 = smul.addr %s1271, 16
        %s1273 = scalar_lea.vmem [#allocation8], %s1272
        // Predicated region
        $region157: #{transformer_decoder_forward.2} parent=143 // pred_check
          %p1274 = pneg %p204
        $region158: #{transformer_decoder_forward.2} parent=143 // pred_check_branch
          %1276 = sbr.rel (%p1274) target = $region160
        $region159: #{transformer_decoder_forward.2} parent=143 // pred_region
          %1277 = dma.done %s1270, 256
        $region160: #{transformer_decoder_forward.2} parent=143 // pred_fallthru
          _
        // Predicated region
        $region161: #{transformer_decoder_forward.2} parent=143 // pred_check
          %p1278 = pneg %p225
        $region162: #{transformer_decoder_forward.2} parent=143 // pred_check_branch
          %1280 = sbr.rel (%p1278) target = $region164
        $region163: #{transformer_decoder_forward.2} parent=143 // pred_region
          %1281 = dma.done [#allocation9], 128
        $region164: #{transformer_decoder_forward.2} parent=143 // pred_fallthru
          _
        // Predicated region
        $region165: #{transformer_decoder_forward.2} parent=143 // pred_check
          %p1282 = pneg %p246
        $region166: #{transformer_decoder_forward.2} parent=143 // pred_check_branch
          %1284 = sbr.rel (%p1282) target = $region168
        $region167: #{transformer_decoder_forward.2} parent=143 // pred_region
          %1285 = dma.done [#allocation12], 512
        $region168: #{transformer_decoder_forward.2} parent=143 // pred_fallthru
          _
        // Predicated region
        $region169: #{transformer_decoder_forward.2} parent=143 // pred_check
          %p1286 = pneg %p267
        $region170: #{transformer_decoder_forward.2} parent=143 // pred_check_branch
          %1288 = sbr.rel (%p1286) target = $region172
        $region171: #{transformer_decoder_forward.2} parent=143 // pred_region
          %1289 = dma.done [#allocation12], 16
        $region172: #{transformer_decoder_forward.2} parent=143 // pred_fallthru
          _
        // Predicated region
        $region173: #{transformer_decoder_forward.2} parent=143 // pred_check
          %p1290 = pneg %p288
        $region174: #{transformer_decoder_forward.2} parent=143 // pred_check_branch
          %1292 = sbr.rel (%p1290) target = $region176
        $region175: #{transformer_decoder_forward.2} parent=143 // pred_region
          %1293 = dma.done [#allocation15], 512
        $region176: #{transformer_decoder_forward.2} parent=143 // pred_fallthru
          _
        // Predicated region
        $region177: #{transformer_decoder_forward.2} parent=143 // pred_check
          %p1294 = pneg %p309
        $region178: #{transformer_decoder_forward.2} parent=143 // pred_check_branch
          %1296 = sbr.rel (%p1294) target = $region180
        $region179: #{transformer_decoder_forward.2} parent=143 // pred_region
          %1297 = dma.done [#allocation15], 16
        $region180: #{transformer_decoder_forward.2} parent=143 // pred_fallthru
          _
        // Predicated region
        $region181: #{transformer_decoder_forward.2} parent=143 // pred_check
          %p1298 = pneg %p330
        $region182: #{transformer_decoder_forward.2} parent=143 // pred_check_branch
          %1300 = sbr.rel (%p1298) target = $region184
        $region183: #{transformer_decoder_forward.2} parent=143 // pred_region
          %1301 = dma.done [#allocation18], 512
        $region184: #{transformer_decoder_forward.2} parent=143 // pred_fallthru
          _
        // Predicated region
        $region185: #{transformer_decoder_forward.2} parent=143 // pred_check
          %p1302 = pneg %p351
        $region186: #{transformer_decoder_forward.2} parent=143 // pred_check_branch
          %1304 = sbr.rel (%p1302) target = $region188
        $region187: #{transformer_decoder_forward.2} parent=143 // pred_region
          %1305 = dma.done [#allocation18], 16
        $region188: #{transformer_decoder_forward.2} parent=143 // pred_fallthru
          _
        // Predicated region
        $region189: #{transformer_decoder_forward.2} parent=143 // pred_check
          %p1306 = pneg %p372
        $region190: #{transformer_decoder_forward.2} parent=143 // pred_check_branch
          %1308 = sbr.rel (%p1306) target = $region192
        $region191: #{transformer_decoder_forward.2} parent=143 // pred_region
          %1309 = dma.done [#allocation21], 16
        $region192: #{transformer_decoder_forward.2} parent=143 // pred_fallthru
          _
        // Predicated region
        $region193: #{transformer_decoder_forward.2} parent=143 // pred_check
          %p1310 = pneg %p393
        $region194: #{transformer_decoder_forward.2} parent=143 // pred_check_branch
          %1312 = sbr.rel (%p1310) target = $region196
        $region195: #{transformer_decoder_forward.2} parent=143 // pred_region
          %1313 = dma.done [#allocation21], 16
        $region196: #{transformer_decoder_forward.2} parent=143 // pred_fallthru
          _
        // Predicated region
        $region197: #{transformer_decoder_forward.2} parent=143 // pred_check
          %p1314 = pneg %p414
        $region198: #{transformer_decoder_forward.2} parent=143 // pred_check_branch
          %1316 = sbr.rel (%p1314) target = $region200
        $region199: #{transformer_decoder_forward.2} parent=143 // pred_region
          %1317 = dma.done [#allocation24], 512
        $region200: #{transformer_decoder_forward.2} parent=143 // pred_fallthru
          _
        // Predicated region
        $region201: #{transformer_decoder_forward.2} parent=143 // pred_check
          %p1318 = pneg %p435
        $region202: #{transformer_decoder_forward.2} parent=143 // pred_check_branch
          %1320 = sbr.rel (%p1318) target = $region204
        $region203: #{transformer_decoder_forward.2} parent=143 // pred_region
          %1321 = dma.done [#allocation24], 16
        $region204: #{transformer_decoder_forward.2} parent=143 // pred_fallthru
          _
        // Predicated region
        $region205: #{transformer_decoder_forward.2} parent=143 // pred_check
          %p1322 = pneg %p456
        $region206: #{transformer_decoder_forward.2} parent=143 // pred_check_branch
          %1324 = sbr.rel (%p1322) target = $region208
        $region207: #{transformer_decoder_forward.2} parent=143 // pred_region
          %1325 = dma.done [#allocation27], 512
        $region208: #{transformer_decoder_forward.2} parent=143 // pred_fallthru
          _
        // Predicated region
        $region209: #{transformer_decoder_forward.2} parent=143 // pred_check
          %p1326 = pneg %p477
        $region210: #{transformer_decoder_forward.2} parent=143 // pred_check_branch
          %1328 = sbr.rel (%p1326) target = $region212
        $region211: #{transformer_decoder_forward.2} parent=143 // pred_region
          %1329 = dma.done [#allocation27], 16
        $region212: #{transformer_decoder_forward.2} parent=143 // pred_fallthru
          _
        // Predicated region
        $region213: #{transformer_decoder_forward.2} parent=143 // pred_check
          %p1330 = pneg %p498
        $region214: #{transformer_decoder_forward.2} parent=143 // pred_check_branch
          %1332 = sbr.rel (%p1330) target = $region216
        $region215: #{transformer_decoder_forward.2} parent=143 // pred_region
          %1333 = dma.done [#allocation30], 512
        $region216: #{transformer_decoder_forward.2} parent=143 // pred_fallthru
          _
        // Predicated region
        $region217: #{transformer_decoder_forward.2} parent=143 // pred_check
          %p1334 = pneg %p519
        $region218: #{transformer_decoder_forward.2} parent=143 // pred_check_branch
          %1336 = sbr.rel (%p1334) target = $region220
        $region219: #{transformer_decoder_forward.2} parent=143 // pred_region
          %1337 = dma.done [#allocation30], 16
        $region220: #{transformer_decoder_forward.2} parent=143 // pred_fallthru
          _
        // Predicated region
        $region221: #{transformer_decoder_forward.2} parent=143 // pred_check
          %p1338 = pneg %p540
        $region222: #{transformer_decoder_forward.2} parent=143 // pred_check_branch
          %1340 = sbr.rel (%p1338) target = $region224
        $region223: #{transformer_decoder_forward.2} parent=143 // pred_region
          %1341 = dma.done [#allocation33], 512
        $region224: #{transformer_decoder_forward.2} parent=143 // pred_fallthru
          _
        // Predicated region
        $region225: #{transformer_decoder_forward.2} parent=143 // pred_check
          %p1342 = pneg %p561
        $region226: #{transformer_decoder_forward.2} parent=143 // pred_check_branch
          %1344 = sbr.rel (%p1342) target = $region228
        $region227: #{transformer_decoder_forward.2} parent=143 // pred_region
          %1345 = dma.done [#allocation33], 16
        $region228: #{transformer_decoder_forward.2} parent=143 // pred_fallthru
          _
        // Predicated region
        $region229: #{transformer_decoder_forward.2} parent=143 // pred_check
          %p1346 = pneg %p582
        $region230: #{transformer_decoder_forward.2} parent=143 // pred_check_branch
          %1348 = sbr.rel (%p1346) target = $region232
        $region231: #{transformer_decoder_forward.2} parent=143 // pred_region
          %1349 = dma.done [#allocation36], 16
        $region232: #{transformer_decoder_forward.2} parent=143 // pred_fallthru
          _
        // Predicated region
        $region233: #{transformer_decoder_forward.2} parent=143 // pred_check
          %p1350 = pneg %p603
        $region234: #{transformer_decoder_forward.2} parent=143 // pred_check_branch
          %1352 = sbr.rel (%p1350) target = $region236
        $region235: #{transformer_decoder_forward.2} parent=143 // pred_region
          %1353 = dma.done [#allocation36], 16
        $region236: #{transformer_decoder_forward.2} parent=143 // pred_fallthru
          _
        // Predicated region
        $region237: #{transformer_decoder_forward.2} parent=143 // pred_check
          %p1354 = pneg %p624
        $region238: #{transformer_decoder_forward.2} parent=143 // pred_check_branch
          %1356 = sbr.rel (%p1354) target = $region240
        $region239: #{transformer_decoder_forward.2} parent=143 // pred_region
          %1357 = dma.done [#allocation39], 512
        $region240: #{transformer_decoder_forward.2} parent=143 // pred_fallthru
          _
        // Predicated region
        $region241: #{transformer_decoder_forward.2} parent=143 // pred_check
          %p1358 = pneg %p645
        $region242: #{transformer_decoder_forward.2} parent=143 // pred_check_branch
          %1360 = sbr.rel (%p1358) target = $region244
        $region243: #{transformer_decoder_forward.2} parent=143 // pred_region
          %1361 = dma.done [#allocation39], 16
        $region244: #{transformer_decoder_forward.2} parent=143 // pred_fallthru
          _
        // Predicated region
        $region245: #{transformer_decoder_forward.2} parent=143 // pred_check
          %p1362 = pneg %p666
        $region246: #{transformer_decoder_forward.2} parent=143 // pred_check_branch
          %1364 = sbr.rel (%p1362) target = $region248
        $region247: #{transformer_decoder_forward.2} parent=143 // pred_region
          %1365 = dma.done [#allocation42], 1024
        $region248: #{transformer_decoder_forward.2} parent=143 // pred_fallthru
          _
        // Predicated region
        $region249: #{transformer_decoder_forward.2} parent=143 // pred_check
          %p1366 = pneg %p687
        $region250: #{transformer_decoder_forward.2} parent=143 // pred_check_branch
          %1368 = sbr.rel (%p1366) target = $region252
        $region251: #{transformer_decoder_forward.2} parent=143 // pred_region
          %1369 = dma.done [#allocation42], 16
        $region252: #{transformer_decoder_forward.2} parent=143 // pred_fallthru
          _
        // Predicated region
        $region253: #{transformer_decoder_forward.2} parent=143 // pred_check
          %p1370 = pneg %p708
        $region254: #{transformer_decoder_forward.2} parent=143 // pred_check_branch
          %1372 = sbr.rel (%p1370) target = $region256
        $region255: #{transformer_decoder_forward.2} parent=143 // pred_region
          %1373 = dma.done [#allocation45], 16
        $region256: #{transformer_decoder_forward.2} parent=143 // pred_fallthru
          _
        // Predicated region
        $region257: #{transformer_decoder_forward.2} parent=143 // pred_check
          %p1374 = pneg %p729
        $region258: #{transformer_decoder_forward.2} parent=143 // pred_check_branch
          %1376 = sbr.rel (%p1374) target = $region260
        $region259: #{transformer_decoder_forward.2} parent=143 // pred_region
          %1377 = dma.done [#allocation45], 16
        $region260: #{transformer_decoder_forward.2} parent=143 // pred_fallthru
          _
        // Predicated region
        $region261: #{transformer_decoder_forward.2} parent=143 // pred_check
          %p1378 = pneg %p750
        $region262: #{transformer_decoder_forward.2} parent=143 // pred_check_branch
          %1380 = sbr.rel (%p1378) target = $region264
        $region263: #{transformer_decoder_forward.2} parent=143 // pred_region
          %1381 = dma.done [#allocation48], 16
        $region264: #{transformer_decoder_forward.2} parent=143 // pred_fallthru
          _
        // Predicated region
        $region265: #{transformer_decoder_forward.2} parent=143 // pred_check
          %p1382 = pneg %p771
        $region266: #{transformer_decoder_forward.2} parent=143 // pred_check_branch
          %1384 = sbr.rel (%p1382) target = $region268
        $region267: #{transformer_decoder_forward.2} parent=143 // pred_region
          %1385 = dma.done [#allocation48], 16
        $region268: #{transformer_decoder_forward.2} parent=143 // pred_fallthru
          _
        %s1386 = sand.u32 %s113, 1
        %s1387 = scalar_lea.sflag [#allocation3], %s1386
        %s1388 = sand.u32 %s113, 1
        %s1389 = smul.addr %s1388, 8
        %s1390 = scalar_lea.vmem [#allocation2], %s1389
        %p1391 = pneg %p126
        %p1392 = pneg %p123
        %s1393 = sand.u32 %s105, 1
        %s1394 = scalar_lea.sflag [#allocation6], %s1393
        %s1395 = sand.u32 %s139, 1
        %s1396 = smul.addr %s1395, 8
        %s1397 = scalar_lea.vmem [#allocation5], %s1396
        %p1398 = pneg %p152
        %p1399 = pneg %p149
        %s1400 = sand.u32 %s105, 1
        %s1401 = scalar_lea.sflag [#allocation6], %s1400
        %s1402 = sand.u32 %s165, 1
        %s1403 = smul.addr %s1402, 16
        %s1404 = scalar_lea.vmem [#allocation7], %s1403
        %p1405 = pneg %p178
        %p1406 = pneg %p175
        %s1407 = sand.u32 %s105, 1
        %s1408 = scalar_lea.sflag [#allocation9], %s1407
        %s1409 = sand.u32 %s191, 1
        %s1410 = smul.addr %s1409, 16
        %s1411 = scalar_lea.vmem [#allocation8], %s1410
        %p1412 = pneg %p204
        %p1413 = pneg %p201
        %p1414 = pneg %p225
        %p1415 = pneg %p222
        %p1416 = pneg %p246
        %p1417 = pneg %p243
        %p1418 = pneg %p267
        %p1419 = pneg %p264
        %p1420 = pneg %p288
        %p1421 = pneg %p285
        %p1422 = pneg %p309
        %p1423 = pneg %p306
        %p1424 = pneg %p330
        %p1425 = pneg %p327
        %p1426 = pneg %p351
        %p1427 = pneg %p348
        %p1428 = pneg %p372
        %p1429 = pneg %p369
        %p1430 = pneg %p393
        %p1431 = pneg %p390
        %p1432 = pneg %p414
        %p1433 = pneg %p411
        %p1434 = pneg %p435
        %p1435 = pneg %p432
        %p1436 = pneg %p456
        %p1437 = pneg %p453
        %p1438 = pneg %p477
        %p1439 = pneg %p474
        %p1440 = pneg %p498
        %p1441 = pneg %p495
        %p1442 = pneg %p519
        %p1443 = pneg %p516
        %p1444 = pneg %p540
        %p1445 = pneg %p537
        %p1446 = pneg %p561
        %p1447 = pneg %p558
        %p1448 = pneg %p582
        %p1449 = pneg %p579
        %p1450 = pneg %p603
        %p1451 = pneg %p600
        %p1452 = pneg %p624
        %p1453 = pneg %p621
        %p1454 = pneg %p645
        %p1455 = pneg %p642
        %p1456 = pneg %p666
        %p1457 = pneg %p663
        %p1458 = pneg %p687
        %p1459 = pneg %p684
        %p1460 = pneg %p708
        %p1461 = pneg %p705
        %p1462 = pneg %p729
        %p1463 = pneg %p726
        %p1464 = pneg %p750
        %p1465 = pneg %p747
        %p1466 = pneg %p771
        %p1467 = pneg %p768
        %p1468 = pneg %p797
        %p1469 = pneg %p794
        %s1470 = sand.u32 %s784, 1
        %s1471 = scalar_lea.sflag [#allocation4], %s1470
        %s1472 = sand.u32 %s784, 1
        %s1473 = smul.addr %s1472, 8
        %s1474 = scalar_lea.vmem [#allocation50], %s1473
        %p1475 = pneg %p823
        %p1476 = pneg %p820
        %s1477 = sand.u32 %s810, 1
        %s1478 = scalar_lea.sflag [#allocation52], %s1477
        %s1479 = sand.u32 %s810, 1
        %s1480 = smul.addr %s1479, 8
        %s1481 = scalar_lea.vmem [#allocation51], %s1480
        %v1482 = vld [vmem:[#allocation10] sm:$0xff]
        %v1483 = vld [vmem:[%s1246] sm:$0xff]
        %v1484 = vld [vmem:[%s1255] sm:$0xff]
        %v1485 = vadd.f32 %v1483, %v1484
        %v1486 = vld [vmem:[#allocation11] sm:$0xff]
        %v1487 = vld [vmem:[#allocation11 + $0x8] sm:$0xff]
        %v1488 = vld [vmem:[#allocation11 + $0x10] sm:$0xff]
        %v1489 = vld [vmem:[#allocation11 + $0x18] sm:$0xff]
        %v1490 = vld [vmem:[#allocation13] sm:$0x1]
        %v1492 = vlaneseq
        %v1493 = vshrl.u32 %v1492, 7
        %v1494 = vsub.s32 0, %v1493
        %v1495 = vrot.slane %v1490, %v1494
        %vm1497 = vcmask 261120
        %v1499 = vsel %vm1497, %v1485, 0
        %1501 = vmatprep.subr.mxu0 0.0
        %1502 = vmatpush1.msra.mxu0 %v1486
        %1503 = vmatprep.subr.mxu0 0.0
        %1504 = vmatpush1.msra.mxu0 %v1487
        %1505 = vmatprep.subr.mxu0 0.0
        %1506 = vmatpush1.msra.mxu0 %v1488
        %1507 = vmatprep.subr.mxu0 0.0
        %1508 = vmatpush1.msra.mxu0 %v1489
        %1509 = vmatprep.subr.mxu0 0.0
        %1510 = vmatpush1.msra.mxu0 0.0
        %1511 = vmatprep.subr.mxu0 0.0
        %1512 = vmatpush1.msra.mxu0 0.0
        %1513 = vmatprep.subr.mxu0 0.0
        %1514 = vmatpush1.msra.mxu0 0.0
        %1515 = vmatprep.subr.mxu0 0.0
        %1516 = vmatpush1.msra.mxu0 0.0
        %1517 = vmatprep.subr.mxu0 0.0
        %1518 = vmatpush1.msra.mxu0 0.0
        %1519 = vmatprep.subr.mxu0 0.0
        %1520 = vmatpush1.msra.mxu0 0.0
        %1521 = vmatprep.subr.mxu0 0.0
        %1522 = vmatpush1.msra.mxu0 0.0
        %1523 = vmatprep.subr.mxu0 0.0
        %1524 = vmatpush1.msra.mxu0 0.0
        %1525 = vmatprep.subr.mxu0 0.0
        %1526 = vmatpush1.msra.mxu0 0.0
        %1527 = vmatprep.subr.mxu0 0.0
        %1528 = vmatpush1.msra.mxu0 0.0
        %1529 = vmatprep.subr.mxu0 0.0
        %1530 = vmatpush1.msra.mxu0 0.0
        %1531 = vmatprep.subr.mxu0 0.0
        %1532 = vmatpush1.msra.mxu0 0.0
        %1533 = vmatprep.subr.mxu0 0.0
        %1534 = vmatpush1.msra.mxu0 0.0
        %1535 = vmatprep.subr.mxu0 0.0
        %1536 = vmatpush1.msra.mxu0 0.0
        %1537 = vmatprep.subr.mxu0 0.0
        %1538 = vmatpush1.msra.mxu0 0.0
        %1539 = vmatprep.subr.mxu0 0.0
        %1540 = vmatpush1.msra.mxu0 0.0
        %1541 = vmatprep.subr.mxu0 0.0
        %1542 = vmatpush1.msra.mxu0 0.0
        %1543 = vmatprep.subr.mxu0 0.0
        %1544 = vmatpush1.msra.mxu0 0.0
        %1545 = vmatprep.subr.mxu0 0.0
        %1546 = vmatpush1.msra.mxu0 0.0
        %1547 = vmatprep.subr.mxu0 0.0
        %1548 = vmatpush1.msra.mxu0 0.0
        %1549 = vmatprep.subr.mxu0 0.0
        %1550 = vmatpush1.msra.mxu0 0.0
        %1551 = vmatprep.subr.mxu0 0.0
        %1552 = vmatpush1.msra.mxu0 0.0
        %1553 = vmatprep.subr.mxu0 0.0
        %1554 = vmatpush1.msra.mxu0 0.0
        %1555 = vmatprep.subr.mxu0 0.0
        %1556 = vmatpush1.msra.mxu0 0.0
        %1557 = vmatprep.subr.mxu0 0.0
        %1558 = vmatpush1.msra.mxu0 0.0
        %1559 = vmatprep.subr.mxu0 0.0
        %1560 = vmatpush1.msra.mxu0 0.0
        %1561 = vmatprep.subr.mxu0 0.0
        %1562 = vmatpush1.msra.mxu0 0.0
        %1563 = vmatprep.subr.mxu0 0.0
        %1564 = vmatpush1.msra.mxu0 0.0
        %1565 = vmatprep.mubr.f32.mxu0 0.0
        %1566 = vmatmul.mubr.f32.gmra.mrb[0].mxu0 %v1499
        %v1567 = vpop.f32.mrb[0].mxu0
        %v1568 = vadd.f32 %v1495, %v1567
        %v1569 = vpop.f32.mrb[0].mxu0
        %1570 = vdwg.mxu0
        %v1571 = vld [vmem:[#allocation14] sm:$0xff]
        %v1572 = vld [vmem:[#allocation14 + $0x8] sm:$0xff]
        %v1573 = vld [vmem:[#allocation14 + $0x10] sm:$0xff]
        %v1574 = vld [vmem:[#allocation14 + $0x18] sm:$0xff]
        %v1575 = vld [vmem:[#allocation16] sm:$0x1]
        %v1577 = vlaneseq
        %v1578 = vshrl.u32 %v1577, 7
        %v1579 = vsub.s32 0, %v1578
        %v1580 = vrot.slane %v1575, %v1579
        %v1583 = vsel %vm1497, %v1483, 0
        %1585 = vmatprep.subr.mxu0 0.0
        %1586 = vmatpush1.msra.mxu0 %v1571
        %1587 = vmatprep.subr.mxu0 0.0
        %1588 = vmatpush1.msra.mxu0 %v1572
        %1589 = vmatprep.subr.mxu0 0.0
        %1590 = vmatpush1.msra.mxu0 %v1573
        %1591 = vmatprep.subr.mxu0 0.0
        %1592 = vmatpush1.msra.mxu0 %v1574
        %1593 = vmatprep.subr.mxu0 0.0
        %1594 = vmatpush1.msra.mxu0 0.0
        %1595 = vmatprep.subr.mxu0 0.0
        %1596 = vmatpush1.msra.mxu0 0.0
        %1597 = vmatprep.subr.mxu0 0.0
        %1598 = vmatpush1.msra.mxu0 0.0
        %1599 = vmatprep.subr.mxu0 0.0
        %1600 = vmatpush1.msra.mxu0 0.0
        %1601 = vmatprep.subr.mxu0 0.0
        %1602 = vmatpush1.msra.mxu0 0.0
        %1603 = vmatprep.subr.mxu0 0.0
        %1604 = vmatpush1.msra.mxu0 0.0
        %1605 = vmatprep.subr.mxu0 0.0
        %1606 = vmatpush1.msra.mxu0 0.0
        %1607 = vmatprep.subr.mxu0 0.0
        %1608 = vmatpush1.msra.mxu0 0.0
        %1609 = vmatprep.subr.mxu0 0.0
        %1610 = vmatpush1.msra.mxu0 0.0
        %1611 = vmatprep.subr.mxu0 0.0
        %1612 = vmatpush1.msra.mxu0 0.0
        %1613 = vmatprep.subr.mxu0 0.0
        %1614 = vmatpush1.msra.mxu0 0.0
        %1615 = vmatprep.subr.mxu0 0.0
        %1616 = vmatpush1.msra.mxu0 0.0
        %1617 = vmatprep.subr.mxu0 0.0
        %1618 = vmatpush1.msra.mxu0 0.0
        %1619 = vmatprep.subr.mxu0 0.0
        %1620 = vmatpush1.msra.mxu0 0.0
        %1621 = vmatprep.subr.mxu0 0.0
        %1622 = vmatpush1.msra.mxu0 0.0
        %1623 = vmatprep.subr.mxu0 0.0
        %1624 = vmatpush1.msra.mxu0 0.0
        %1625 = vmatprep.subr.mxu0 0.0
        %1626 = vmatpush1.msra.mxu0 0.0
        %1627 = vmatprep.subr.mxu0 0.0
        %1628 = vmatpush1.msra.mxu0 0.0
        %1629 = vmatprep.subr.mxu0 0.0
        %1630 = vmatpush1.msra.mxu0 0.0
        %1631 = vmatprep.subr.mxu0 0.0
        %1632 = vmatpush1.msra.mxu0 0.0
        %1633 = vmatprep.subr.mxu0 0.0
        %1634 = vmatpush1.msra.mxu0 0.0
        %1635 = vmatprep.subr.mxu0 0.0
        %1636 = vmatpush1.msra.mxu0 0.0
        %1637 = vmatprep.subr.mxu0 0.0
        %1638 = vmatpush1.msra.mxu0 0.0
        %1639 = vmatprep.subr.mxu0 0.0
        %1640 = vmatpush1.msra.mxu0 0.0
        %1641 = vmatprep.subr.mxu0 0.0
        %1642 = vmatpush1.msra.mxu0 0.0
        %1643 = vmatprep.subr.mxu0 0.0
        %1644 = vmatpush1.msra.mxu0 0.0
        %1645 = vmatprep.subr.mxu0 0.0
        %1646 = vmatpush1.msra.mxu0 0.0
        %1647 = vmatprep.subr.mxu0 0.0
        %1648 = vmatpush1.msra.mxu0 0.0
        %1649 = vmatprep.mubr.f32.mxu0 0.0
        %1650 = vmatmul.mubr.f32.gmra.mrb[0].mxu0 %v1583
        %v1651 = vpop.f32.mrb[0].mxu0
        %v1652 = vadd.f32 %v1580, %v1651
        %v1653 = vpop.f32.mrb[0].mxu0
        %1654 = vdwg.mxu0
        %1656 = vrot.lane.b32.xlu0 %v1568, 96
        %v1657 = vpop.permute.xlu0 %1656
        %vm1658 = vcmask 64512
        %v1659 = vsel %vm1658, %v1568, 0
        %v1661 = vsel %vm1658, %v1657, 0
        %1663 = vmatprep.subr.mxu0 0.0
        %1664 = vmatpush1.xpose.msra.mxu0 %v1661
        %1665 = vmatprep.subr.mxu0 0.0
        %1666 = vmatpush1.xpose.msra.mxu0 0.0
        %1667 = vmatprep.subr.mxu0 0.0
        %1668 = vmatpush1.xpose.msra.mxu0 0.0
        %1669 = vmatprep.subr.mxu0 0.0
        %1670 = vmatpush1.xpose.msra.mxu0 0.0
        %1671 = vmatprep.subr.mxu0 0.0
        %1672 = vmatpush1.xpose.msra.mxu0 0.0
        %1673 = vmatprep.subr.mxu0 0.0
        %1674 = vmatpush1.xpose.msra.mxu0 0.0
        %1675 = vmatprep.subr.mxu0 0.0
        %1676 = vmatpush1.xpose.msra.mxu0 0.0
        %1677 = vmatprep.subr.mxu0 0.0
        %1678 = vmatpush1.xpose.msra.mxu0 0.0
        %1679 = vmatprep.subr.mxu0 0.0
        %1680 = vmatpush1.xpose.msra.mxu0 0.0
        %1681 = vmatprep.subr.mxu0 0.0
        %1682 = vmatpush1.xpose.msra.mxu0 0.0
        %1683 = vmatprep.subr.mxu0 0.0
        %1684 = vmatpush1.xpose.msra.mxu0 0.0
        %1685 = vmatprep.subr.mxu0 0.0
        %1686 = vmatpush1.xpose.msra.mxu0 0.0
        %1687 = vmatprep.subr.mxu0 0.0
        %1688 = vmatpush1.xpose.msra.mxu0 0.0
        %1689 = vmatprep.subr.mxu0 0.0
        %1690 = vmatpush1.xpose.msra.mxu0 0.0
        %1691 = vmatprep.subr.mxu0 0.0
        %1692 = vmatpush1.xpose.msra.mxu0 0.0
        %1693 = vmatprep.subr.mxu0 0.0
        %1694 = vmatpush1.xpose.msra.mxu0 0.0
        %1695 = vmatprep.subr.mxu0 0.0
        %1696 = vmatpush1.xpose.msra.mxu0 0.0
        %1697 = vmatprep.subr.mxu0 0.0
        %1698 = vmatpush1.xpose.msra.mxu0 0.0
        %1699 = vmatprep.subr.mxu0 0.0
        %1700 = vmatpush1.xpose.msra.mxu0 0.0
        %1701 = vmatprep.subr.mxu0 0.0
        %1702 = vmatpush1.xpose.msra.mxu0 0.0
        %1703 = vmatprep.subr.mxu0 0.0
        %1704 = vmatpush1.xpose.msra.mxu0 0.0
        %1705 = vmatprep.subr.mxu0 0.0
        %1706 = vmatpush1.xpose.msra.mxu0 0.0
        %1707 = vmatprep.subr.mxu0 0.0
        %1708 = vmatpush1.xpose.msra.mxu0 0.0
        %1709 = vmatprep.subr.mxu0 0.0
        %1710 = vmatpush1.xpose.msra.mxu0 0.0
        %1711 = vmatprep.subr.mxu0 0.0
        %1712 = vmatpush1.xpose.msra.mxu0 0.0
        %1713 = vmatprep.subr.mxu0 0.0
        %1714 = vmatpush1.xpose.msra.mxu0 0.0
        %1715 = vmatprep.subr.mxu0 0.0
        %1716 = vmatpush1.xpose.msra.mxu0 0.0
        %1717 = vmatprep.subr.mxu0 0.0
        %1718 = vmatpush1.xpose.msra.mxu0 0.0
        %1719 = vmatprep.subr.mxu0 0.0
        %1720 = vmatpush1.xpose.msra.mxu0 0.0
        %1721 = vmatprep.subr.mxu0 0.0
        %1722 = vmatpush1.xpose.msra.mxu0 0.0
        %1723 = vmatprep.subr.mxu0 0.0
        %1724 = vmatpush1.xpose.msra.mxu0 0.0
        %1725 = vmatprep.subr.mxu0 0.0
        %1726 = vmatpush1.xpose.msra.mxu0 0.0
        %1727 = vmatprep.mubr.f32.mxu0 0.0
        %1728 = vmatmul.mubr.f32.gmra.mrb[0].mxu0 %v1659
        %v1729 = vpop.f32.mrb[0].mxu0
        %v1730 = vadd.f32 %v1482, %v1729
        %v1731 = vpop.f32.mrb[0].mxu0
        %1732 = vdwg.mxu0
        %v1733 = vsel %vm1658, %v1730, -inf
        %1734 = vmax.xlane.f32.xlu0 %v1733
        %v1735 = vpop.xlane.xlu0 %1734
        %v1736 = vsub.f32 %v1730, %v1735
        %v1737 = vmul.f32 %v1736, 1.442695
        %v1738 = vpow.pop %v1737
        %v1739 = vsel %vm1658, %v1738, 0.0
        %1740 = vadd.xlane.f32.xlu0 %v1739
        %v1741 = vpop.xlane.xlu0 %1740
        %v1742 = vrcp.pop %v1741
        %v1743 = vmul.f32 %v1738, %v1742
        %v1745 = vsel %vm1658, %v1743, 0
        %1747 = vmatprep.subr.mxu0 0.0
        %1748 = vmatpush1.msra.mxu0 %v1652
        %1749 = vmatprep.subr.mxu0 0.0
        %1750 = vmatpush1.msra.mxu0 0.0
        %1751 = vmatprep.subr.mxu0 0.0
        %1752 = vmatpush1.msra.mxu0 0.0
        %1753 = vmatprep.subr.mxu0 0.0
        %1754 = vmatpush1.msra.mxu0 0.0
        %1755 = vmatprep.subr.mxu0 0.0
        %1756 = vmatpush1.msra.mxu0 0.0
        %1757 = vmatprep.subr.mxu0 0.0
        %1758 = vmatpush1.msra.mxu0 0.0
        %1759 = vmatprep.subr.mxu0 0.0
        %1760 = vmatpush1.msra.mxu0 0.0
        %1761 = vmatprep.subr.mxu0 0.0
        %1762 = vmatpush1.msra.mxu0 0.0
        %1763 = vmatprep.subr.mxu0 0.0
        %1764 = vmatpush1.msra.mxu0 0.0
        %1765 = vmatprep.subr.mxu0 0.0
        %1766 = vmatpush1.msra.mxu0 0.0
        %1767 = vmatprep.subr.mxu0 0.0
        %1768 = vmatpush1.msra.mxu0 0.0
        %1769 = vmatprep.subr.mxu0 0.0
        %1770 = vmatpush1.msra.mxu0 0.0
        %1771 = vmatprep.subr.mxu0 0.0
        %1772 = vmatpush1.msra.mxu0 0.0
        %1773 = vmatprep.subr.mxu0 0.0
        %1774 = vmatpush1.msra.mxu0 0.0
        %1775 = vmatprep.subr.mxu0 0.0
        %1776 = vmatpush1.msra.mxu0 0.0
        %1777 = vmatprep.subr.mxu0 0.0
        %1778 = vmatpush1.msra.mxu0 0.0
        %1779 = vmatprep.subr.mxu0 0.0
        %1780 = vmatpush1.msra.mxu0 0.0
        %1781 = vmatprep.subr.mxu0 0.0
        %1782 = vmatpush1.msra.mxu0 0.0
        %1783 = vmatprep.subr.mxu0 0.0
        %1784 = vmatpush1.msra.mxu0 0.0
        %1785 = vmatprep.subr.mxu0 0.0
        %1786 = vmatpush1.msra.mxu0 0.0
        %1787 = vmatprep.subr.mxu0 0.0
        %1788 = vmatpush1.msra.mxu0 0.0
        %1789 = vmatprep.subr.mxu0 0.0
        %1790 = vmatpush1.msra.mxu0 0.0
        %1791 = vmatprep.subr.mxu0 0.0
        %1792 = vmatpush1.msra.mxu0 0.0
        %1793 = vmatprep.subr.mxu0 0.0
        %1794 = vmatpush1.msra.mxu0 0.0
        %1795 = vmatprep.subr.mxu0 0.0
        %1796 = vmatpush1.msra.mxu0 0.0
        %1797 = vmatprep.subr.mxu0 0.0
        %1798 = vmatpush1.msra.mxu0 0.0
        %1799 = vmatprep.subr.mxu0 0.0
        %1800 = vmatpush1.msra.mxu0 0.0
        %1801 = vmatprep.subr.mxu0 0.0
        %1802 = vmatpush1.msra.mxu0 0.0
        %1803 = vmatprep.subr.mxu0 0.0
        %1804 = vmatpush1.msra.mxu0 0.0
        %1805 = vmatprep.subr.mxu0 0.0
        %1806 = vmatpush1.msra.mxu0 0.0
        %1807 = vmatprep.subr.mxu0 0.0
        %1808 = vmatpush1.msra.mxu0 0.0
        %1809 = vmatprep.subr.mxu0 0.0
        %1810 = vmatpush1.msra.mxu0 0.0
        %1811 = vmatprep.mubr.f32.mxu0 0.0
        %1812 = vmatmul.mubr.f32.gmra.mrb[0].mxu0 %v1745
        %v1813 = vpop.f32.mrb[0].mxu0
        %v1814 = vadd.f32 0.0, %v1813
        %v1815 = vpop.f32.mrb[0].mxu0
        %1816 = vdwg.mxu0
        %1817 = vrot.lane.b32.xlu0 %v1568, 120
        %v1818 = vpop.permute.xlu0 %1817
        %1819 = vrot.lane.b32.xlu0 %v1568, 88
        %v1820 = vpop.permute.xlu0 %1819
        %v1821 = vsel %vm1658, %v1818, 0
        %v1823 = vsel %vm1658, %v1820, 0
        %1825 = vmatprep.subr.mxu0 0.0
        %1826 = vmatpush1.xpose.msra.mxu0 %v1823
        %1827 = vmatprep.subr.mxu0 0.0
        %1828 = vmatpush1.xpose.msra.mxu0 0.0
        %1829 = vmatprep.subr.mxu0 0.0
        %1830 = vmatpush1.xpose.msra.mxu0 0.0
        %1831 = vmatprep.subr.mxu0 0.0
        %1832 = vmatpush1.xpose.msra.mxu0 0.0
        %1833 = vmatprep.subr.mxu0 0.0
        %1834 = vmatpush1.xpose.msra.mxu0 0.0
        %1835 = vmatprep.subr.mxu0 0.0
        %1836 = vmatpush1.xpose.msra.mxu0 0.0
        %1837 = vmatprep.subr.mxu0 0.0
        %1838 = vmatpush1.xpose.msra.mxu0 0.0
        %1839 = vmatprep.subr.mxu0 0.0
        %1840 = vmatpush1.xpose.msra.mxu0 0.0
        %1841 = vmatprep.subr.mxu0 0.0
        %1842 = vmatpush1.xpose.msra.mxu0 0.0
        %1843 = vmatprep.subr.mxu0 0.0
        %1844 = vmatpush1.xpose.msra.mxu0 0.0
        %1845 = vmatprep.subr.mxu0 0.0
        %1846 = vmatpush1.xpose.msra.mxu0 0.0
        %1847 = vmatprep.subr.mxu0 0.0
        %1848 = vmatpush1.xpose.msra.mxu0 0.0
        %1849 = vmatprep.subr.mxu0 0.0
        %1850 = vmatpush1.xpose.msra.mxu0 0.0
        %1851 = vmatprep.subr.mxu0 0.0
        %1852 = vmatpush1.xpose.msra.mxu0 0.0
        %1853 = vmatprep.subr.mxu0 0.0
        %1854 = vmatpush1.xpose.msra.mxu0 0.0
        %1855 = vmatprep.subr.mxu0 0.0
        %1856 = vmatpush1.xpose.msra.mxu0 0.0
        %1857 = vmatprep.subr.mxu0 0.0
        %1858 = vmatpush1.xpose.msra.mxu0 0.0
        %1859 = vmatprep.subr.mxu0 0.0
        %1860 = vmatpush1.xpose.msra.mxu0 0.0
        %1861 = vmatprep.subr.mxu0 0.0
        %1862 = vmatpush1.xpose.msra.mxu0 0.0
        %1863 = vmatprep.subr.mxu0 0.0
        %1864 = vmatpush1.xpose.msra.mxu0 0.0
        %1865 = vmatprep.subr.mxu0 0.0
        %1866 = vmatpush1.xpose.msra.mxu0 0.0
        %1867 = vmatprep.subr.mxu0 0.0
        %1868 = vmatpush1.xpose.msra.mxu0 0.0
        %1869 = vmatprep.subr.mxu0 0.0
        %1870 = vmatpush1.xpose.msra.mxu0 0.0
        %1871 = vmatprep.subr.mxu0 0.0
        %1872 = vmatpush1.xpose.msra.mxu0 0.0
        %1873 = vmatprep.subr.mxu0 0.0
        %1874 = vmatpush1.xpose.msra.mxu0 0.0
        %1875 = vmatprep.subr.mxu0 0.0
        %1876 = vmatpush1.xpose.msra.mxu0 0.0
        %1877 = vmatprep.subr.mxu0 0.0
        %1878 = vmatpush1.xpose.msra.mxu0 0.0
        %1879 = vmatprep.subr.mxu0 0.0
        %1880 = vmatpush1.xpose.msra.mxu0 0.0
        %1881 = vmatprep.subr.mxu0 0.0
        %1882 = vmatpush1.xpose.msra.mxu0 0.0
        %1883 = vmatprep.subr.mxu0 0.0
        %1884 = vmatpush1.xpose.msra.mxu0 0.0
        %1885 = vmatprep.subr.mxu0 0.0
        %1886 = vmatpush1.xpose.msra.mxu0 0.0
        %1887 = vmatprep.subr.mxu0 0.0
        %1888 = vmatpush1.xpose.msra.mxu0 0.0
        %1889 = vmatprep.mubr.f32.mxu0 0.0
        %1890 = vmatmul.mubr.f32.gmra.mrb[0].mxu0 %v1821
        %v1891 = vpop.f32.mrb[0].mxu0
        %v1892 = vadd.f32 %v1482, %v1891
        %v1893 = vpop.f32.mrb[0].mxu0
        %1894 = vdwg.mxu0
        %v1895 = vsel %vm1658, %v1892, -inf
        %1896 = vmax.xlane.f32.xlu0 %v1895
        %v1897 = vpop.xlane.xlu0 %1896
        %v1898 = vsub.f32 %v1892, %v1897
        %v1899 = vmul.f32 %v1898, 1.442695
        %v1900 = vpow.pop %v1899
        %v1901 = vsel %vm1658, %v1900, 0.0
        %1902 = vadd.xlane.f32.xlu0 %v1901
        %v1903 = vpop.xlane.xlu0 %1902
        %v1904 = vrcp.pop %v1903
        %v1905 = vmul.f32 %v1900, %v1904
        %1907 = vrot.lane.b32.xlu0 %v1652, 120
        %v1908 = vpop.permute.xlu0 %1907
        %v1911 = vsel %vm1658, %v1905, 0
        %1913 = vmatprep.subr.mxu0 0.0
        %1914 = vmatpush1.msra.mxu0 %v1908
        %1915 = vmatprep.subr.mxu0 0.0
        %1916 = vmatpush1.msra.mxu0 0.0
        %1917 = vmatprep.subr.mxu0 0.0
        %1918 = vmatpush1.msra.mxu0 0.0
        %1919 = vmatprep.subr.mxu0 0.0
        %1920 = vmatpush1.msra.mxu0 0.0
        %1921 = vmatprep.subr.mxu0 0.0
        %1922 = vmatpush1.msra.mxu0 0.0
        %1923 = vmatprep.subr.mxu0 0.0
        %1924 = vmatpush1.msra.mxu0 0.0
        %1925 = vmatprep.subr.mxu0 0.0
        %1926 = vmatpush1.msra.mxu0 0.0
        %1927 = vmatprep.subr.mxu0 0.0
        %1928 = vmatpush1.msra.mxu0 0.0
        %1929 = vmatprep.subr.mxu0 0.0
        %1930 = vmatpush1.msra.mxu0 0.0
        %1931 = vmatprep.subr.mxu0 0.0
        %1932 = vmatpush1.msra.mxu0 0.0
        %1933 = vmatprep.subr.mxu0 0.0
        %1934 = vmatpush1.msra.mxu0 0.0
        %1935 = vmatprep.subr.mxu0 0.0
        %1936 = vmatpush1.msra.mxu0 0.0
        %1937 = vmatprep.subr.mxu0 0.0
        %1938 = vmatpush1.msra.mxu0 0.0
        %1939 = vmatprep.subr.mxu0 0.0
        %1940 = vmatpush1.msra.mxu0 0.0
        %1941 = vmatprep.subr.mxu0 0.0
        %1942 = vmatpush1.msra.mxu0 0.0
        %1943 = vmatprep.subr.mxu0 0.0
        %1944 = vmatpush1.msra.mxu0 0.0
        %1945 = vmatprep.subr.mxu0 0.0
        %1946 = vmatpush1.msra.mxu0 0.0
        %1947 = vmatprep.subr.mxu0 0.0
        %1948 = vmatpush1.msra.mxu0 0.0
        %1949 = vmatprep.subr.mxu0 0.0
        %1950 = vmatpush1.msra.mxu0 0.0
        %1951 = vmatprep.subr.mxu0 0.0
        %1952 = vmatpush1.msra.mxu0 0.0
        %1953 = vmatprep.subr.mxu0 0.0
        %1954 = vmatpush1.msra.mxu0 0.0
        %1955 = vmatprep.subr.mxu0 0.0
        %1956 = vmatpush1.msra.mxu0 0.0
        %1957 = vmatprep.subr.mxu0 0.0
        %1958 = vmatpush1.msra.mxu0 0.0
        %1959 = vmatprep.subr.mxu0 0.0
        %1960 = vmatpush1.msra.mxu0 0.0
        %1961 = vmatprep.subr.mxu0 0.0
        %1962 = vmatpush1.msra.mxu0 0.0
        %1963 = vmatprep.subr.mxu0 0.0
        %1964 = vmatpush1.msra.mxu0 0.0
        %1965 = vmatprep.subr.mxu0 0.0
        %1966 = vmatpush1.msra.mxu0 0.0
        %1967 = vmatprep.subr.mxu0 0.0
        %1968 = vmatpush1.msra.mxu0 0.0
        %1969 = vmatprep.subr.mxu0 0.0
        %1970 = vmatpush1.msra.mxu0 0.0
        %1971 = vmatprep.subr.mxu0 0.0
        %1972 = vmatpush1.msra.mxu0 0.0
        %1973 = vmatprep.subr.mxu0 0.0
        %1974 = vmatpush1.msra.mxu0 0.0
        %1975 = vmatprep.subr.mxu0 0.0
        %1976 = vmatpush1.msra.mxu0 0.0
        %1977 = vmatprep.mubr.f32.mxu0 0.0
        %1978 = vmatmul.mubr.f32.gmra.mrb[0].mxu0 %v1911
        %v1979 = vpop.f32.mrb[0].mxu0
        %v1980 = vadd.f32 0.0, %v1979
        %v1981 = vpop.f32.mrb[0].mxu0
        %1982 = vdwg.mxu0
        %1983 = vrot.lane.b32.xlu0 %v1568, 112
        %v1984 = vpop.permute.xlu0 %1983
        %1985 = vrot.lane.b32.xlu0 %v1568, 80
        %v1986 = vpop.permute.xlu0 %1985
        %v1987 = vsel %vm1658, %v1984, 0
        %v1989 = vsel %vm1658, %v1986, 0
        %1991 = vmatprep.subr.mxu0 0.0
        %1992 = vmatpush1.xpose.msra.mxu0 %v1989
        %1993 = vmatprep.subr.mxu0 0.0
        %1994 = vmatpush1.xpose.msra.mxu0 0.0
        %1995 = vmatprep.subr.mxu0 0.0
        %1996 = vmatpush1.xpose.msra.mxu0 0.0
        %1997 = vmatprep.subr.mxu0 0.0
        %1998 = vmatpush1.xpose.msra.mxu0 0.0
        %1999 = vmatprep.subr.mxu0 0.0
        %2000 = vmatpush1.xpose.msra.mxu0 0.0
        %2001 = vmatprep.subr.mxu0 0.0
        %2002 = vmatpush1.xpose.msra.mxu0 0.0
        %2003 = vmatprep.subr.mxu0 0.0
        %2004 = vmatpush1.xpose.msra.mxu0 0.0
        %2005 = vmatprep.subr.mxu0 0.0
        %2006 = vmatpush1.xpose.msra.mxu0 0.0
        %2007 = vmatprep.subr.mxu0 0.0
        %2008 = vmatpush1.xpose.msra.mxu0 0.0
        %2009 = vmatprep.subr.mxu0 0.0
        %2010 = vmatpush1.xpose.msra.mxu0 0.0
        %2011 = vmatprep.subr.mxu0 0.0
        %2012 = vmatpush1.xpose.msra.mxu0 0.0
        %2013 = vmatprep.subr.mxu0 0.0
        %2014 = vmatpush1.xpose.msra.mxu0 0.0
        %2015 = vmatprep.subr.mxu0 0.0
        %2016 = vmatpush1.xpose.msra.mxu0 0.0
        %2017 = vmatprep.subr.mxu0 0.0
        %2018 = vmatpush1.xpose.msra.mxu0 0.0
        %2019 = vmatprep.subr.mxu0 0.0
        %2020 = vmatpush1.xpose.msra.mxu0 0.0
        %2021 = vmatprep.subr.mxu0 0.0
        %2022 = vmatpush1.xpose.msra.mxu0 0.0
        %2023 = vmatprep.subr.mxu0 0.0
        %2024 = vmatpush1.xpose.msra.mxu0 0.0
        %2025 = vmatprep.subr.mxu0 0.0
        %2026 = vmatpush1.xpose.msra.mxu0 0.0
        %2027 = vmatprep.subr.mxu0 0.0
        %2028 = vmatpush1.xpose.msra.mxu0 0.0
        %2029 = vmatprep.subr.mxu0 0.0
        %2030 = vmatpush1.xpose.msra.mxu0 0.0
        %2031 = vmatprep.subr.mxu0 0.0
        %2032 = vmatpush1.xpose.msra.mxu0 0.0
        %2033 = vmatprep.subr.mxu0 0.0
        %2034 = vmatpush1.xpose.msra.mxu0 0.0
        %2035 = vmatprep.subr.mxu0 0.0
        %2036 = vmatpush1.xpose.msra.mxu0 0.0
        %2037 = vmatprep.subr.mxu0 0.0
        %2038 = vmatpush1.xpose.msra.mxu0 0.0
        %2039 = vmatprep.subr.mxu0 0.0
        %2040 = vmatpush1.xpose.msra.mxu0 0.0
        %2041 = vmatprep.subr.mxu0 0.0
        %2042 = vmatpush1.xpose.msra.mxu0 0.0
        %2043 = vmatprep.subr.mxu0 0.0
        %2044 = vmatpush1.xpose.msra.mxu0 0.0
        %2045 = vmatprep.subr.mxu0 0.0
        %2046 = vmatpush1.xpose.msra.mxu0 0.0
        %2047 = vmatprep.subr.mxu0 0.0
        %2048 = vmatpush1.xpose.msra.mxu0 0.0
        %2049 = vmatprep.subr.mxu0 0.0
        %2050 = vmatpush1.xpose.msra.mxu0 0.0
        %2051 = vmatprep.subr.mxu0 0.0
        %2052 = vmatpush1.xpose.msra.mxu0 0.0
        %2053 = vmatprep.subr.mxu0 0.0
        %2054 = vmatpush1.xpose.msra.mxu0 0.0
        %2055 = vmatprep.mubr.f32.mxu0 0.0
        %2056 = vmatmul.mubr.f32.gmra.mrb[0].mxu0 %v1987
        %v2057 = vpop.f32.mrb[0].mxu0
        %v2058 = vadd.f32 %v1482, %v2057
        %v2059 = vpop.f32.mrb[0].mxu0
        %2060 = vdwg.mxu0
        %v2061 = vsel %vm1658, %v2058, -inf
        %2062 = vmax.xlane.f32.xlu0 %v2061
        %v2063 = vpop.xlane.xlu0 %2062
        %v2064 = vsub.f32 %v2058, %v2063
        %v2065 = vmul.f32 %v2064, 1.442695
        %v2066 = vpow.pop %v2065
        %v2067 = vsel %vm1658, %v2066, 0.0
        %2068 = vadd.xlane.f32.xlu0 %v2067
        %v2069 = vpop.xlane.xlu0 %2068
        %v2070 = vrcp.pop %v2069
        %v2071 = vmul.f32 %v2066, %v2070
        %2072 = vrot.lane.b32.xlu0 %v1652, 112
        %v2073 = vpop.permute.xlu0 %2072
        %v2076 = vsel %vm1658, %v2071, 0
        %2078 = vmatprep.subr.mxu0 0.0
        %2079 = vmatpush1.msra.mxu0 %v2073
        %2080 = vmatprep.subr.mxu0 0.0
        %2081 = vmatpush1.msra.mxu0 0.0
        %2082 = vmatprep.subr.mxu0 0.0
        %2083 = vmatpush1.msra.mxu0 0.0
        %2084 = vmatprep.subr.mxu0 0.0
        %2085 = vmatpush1.msra.mxu0 0.0
        %2086 = vmatprep.subr.mxu0 0.0
        %2087 = vmatpush1.msra.mxu0 0.0
        %2088 = vmatprep.subr.mxu0 0.0
        %2089 = vmatpush1.msra.mxu0 0.0
        %2090 = vmatprep.subr.mxu0 0.0
        %2091 = vmatpush1.msra.mxu0 0.0
        %2092 = vmatprep.subr.mxu0 0.0
        %2093 = vmatpush1.msra.mxu0 0.0
        %2094 = vmatprep.subr.mxu0 0.0
        %2095 = vmatpush1.msra.mxu0 0.0
        %2096 = vmatprep.subr.mxu0 0.0
        %2097 = vmatpush1.msra.mxu0 0.0
        %2098 = vmatprep.subr.mxu0 0.0
        %2099 = vmatpush1.msra.mxu0 0.0
        %2100 = vmatprep.subr.mxu0 0.0
        %2101 = vmatpush1.msra.mxu0 0.0
        %2102 = vmatprep.subr.mxu0 0.0
        %2103 = vmatpush1.msra.mxu0 0.0
        %2104 = vmatprep.subr.mxu0 0.0
        %2105 = vmatpush1.msra.mxu0 0.0
        %2106 = vmatprep.subr.mxu0 0.0
        %2107 = vmatpush1.msra.mxu0 0.0
        %2108 = vmatprep.subr.mxu0 0.0
        %2109 = vmatpush1.msra.mxu0 0.0
        %2110 = vmatprep.subr.mxu0 0.0
        %2111 = vmatpush1.msra.mxu0 0.0
        %2112 = vmatprep.subr.mxu0 0.0
        %2113 = vmatpush1.msra.mxu0 0.0
        %2114 = vmatprep.subr.mxu0 0.0
        %2115 = vmatpush1.msra.mxu0 0.0
        %2116 = vmatprep.subr.mxu0 0.0
        %2117 = vmatpush1.msra.mxu0 0.0
        %2118 = vmatprep.subr.mxu0 0.0
        %2119 = vmatpush1.msra.mxu0 0.0
        %2120 = vmatprep.subr.mxu0 0.0
        %2121 = vmatpush1.msra.mxu0 0.0
        %2122 = vmatprep.subr.mxu0 0.0
        %2123 = vmatpush1.msra.mxu0 0.0
        %2124 = vmatprep.subr.mxu0 0.0
        %2125 = vmatpush1.msra.mxu0 0.0
        %2126 = vmatprep.subr.mxu0 0.0
        %2127 = vmatpush1.msra.mxu0 0.0
        %2128 = vmatprep.subr.mxu0 0.0
        %2129 = vmatpush1.msra.mxu0 0.0
        %2130 = vmatprep.subr.mxu0 0.0
        %2131 = vmatpush1.msra.mxu0 0.0
        %2132 = vmatprep.subr.mxu0 0.0
        %2133 = vmatpush1.msra.mxu0 0.0
        %2134 = vmatprep.subr.mxu0 0.0
        %2135 = vmatpush1.msra.mxu0 0.0
        %2136 = vmatprep.subr.mxu0 0.0
        %2137 = vmatpush1.msra.mxu0 0.0
        %2138 = vmatprep.subr.mxu0 0.0
        %2139 = vmatpush1.msra.mxu0 0.0
        %2140 = vmatprep.subr.mxu0 0.0
        %2141 = vmatpush1.msra.mxu0 0.0
        %2142 = vmatprep.mubr.f32.mxu0 0.0
        %2143 = vmatmul.mubr.f32.gmra.mrb[0].mxu0 %v2076
        %v2144 = vpop.f32.mrb[0].mxu0
        %v2145 = vadd.f32 0.0, %v2144
        %v2146 = vpop.f32.mrb[0].mxu0
        %2147 = vdwg.mxu0
        %2148 = vrot.lane.b32.xlu0 %v1568, 104
        %v2149 = vpop.permute.xlu0 %2148
        %2150 = vrot.lane.b32.xlu0 %v1568, 72
        %v2151 = vpop.permute.xlu0 %2150
        %v2152 = vsel %vm1658, %v2149, 0
        %v2154 = vsel %vm1658, %v2151, 0
        %2156 = vmatprep.subr.mxu0 0.0
        %2157 = vmatpush1.xpose.msra.mxu0 %v2154
        %2158 = vmatprep.subr.mxu0 0.0
        %2159 = vmatpush1.xpose.msra.mxu0 0.0
        %2160 = vmatprep.subr.mxu0 0.0
        %2161 = vmatpush1.xpose.msra.mxu0 0.0
        %2162 = vmatprep.subr.mxu0 0.0
        %2163 = vmatpush1.xpose.msra.mxu0 0.0
        %2164 = vmatprep.subr.mxu0 0.0
        %2165 = vmatpush1.xpose.msra.mxu0 0.0
        %2166 = vmatprep.subr.mxu0 0.0
        %2167 = vmatpush1.xpose.msra.mxu0 0.0
        %2168 = vmatprep.subr.mxu0 0.0
        %2169 = vmatpush1.xpose.msra.mxu0 0.0
        %2170 = vmatprep.subr.mxu0 0.0
        %2171 = vmatpush1.xpose.msra.mxu0 0.0
        %2172 = vmatprep.subr.mxu0 0.0
        %2173 = vmatpush1.xpose.msra.mxu0 0.0
        %2174 = vmatprep.subr.mxu0 0.0
        %2175 = vmatpush1.xpose.msra.mxu0 0.0
        %2176 = vmatprep.subr.mxu0 0.0
        %2177 = vmatpush1.xpose.msra.mxu0 0.0
        %2178 = vmatprep.subr.mxu0 0.0
        %2179 = vmatpush1.xpose.msra.mxu0 0.0
        %2180 = vmatprep.subr.mxu0 0.0
        %2181 = vmatpush1.xpose.msra.mxu0 0.0
        %2182 = vmatprep.subr.mxu0 0.0
        %2183 = vmatpush1.xpose.msra.mxu0 0.0
        %2184 = vmatprep.subr.mxu0 0.0
        %2185 = vmatpush1.xpose.msra.mxu0 0.0
        %2186 = vmatprep.subr.mxu0 0.0
        %2187 = vmatpush1.xpose.msra.mxu0 0.0
        %2188 = vmatprep.subr.mxu0 0.0
        %2189 = vmatpush1.xpose.msra.mxu0 0.0
        %2190 = vmatprep.subr.mxu0 0.0
        %2191 = vmatpush1.xpose.msra.mxu0 0.0
        %2192 = vmatprep.subr.mxu0 0.0
        %2193 = vmatpush1.xpose.msra.mxu0 0.0
        %2194 = vmatprep.subr.mxu0 0.0
        %2195 = vmatpush1.xpose.msra.mxu0 0.0
        %2196 = vmatprep.subr.mxu0 0.0
        %2197 = vmatpush1.xpose.msra.mxu0 0.0
        %2198 = vmatprep.subr.mxu0 0.0
        %2199 = vmatpush1.xpose.msra.mxu0 0.0
        %2200 = vmatprep.subr.mxu0 0.0
        %2201 = vmatpush1.xpose.msra.mxu0 0.0
        %2202 = vmatprep.subr.mxu0 0.0
        %2203 = vmatpush1.xpose.msra.mxu0 0.0
        %2204 = vmatprep.subr.mxu0 0.0
        %2205 = vmatpush1.xpose.msra.mxu0 0.0
        %2206 = vmatprep.subr.mxu0 0.0
        %2207 = vmatpush1.xpose.msra.mxu0 0.0
        %2208 = vmatprep.subr.mxu0 0.0
        %2209 = vmatpush1.xpose.msra.mxu0 0.0
        %2210 = vmatprep.subr.mxu0 0.0
        %2211 = vmatpush1.xpose.msra.mxu0 0.0
        %2212 = vmatprep.subr.mxu0 0.0
        %2213 = vmatpush1.xpose.msra.mxu0 0.0
        %2214 = vmatprep.subr.mxu0 0.0
        %2215 = vmatpush1.xpose.msra.mxu0 0.0
        %2216 = vmatprep.subr.mxu0 0.0
        %2217 = vmatpush1.xpose.msra.mxu0 0.0
        %2218 = vmatprep.subr.mxu0 0.0
        %2219 = vmatpush1.xpose.msra.mxu0 0.0
        %2220 = vmatprep.mubr.f32.mxu0 0.0
        %2221 = vmatmul.mubr.f32.gmra.mrb[0].mxu0 %v2152
        %v2222 = vpop.f32.mrb[0].mxu0
        %v2223 = vadd.f32 %v1482, %v2222
        %v2224 = vpop.f32.mrb[0].mxu0
        %2225 = vdwg.mxu0
        %v2226 = vsel %vm1658, %v2223, -inf
        %2227 = vmax.xlane.f32.xlu0 %v2226
        %v2228 = vpop.xlane.xlu0 %2227
        %v2229 = vsub.f32 %v2223, %v2228
        %v2230 = vmul.f32 %v2229, 1.442695
        %v2231 = vpow.pop %v2230
        %v2232 = vsel %vm1658, %v2231, 0.0
        %2233 = vadd.xlane.f32.xlu0 %v2232
        %v2234 = vpop.xlane.xlu0 %2233
        %v2235 = vrcp.pop %v2234
        %v2236 = vmul.f32 %v2231, %v2235
        %2237 = vrot.lane.b32.xlu0 %v1652, 104
        %v2238 = vpop.permute.xlu0 %2237
        %v2241 = vsel %vm1658, %v2236, 0
        %2243 = vmatprep.subr.mxu0 0.0
        %2244 = vmatpush1.msra.mxu0 %v2238
        %2245 = vmatprep.subr.mxu0 0.0
        %2246 = vmatpush1.msra.mxu0 0.0
        %2247 = vmatprep.subr.mxu0 0.0
        %2248 = vmatpush1.msra.mxu0 0.0
        %2249 = vmatprep.subr.mxu0 0.0
        %2250 = vmatpush1.msra.mxu0 0.0
        %2251 = vmatprep.subr.mxu0 0.0
        %2252 = vmatpush1.msra.mxu0 0.0
        %2253 = vmatprep.subr.mxu0 0.0
        %2254 = vmatpush1.msra.mxu0 0.0
        %2255 = vmatprep.subr.mxu0 0.0
        %2256 = vmatpush1.msra.mxu0 0.0
        %2257 = vmatprep.subr.mxu0 0.0
        %2258 = vmatpush1.msra.mxu0 0.0
        %2259 = vmatprep.subr.mxu0 0.0
        %2260 = vmatpush1.msra.mxu0 0.0
        %2261 = vmatprep.subr.mxu0 0.0
        %2262 = vmatpush1.msra.mxu0 0.0
        %2263 = vmatprep.subr.mxu0 0.0
        %2264 = vmatpush1.msra.mxu0 0.0
        %2265 = vmatprep.subr.mxu0 0.0
        %2266 = vmatpush1.msra.mxu0 0.0
        %2267 = vmatprep.subr.mxu0 0.0
        %2268 = vmatpush1.msra.mxu0 0.0
        %2269 = vmatprep.subr.mxu0 0.0
        %2270 = vmatpush1.msra.mxu0 0.0
        %2271 = vmatprep.subr.mxu0 0.0
        %2272 = vmatpush1.msra.mxu0 0.0
        %2273 = vmatprep.subr.mxu0 0.0
        %2274 = vmatpush1.msra.mxu0 0.0
        %2275 = vmatprep.subr.mxu0 0.0
        %2276 = vmatpush1.msra.mxu0 0.0
        %2277 = vmatprep.subr.mxu0 0.0
        %2278 = vmatpush1.msra.mxu0 0.0
        %2279 = vmatprep.subr.mxu0 0.0
        %2280 = vmatpush1.msra.mxu0 0.0
        %2281 = vmatprep.subr.mxu0 0.0
        %2282 = vmatpush1.msra.mxu0 0.0
        %2283 = vmatprep.subr.mxu0 0.0
        %2284 = vmatpush1.msra.mxu0 0.0
        %2285 = vmatprep.subr.mxu0 0.0
        %2286 = vmatpush1.msra.mxu0 0.0
        %2287 = vmatprep.subr.mxu0 0.0
        %2288 = vmatpush1.msra.mxu0 0.0
        %2289 = vmatprep.subr.mxu0 0.0
        %2290 = vmatpush1.msra.mxu0 0.0
        %2291 = vmatprep.subr.mxu0 0.0
        %2292 = vmatpush1.msra.mxu0 0.0
        %2293 = vmatprep.subr.mxu0 0.0
        %2294 = vmatpush1.msra.mxu0 0.0
        %2295 = vmatprep.subr.mxu0 0.0
        %2296 = vmatpush1.msra.mxu0 0.0
        %2297 = vmatprep.subr.mxu0 0.0
        %2298 = vmatpush1.msra.mxu0 0.0
        %2299 = vmatprep.subr.mxu0 0.0
        %2300 = vmatpush1.msra.mxu0 0.0
        %2301 = vmatprep.subr.mxu0 0.0
        %2302 = vmatpush1.msra.mxu0 0.0
        %2303 = vmatprep.subr.mxu0 0.0
        %2304 = vmatpush1.msra.mxu0 0.0
        %2305 = vmatprep.subr.mxu0 0.0
        %2306 = vmatpush1.msra.mxu0 0.0
        %2307 = vmatprep.mubr.f32.mxu0 0.0
        %2308 = vmatmul.mubr.f32.gmra.mrb[0].mxu0 %v2241
        %v2309 = vpop.f32.mrb[0].mxu0
        %v2310 = vadd.f32 0.0, %v2309
        %v2311 = vpop.f32.mrb[0].mxu0
        %2312 = vdwg.mxu0
        %2314 = vrot.lane.b32.xlu0 %v1980, 8
        %v2315 = vpop.permute.xlu0 %2314
        %2318 = vrot.lane.b32.xlu0 %v2145, 16
        %v2319 = vpop.permute.xlu0 %2318
        %2322 = vrot.lane.b32.xlu0 %v2310, 24
        %v2323 = vpop.permute.xlu0 %2322
        %v2325 = vsel %vm1658, %v1814, %v2315
        %vm2326 = vcmask 130048
        %v2327 = vsel %vm2326, %v2325, %v2319
        %vm2328 = vcmask 195584
        %v2329 = vsel %vm2328, %v2327, %v2323
        %v2330 = vld [vmem:[#allocation17] sm:$0xff]
        %v2331 = vld [vmem:[#allocation17 + $0x8] sm:$0xff]
        %v2332 = vld [vmem:[#allocation17 + $0x10] sm:$0xff]
        %v2333 = vld [vmem:[#allocation17 + $0x18] sm:$0xff]
        %v2334 = vld [vmem:[#allocation19] sm:$0x1]
        %v2336 = vlaneseq
        %v2337 = vshrl.u32 %v2336, 7
        %v2338 = vsub.s32 0, %v2337
        %v2339 = vrot.slane %v2334, %v2338
        %v2342 = vsel %vm1497, %v2329, 0
        %2344 = vmatprep.subr.mxu0 0.0
        %2345 = vmatpush1.msra.mxu0 %v2330
        %2346 = vmatprep.subr.mxu0 0.0
        %2347 = vmatpush1.msra.mxu0 %v2331
        %2348 = vmatprep.subr.mxu0 0.0
        %2349 = vmatpush1.msra.mxu0 %v2332
        %2350 = vmatprep.subr.mxu0 0.0
        %2351 = vmatpush1.msra.mxu0 %v2333
        %2352 = vmatprep.subr.mxu0 0.0
        %2353 = vmatpush1.msra.mxu0 0.0
        %2354 = vmatprep.subr.mxu0 0.0
        %2355 = vmatpush1.msra.mxu0 0.0
        %2356 = vmatprep.subr.mxu0 0.0
        %2357 = vmatpush1.msra.mxu0 0.0
        %2358 = vmatprep.subr.mxu0 0.0
        %2359 = vmatpush1.msra.mxu0 0.0
        %2360 = vmatprep.subr.mxu0 0.0
        %2361 = vmatpush1.msra.mxu0 0.0
        %2362 = vmatprep.subr.mxu0 0.0
        %2363 = vmatpush1.msra.mxu0 0.0
        %2364 = vmatprep.subr.mxu0 0.0
        %2365 = vmatpush1.msra.mxu0 0.0
        %2366 = vmatprep.subr.mxu0 0.0
        %2367 = vmatpush1.msra.mxu0 0.0
        %2368 = vmatprep.subr.mxu0 0.0
        %2369 = vmatpush1.msra.mxu0 0.0
        %2370 = vmatprep.subr.mxu0 0.0
        %2371 = vmatpush1.msra.mxu0 0.0
        %2372 = vmatprep.subr.mxu0 0.0
        %2373 = vmatpush1.msra.mxu0 0.0
        %2374 = vmatprep.subr.mxu0 0.0
        %2375 = vmatpush1.msra.mxu0 0.0
        %2376 = vmatprep.subr.mxu0 0.0
        %2377 = vmatpush1.msra.mxu0 0.0
        %2378 = vmatprep.subr.mxu0 0.0
        %2379 = vmatpush1.msra.mxu0 0.0
        %2380 = vmatprep.subr.mxu0 0.0
        %2381 = vmatpush1.msra.mxu0 0.0
        %2382 = vmatprep.subr.mxu0 0.0
        %2383 = vmatpush1.msra.mxu0 0.0
        %2384 = vmatprep.subr.mxu0 0.0
        %2385 = vmatpush1.msra.mxu0 0.0
        %2386 = vmatprep.subr.mxu0 0.0
        %2387 = vmatpush1.msra.mxu0 0.0
        %2388 = vmatprep.subr.mxu0 0.0
        %2389 = vmatpush1.msra.mxu0 0.0
        %2390 = vmatprep.subr.mxu0 0.0
        %2391 = vmatpush1.msra.mxu0 0.0
        %2392 = vmatprep.subr.mxu0 0.0
        %2393 = vmatpush1.msra.mxu0 0.0
        %2394 = vmatprep.subr.mxu0 0.0
        %2395 = vmatpush1.msra.mxu0 0.0
        %2396 = vmatprep.subr.mxu0 0.0
        %2397 = vmatpush1.msra.mxu0 0.0
        %2398 = vmatprep.subr.mxu0 0.0
        %2399 = vmatpush1.msra.mxu0 0.0
        %2400 = vmatprep.subr.mxu0 0.0
        %2401 = vmatpush1.msra.mxu0 0.0
        %2402 = vmatprep.subr.mxu0 0.0
        %2403 = vmatpush1.msra.mxu0 0.0
        %2404 = vmatprep.subr.mxu0 0.0
        %2405 = vmatpush1.msra.mxu0 0.0
        %2406 = vmatprep.subr.mxu0 0.0
        %2407 = vmatpush1.msra.mxu0 0.0
        %2408 = vmatprep.mubr.f32.mxu0 0.0
        %2409 = vmatmul.mubr.f32.gmra.mrb[0].mxu0 %v2342
        %v2410 = vpop.f32.mrb[0].mxu0
        %v2411 = vadd.f32 %v2339, %v2410
        %v2412 = vpop.f32.mrb[0].mxu0
        %2413 = vdwg.mxu0
        %v2414 = vadd.f32 %v1483, %v2411
        %v2415 = vld [vmem:[#allocation20] sm:$0x1]
        %v2416 = vld [vmem:[#allocation22] sm:$0x1]
        %v2417 = vsel %vm1497, %v2414, 0.0
        %2418 = vadd.xlane.f32.xlu0 %v2417
        %v2419 = vpop.xlane.xlu0 %2418
        %v2420 = vrcp.pop 32.0
        %v2421 = vmul.f32 %v2419, %v2420
        %v2422 = vsub.f32 %v2414, %v2421
        %v2423 = vmul.f32 %v2422, %v2422
        %v2424 = vsel %vm1497, %v2423, 0.0
        %2425 = vadd.xlane.f32.xlu0 %v2424
        %v2426 = vpop.xlane.xlu0 %2425
        %v2427 = vmul.f32 %v2426, %v2420
        %v2428 = vadd.f32 %v2427, 1e-05
        %v2429 = vrsqrt.pop %v2428
        %v2430 = vmul.f32 %v2422, %v2429
        %v2432 = vlaneseq
        %v2433 = vshrl.u32 %v2432, 7
        %v2434 = vsub.s32 0, %v2433
        %v2435 = vrot.slane %v2415, %v2434
        %v2437 = vmul.f32 %v2430, %v2435
        %v2439 = vlaneseq
        %v2440 = vshrl.u32 %v2439, 7
        %v2441 = vsub.s32 0, %v2440
        %v2442 = vrot.slane %v2416, %v2441
        %v2444 = vadd.f32 %v2437, %v2442
        %v2445 = vadd.f32 %v2444, %v1484
        %v2446 = vld [vmem:[#allocation23] sm:$0xff]
        %v2447 = vld [vmem:[#allocation23 + $0x8] sm:$0xff]
        %v2448 = vld [vmem:[#allocation23 + $0x10] sm:$0xff]
        %v2449 = vld [vmem:[#allocation23 + $0x18] sm:$0xff]
        %v2450 = vld [vmem:[#allocation25] sm:$0x1]
        %v2452 = vlaneseq
        %v2453 = vshrl.u32 %v2452, 7
        %v2454 = vsub.s32 0, %v2453
        %v2455 = vrot.slane %v2450, %v2454
        %v2458 = vsel %vm1497, %v2445, 0
        %2460 = vmatprep.subr.mxu0 0.0
        %2461 = vmatpush1.msra.mxu0 %v2446
        %2462 = vmatprep.subr.mxu0 0.0
        %2463 = vmatpush1.msra.mxu0 %v2447
        %2464 = vmatprep.subr.mxu0 0.0
        %2465 = vmatpush1.msra.mxu0 %v2448
        %2466 = vmatprep.subr.mxu0 0.0
        %2467 = vmatpush1.msra.mxu0 %v2449
        %2468 = vmatprep.subr.mxu0 0.0
        %2469 = vmatpush1.msra.mxu0 0.0
        %2470 = vmatprep.subr.mxu0 0.0
        %2471 = vmatpush1.msra.mxu0 0.0
        %2472 = vmatprep.subr.mxu0 0.0
        %2473 = vmatpush1.msra.mxu0 0.0
        %2474 = vmatprep.subr.mxu0 0.0
        %2475 = vmatpush1.msra.mxu0 0.0
        %2476 = vmatprep.subr.mxu0 0.0
        %2477 = vmatpush1.msra.mxu0 0.0
        %2478 = vmatprep.subr.mxu0 0.0
        %2479 = vmatpush1.msra.mxu0 0.0
        %2480 = vmatprep.subr.mxu0 0.0
        %2481 = vmatpush1.msra.mxu0 0.0
        %2482 = vmatprep.subr.mxu0 0.0
        %2483 = vmatpush1.msra.mxu0 0.0
        %2484 = vmatprep.subr.mxu0 0.0
        %2485 = vmatpush1.msra.mxu0 0.0
        %2486 = vmatprep.subr.mxu0 0.0
        %2487 = vmatpush1.msra.mxu0 0.0
        %2488 = vmatprep.subr.mxu0 0.0
        %2489 = vmatpush1.msra.mxu0 0.0
        %2490 = vmatprep.subr.mxu0 0.0
        %2491 = vmatpush1.msra.mxu0 0.0
        %2492 = vmatprep.subr.mxu0 0.0
        %2493 = vmatpush1.msra.mxu0 0.0
        %2494 = vmatprep.subr.mxu0 0.0
        %2495 = vmatpush1.msra.mxu0 0.0
        %2496 = vmatprep.subr.mxu0 0.0
        %2497 = vmatpush1.msra.mxu0 0.0
        %2498 = vmatprep.subr.mxu0 0.0
        %2499 = vmatpush1.msra.mxu0 0.0
        %2500 = vmatprep.subr.mxu0 0.0
        %2501 = vmatpush1.msra.mxu0 0.0
        %2502 = vmatprep.subr.mxu0 0.0
        %2503 = vmatpush1.msra.mxu0 0.0
        %2504 = vmatprep.subr.mxu0 0.0
        %2505 = vmatpush1.msra.mxu0 0.0
        %2506 = vmatprep.subr.mxu0 0.0
        %2507 = vmatpush1.msra.mxu0 0.0
        %2508 = vmatprep.subr.mxu0 0.0
        %2509 = vmatpush1.msra.mxu0 0.0
        %2510 = vmatprep.subr.mxu0 0.0
        %2511 = vmatpush1.msra.mxu0 0.0
        %2512 = vmatprep.subr.mxu0 0.0
        %2513 = vmatpush1.msra.mxu0 0.0
        %2514 = vmatprep.subr.mxu0 0.0
        %2515 = vmatpush1.msra.mxu0 0.0
        %2516 = vmatprep.subr.mxu0 0.0
        %2517 = vmatpush1.msra.mxu0 0.0
        %2518 = vmatprep.subr.mxu0 0.0
        %2519 = vmatpush1.msra.mxu0 0.0
        %2520 = vmatprep.subr.mxu0 0.0
        %2521 = vmatpush1.msra.mxu0 0.0
        %2522 = vmatprep.subr.mxu0 0.0
        %2523 = vmatpush1.msra.mxu0 0.0
        %2524 = vmatprep.mubr.f32.mxu0 0.0
        %2525 = vmatmul.mubr.f32.gmra.mrb[0].mxu0 %v2458
        %v2526 = vpop.f32.mrb[0].mxu0
        %v2527 = vadd.f32 %v2455, %v2526
        %v2528 = vpop.f32.mrb[0].mxu0
        %2529 = vdwg.mxu0
        %v2530 = vld [vmem:[%s1264] sm:$0xff]
        %v2531 = vld [vmem:[%s1264 + $0x8] sm:$0xff]
        %v2532 = vld [vmem:[#allocation26] sm:$0xff]
        %v2533 = vld [vmem:[#allocation26 + $0x8] sm:$0xff]
        %v2534 = vld [vmem:[#allocation26 + $0x10] sm:$0xff]
        %v2535 = vld [vmem:[#allocation26 + $0x18] sm:$0xff]
        %v2536 = vld [vmem:[#allocation28] sm:$0x1]
        %v2538 = vlaneseq
        %v2539 = vshrl.u32 %v2538, 7
        %v2540 = vsub.s32 0, %v2539
        %v2541 = vrot.slane %v2536, %v2540
        %v2544 = vsel %vm1497, %v2530, 0
        %v2547 = vsel %vm1497, %v2531, 0
        %2549 = vmatprep.subr.mxu0 0.0
        %2550 = vmatpush1.msra.mxu0 %v2532
        %2551 = vmatprep.subr.mxu0 0.0
        %2552 = vmatpush1.msra.mxu0 %v2533
        %2553 = vmatprep.subr.mxu0 0.0
        %2554 = vmatpush1.msra.mxu0 %v2534
        %2555 = vmatprep.subr.mxu0 0.0
        %2556 = vmatpush1.msra.mxu0 %v2535
        %2557 = vmatprep.subr.mxu0 0.0
        %2558 = vmatpush1.msra.mxu0 0.0
        %2559 = vmatprep.subr.mxu0 0.0
        %2560 = vmatpush1.msra.mxu0 0.0
        %2561 = vmatprep.subr.mxu0 0.0
        %2562 = vmatpush1.msra.mxu0 0.0
        %2563 = vmatprep.subr.mxu0 0.0
        %2564 = vmatpush1.msra.mxu0 0.0
        %2565 = vmatprep.subr.mxu0 0.0
        %2566 = vmatpush1.msra.mxu0 0.0
        %2567 = vmatprep.subr.mxu0 0.0
        %2568 = vmatpush1.msra.mxu0 0.0
        %2569 = vmatprep.subr.mxu0 0.0
        %2570 = vmatpush1.msra.mxu0 0.0
        %2571 = vmatprep.subr.mxu0 0.0
        %2572 = vmatpush1.msra.mxu0 0.0
        %2573 = vmatprep.subr.mxu0 0.0
        %2574 = vmatpush1.msra.mxu0 0.0
        %2575 = vmatprep.subr.mxu0 0.0
        %2576 = vmatpush1.msra.mxu0 0.0
        %2577 = vmatprep.subr.mxu0 0.0
        %2578 = vmatpush1.msra.mxu0 0.0
        %2579 = vmatprep.subr.mxu0 0.0
        %2580 = vmatpush1.msra.mxu0 0.0
        %2581 = vmatprep.subr.mxu0 0.0
        %2582 = vmatpush1.msra.mxu0 0.0
        %2583 = vmatprep.subr.mxu0 0.0
        %2584 = vmatpush1.msra.mxu0 0.0
        %2585 = vmatprep.subr.mxu0 0.0
        %2586 = vmatpush1.msra.mxu0 0.0
        %2587 = vmatprep.subr.mxu0 0.0
        %2588 = vmatpush1.msra.mxu0 0.0
        %2589 = vmatprep.subr.mxu0 0.0
        %2590 = vmatpush1.msra.mxu0 0.0
        %2591 = vmatprep.subr.mxu0 0.0
        %2592 = vmatpush1.msra.mxu0 0.0
        %2593 = vmatprep.subr.mxu0 0.0
        %2594 = vmatpush1.msra.mxu0 0.0
        %2595 = vmatprep.subr.mxu0 0.0
        %2596 = vmatpush1.msra.mxu0 0.0
        %2597 = vmatprep.subr.mxu0 0.0
        %2598 = vmatpush1.msra.mxu0 0.0
        %2599 = vmatprep.subr.mxu0 0.0
        %2600 = vmatpush1.msra.mxu0 0.0
        %2601 = vmatprep.subr.mxu0 0.0
        %2602 = vmatpush1.msra.mxu0 0.0
        %2603 = vmatprep.subr.mxu0 0.0
        %2604 = vmatpush1.msra.mxu0 0.0
        %2605 = vmatprep.subr.mxu0 0.0
        %2606 = vmatpush1.msra.mxu0 0.0
        %2607 = vmatprep.subr.mxu0 0.0
        %2608 = vmatpush1.msra.mxu0 0.0
        %2609 = vmatprep.subr.mxu0 0.0
        %2610 = vmatpush1.msra.mxu0 0.0
        %2611 = vmatprep.subr.mxu0 0.0
        %2612 = vmatpush1.msra.mxu0 0.0
        %2613 = vmatprep.mubr.f32.mxu0 0.0
        %2614 = vmatmul.mubr.f32.gmra.mrb[0].mxu0 %v2544
        %v2615 = vpop.f32.mrb[0].mxu0
        %v2616 = vadd.f32 %v2541, %v2615
        %v2617 = vpop.f32.mrb[0].mxu0
        %2618 = vmatprep.mubr.f32.mxu0 0.0
        %2619 = vmatmul.mubr.f32.gmra.mrb[0].mxu0 %v2547
        %v2620 = vpop.f32.mrb[0].mxu0
        %v2621 = vadd.f32 %v2541, %v2620
        %v2622 = vpop.f32.mrb[0].mxu0
        %2623 = vdwg.mxu0
        %v2624 = vld [vmem:[%s1273] sm:$0xff]
        %v2625 = vld [vmem:[%s1273 + $0x8] sm:$0xff]
        %v2626 = vld [vmem:[#allocation29] sm:$0xff]
        %v2627 = vld [vmem:[#allocation29 + $0x8] sm:$0xff]
        %v2628 = vld [vmem:[#allocation29 + $0x10] sm:$0xff]
        %v2629 = vld [vmem:[#allocation29 + $0x18] sm:$0xff]
        %v2630 = vld [vmem:[#allocation31] sm:$0x1]
        %v2632 = vlaneseq
        %v2633 = vshrl.u32 %v2632, 7
        %v2634 = vsub.s32 0, %v2633
        %v2635 = vrot.slane %v2630, %v2634
        %v2638 = vsel %vm1497, %v2624, 0
        %v2641 = vsel %vm1497, %v2625, 0
        %2643 = vmatprep.subr.mxu0 0.0
        %2644 = vmatpush1.msra.mxu0 %v2626
        %2645 = vmatprep.subr.mxu0 0.0
        %2646 = vmatpush1.msra.mxu0 %v2627
        %2647 = vmatprep.subr.mxu0 0.0
        %2648 = vmatpush1.msra.mxu0 %v2628
        %2649 = vmatprep.subr.mxu0 0.0
        %2650 = vmatpush1.msra.mxu0 %v2629
        %2651 = vmatprep.subr.mxu0 0.0
        %2652 = vmatpush1.msra.mxu0 0.0
        %2653 = vmatprep.subr.mxu0 0.0
        %2654 = vmatpush1.msra.mxu0 0.0
        %2655 = vmatprep.subr.mxu0 0.0
        %2656 = vmatpush1.msra.mxu0 0.0
        %2657 = vmatprep.subr.mxu0 0.0
        %2658 = vmatpush1.msra.mxu0 0.0
        %2659 = vmatprep.subr.mxu0 0.0
        %2660 = vmatpush1.msra.mxu0 0.0
        %2661 = vmatprep.subr.mxu0 0.0
        %2662 = vmatpush1.msra.mxu0 0.0
        %2663 = vmatprep.subr.mxu0 0.0
        %2664 = vmatpush1.msra.mxu0 0.0
        %2665 = vmatprep.subr.mxu0 0.0
        %2666 = vmatpush1.msra.mxu0 0.0
        %2667 = vmatprep.subr.mxu0 0.0
        %2668 = vmatpush1.msra.mxu0 0.0
        %2669 = vmatprep.subr.mxu0 0.0
        %2670 = vmatpush1.msra.mxu0 0.0
        %2671 = vmatprep.subr.mxu0 0.0
        %2672 = vmatpush1.msra.mxu0 0.0
        %2673 = vmatprep.subr.mxu0 0.0
        %2674 = vmatpush1.msra.mxu0 0.0
        %2675 = vmatprep.subr.mxu0 0.0
        %2676 = vmatpush1.msra.mxu0 0.0
        %2677 = vmatprep.subr.mxu0 0.0
        %2678 = vmatpush1.msra.mxu0 0.0
        %2679 = vmatprep.subr.mxu0 0.0
        %2680 = vmatpush1.msra.mxu0 0.0
        %2681 = vmatprep.subr.mxu0 0.0
        %2682 = vmatpush1.msra.mxu0 0.0
        %2683 = vmatprep.subr.mxu0 0.0
        %2684 = vmatpush1.msra.mxu0 0.0
        %2685 = vmatprep.subr.mxu0 0.0
        %2686 = vmatpush1.msra.mxu0 0.0
        %2687 = vmatprep.subr.mxu0 0.0
        %2688 = vmatpush1.msra.mxu0 0.0
        %2689 = vmatprep.subr.mxu0 0.0
        %2690 = vmatpush1.msra.mxu0 0.0
        %2691 = vmatprep.subr.mxu0 0.0
        %2692 = vmatpush1.msra.mxu0 0.0
        %2693 = vmatprep.subr.mxu0 0.0
        %2694 = vmatpush1.msra.mxu0 0.0
        %2695 = vmatprep.subr.mxu0 0.0
        %2696 = vmatpush1.msra.mxu0 0.0
        %2697 = vmatprep.subr.mxu0 0.0
        %2698 = vmatpush1.msra.mxu0 0.0
        %2699 = vmatprep.subr.mxu0 0.0
        %2700 = vmatpush1.msra.mxu0 0.0
        %2701 = vmatprep.subr.mxu0 0.0
        %2702 = vmatpush1.msra.mxu0 0.0
        %2703 = vmatprep.subr.mxu0 0.0
        %2704 = vmatpush1.msra.mxu0 0.0
        %2705 = vmatprep.subr.mxu0 0.0
        %2706 = vmatpush1.msra.mxu0 0.0
        %2707 = vmatprep.mubr.f32.mxu0 0.0
        %2708 = vmatmul.mubr.f32.gmra.mrb[0].mxu0 %v2638
        %v2709 = vpop.f32.mrb[0].mxu0
        %v2710 = vadd.f32 %v2635, %v2709
        %v2711 = vpop.f32.mrb[0].mxu0
        %2712 = vmatprep.mubr.f32.mxu0 0.0
        %2713 = vmatmul.mubr.f32.gmra.mrb[0].mxu0 %v2641
        %v2714 = vpop.f32.mrb[0].mxu0
        %v2715 = vadd.f32 %v2635, %v2714
        %v2716 = vpop.f32.mrb[0].mxu0
        %2717 = vdwg.mxu0
        %v2719 = vsel %vm1658, %v2527, 0
        %v2722 = vsel %vm1658, %v2616, 0
        %v2725 = vsel %vm1658, %v2621, 0
        %2727 = vmatprep.subr.mxu0 0.0
        %2728 = vmatpush1.xpose.msra.mxu0 %v2722
        %2729 = vmatprep.subr.mxu0 0.0
        %2730 = vmatpush1.xpose.msra.mxu0 %v2725
        %2731 = vmatprep.subr.mxu0 0.0
        %2732 = vmatpush1.xpose.msra.mxu0 0.0
        %2733 = vmatprep.subr.mxu0 0.0
        %2734 = vmatpush1.xpose.msra.mxu0 0.0
        %2735 = vmatprep.subr.mxu0 0.0
        %2736 = vmatpush1.xpose.msra.mxu0 0.0
        %2737 = vmatprep.subr.mxu0 0.0
        %2738 = vmatpush1.xpose.msra.mxu0 0.0
        %2739 = vmatprep.subr.mxu0 0.0
        %2740 = vmatpush1.xpose.msra.mxu0 0.0
        %2741 = vmatprep.subr.mxu0 0.0
        %2742 = vmatpush1.xpose.msra.mxu0 0.0
        %2743 = vmatprep.subr.mxu0 0.0
        %2744 = vmatpush1.xpose.msra.mxu0 0.0
        %2745 = vmatprep.subr.mxu0 0.0
        %2746 = vmatpush1.xpose.msra.mxu0 0.0
        %2747 = vmatprep.subr.mxu0 0.0
        %2748 = vmatpush1.xpose.msra.mxu0 0.0
        %2749 = vmatprep.subr.mxu0 0.0
        %2750 = vmatpush1.xpose.msra.mxu0 0.0
        %2751 = vmatprep.subr.mxu0 0.0
        %2752 = vmatpush1.xpose.msra.mxu0 0.0
        %2753 = vmatprep.subr.mxu0 0.0
        %2754 = vmatpush1.xpose.msra.mxu0 0.0
        %2755 = vmatprep.subr.mxu0 0.0
        %2756 = vmatpush1.xpose.msra.mxu0 0.0
        %2757 = vmatprep.subr.mxu0 0.0
        %2758 = vmatpush1.xpose.msra.mxu0 0.0
        %2759 = vmatprep.subr.mxu0 0.0
        %2760 = vmatpush1.xpose.msra.mxu0 0.0
        %2761 = vmatprep.subr.mxu0 0.0
        %2762 = vmatpush1.xpose.msra.mxu0 0.0
        %2763 = vmatprep.subr.mxu0 0.0
        %2764 = vmatpush1.xpose.msra.mxu0 0.0
        %2765 = vmatprep.subr.mxu0 0.0
        %2766 = vmatpush1.xpose.msra.mxu0 0.0
        %2767 = vmatprep.subr.mxu0 0.0
        %2768 = vmatpush1.xpose.msra.mxu0 0.0
        %2769 = vmatprep.subr.mxu0 0.0
        %2770 = vmatpush1.xpose.msra.mxu0 0.0
        %2771 = vmatprep.subr.mxu0 0.0
        %2772 = vmatpush1.xpose.msra.mxu0 0.0
        %2773 = vmatprep.subr.mxu0 0.0
        %2774 = vmatpush1.xpose.msra.mxu0 0.0
        %2775 = vmatprep.subr.mxu0 0.0
        %2776 = vmatpush1.xpose.msra.mxu0 0.0
        %2777 = vmatprep.subr.mxu0 0.0
        %2778 = vmatpush1.xpose.msra.mxu0 0.0
        %2779 = vmatprep.subr.mxu0 0.0
        %2780 = vmatpush1.xpose.msra.mxu0 0.0
        %2781 = vmatprep.subr.mxu0 0.0
        %2782 = vmatpush1.xpose.msra.mxu0 0.0
        %2783 = vmatprep.subr.mxu0 0.0
        %2784 = vmatpush1.xpose.msra.mxu0 0.0
        %2785 = vmatprep.subr.mxu0 0.0
        %2786 = vmatpush1.xpose.msra.mxu0 0.0
        %2787 = vmatprep.subr.mxu0 0.0
        %2788 = vmatpush1.xpose.msra.mxu0 0.0
        %2789 = vmatprep.subr.mxu0 0.0
        %2790 = vmatpush1.xpose.msra.mxu0 0.0
        %2791 = vmatprep.mubr.f32.mxu0 0.0
        %2792 = vmatmul.mubr.f32.gmra.mrb[0].mxu0 %v2719
        %v2793 = vpop.f32.mrb[0].mxu0
        %v2794 = vadd.f32 0.0, %v2793
        %v2795 = vpop.f32.mrb[0].mxu0
        %2796 = vdwg.mxu0
        %v2797 = vsel %vm2326, %v2794, -inf
        %2798 = vmax.xlane.f32.xlu0 %v2797
        %v2799 = vpop.xlane.xlu0 %2798
        %v2800 = vsub.f32 %v2794, %v2799
        %v2801 = vmul.f32 %v2800, 1.442695
        %v2802 = vpow.pop %v2801
        %v2803 = vsel %vm2326, %v2802, 0.0
        %2804 = vadd.xlane.f32.xlu0 %v2803
        %v2805 = vpop.xlane.xlu0 %2804
        %v2806 = vrcp.pop %v2805
        %v2807 = vmul.f32 %v2802, %v2806
        %v2809 = vsel %vm2326, %v2807, 0
        %2811 = vmatprep.subr.mxu0 0.0
        %2812 = vmatpush1.msra.mxu0 %v2710
        %2813 = vmatprep.subr.mxu0 0.0
        %2814 = vmatpush1.msra.mxu0 %v2715
        %2815 = vmatprep.subr.mxu0 0.0
        %2816 = vmatpush1.msra.mxu0 0.0
        %2817 = vmatprep.subr.mxu0 0.0
        %2818 = vmatpush1.msra.mxu0 0.0
        %2819 = vmatprep.subr.mxu0 0.0
        %2820 = vmatpush1.msra.mxu0 0.0
        %2821 = vmatprep.subr.mxu0 0.0
        %2822 = vmatpush1.msra.mxu0 0.0
        %2823 = vmatprep.subr.mxu0 0.0
        %2824 = vmatpush1.msra.mxu0 0.0
        %2825 = vmatprep.subr.mxu0 0.0
        %2826 = vmatpush1.msra.mxu0 0.0
        %2827 = vmatprep.subr.mxu0 0.0
        %2828 = vmatpush1.msra.mxu0 0.0
        %2829 = vmatprep.subr.mxu0 0.0
        %2830 = vmatpush1.msra.mxu0 0.0
        %2831 = vmatprep.subr.mxu0 0.0
        %2832 = vmatpush1.msra.mxu0 0.0
        %2833 = vmatprep.subr.mxu0 0.0
        %2834 = vmatpush1.msra.mxu0 0.0
        %2835 = vmatprep.subr.mxu0 0.0
        %2836 = vmatpush1.msra.mxu0 0.0
        %2837 = vmatprep.subr.mxu0 0.0
        %2838 = vmatpush1.msra.mxu0 0.0
        %2839 = vmatprep.subr.mxu0 0.0
        %2840 = vmatpush1.msra.mxu0 0.0
        %2841 = vmatprep.subr.mxu0 0.0
        %2842 = vmatpush1.msra.mxu0 0.0
        %2843 = vmatprep.subr.mxu0 0.0
        %2844 = vmatpush1.msra.mxu0 0.0
        %2845 = vmatprep.subr.mxu0 0.0
        %2846 = vmatpush1.msra.mxu0 0.0
        %2847 = vmatprep.subr.mxu0 0.0
        %2848 = vmatpush1.msra.mxu0 0.0
        %2849 = vmatprep.subr.mxu0 0.0
        %2850 = vmatpush1.msra.mxu0 0.0
        %2851 = vmatprep.subr.mxu0 0.0
        %2852 = vmatpush1.msra.mxu0 0.0
        %2853 = vmatprep.subr.mxu0 0.0
        %2854 = vmatpush1.msra.mxu0 0.0
        %2855 = vmatprep.subr.mxu0 0.0
        %2856 = vmatpush1.msra.mxu0 0.0
        %2857 = vmatprep.subr.mxu0 0.0
        %2858 = vmatpush1.msra.mxu0 0.0
        %2859 = vmatprep.subr.mxu0 0.0
        %2860 = vmatpush1.msra.mxu0 0.0
        %2861 = vmatprep.subr.mxu0 0.0
        %2862 = vmatpush1.msra.mxu0 0.0
        %2863 = vmatprep.subr.mxu0 0.0
        %2864 = vmatpush1.msra.mxu0 0.0
        %2865 = vmatprep.subr.mxu0 0.0
        %2866 = vmatpush1.msra.mxu0 0.0
        %2867 = vmatprep.subr.mxu0 0.0
        %2868 = vmatpush1.msra.mxu0 0.0
        %2869 = vmatprep.subr.mxu0 0.0
        %2870 = vmatpush1.msra.mxu0 0.0
        %2871 = vmatprep.subr.mxu0 0.0
        %2872 = vmatpush1.msra.mxu0 0.0
        %2873 = vmatprep.subr.mxu0 0.0
        %2874 = vmatpush1.msra.mxu0 0.0
        %2875 = vmatprep.mubr.f32.mxu0 0.0
        %2876 = vmatmul.mubr.f32.gmra.mrb[0].mxu0 %v2809
        %v2877 = vpop.f32.mrb[0].mxu0
        %v2878 = vadd.f32 0.0, %v2877
        %v2879 = vpop.f32.mrb[0].mxu0
        %2880 = vdwg.mxu0
        %2881 = vrot.lane.b32.xlu0 %v2527, 120
        %v2882 = vpop.permute.xlu0 %2881
        %2883 = vrot.lane.b32.xlu0 %v2616, 120
        %v2884 = vpop.permute.xlu0 %2883
        %2885 = vrot.lane.b32.xlu0 %v2621, 120
        %v2886 = vpop.permute.xlu0 %2885
        %v2887 = vsel %vm1658, %v2882, 0
        %v2889 = vsel %vm1658, %v2884, 0
        %v2891 = vsel %vm1658, %v2886, 0
        %2893 = vmatprep.subr.mxu0 0.0
        %2894 = vmatpush1.xpose.msra.mxu0 %v2889
        %2895 = vmatprep.subr.mxu0 0.0
        %2896 = vmatpush1.xpose.msra.mxu0 %v2891
        %2897 = vmatprep.subr.mxu0 0.0
        %2898 = vmatpush1.xpose.msra.mxu0 0.0
        %2899 = vmatprep.subr.mxu0 0.0
        %2900 = vmatpush1.xpose.msra.mxu0 0.0
        %2901 = vmatprep.subr.mxu0 0.0
        %2902 = vmatpush1.xpose.msra.mxu0 0.0
        %2903 = vmatprep.subr.mxu0 0.0
        %2904 = vmatpush1.xpose.msra.mxu0 0.0
        %2905 = vmatprep.subr.mxu0 0.0
        %2906 = vmatpush1.xpose.msra.mxu0 0.0
        %2907 = vmatprep.subr.mxu0 0.0
        %2908 = vmatpush1.xpose.msra.mxu0 0.0
        %2909 = vmatprep.subr.mxu0 0.0
        %2910 = vmatpush1.xpose.msra.mxu0 0.0
        %2911 = vmatprep.subr.mxu0 0.0
        %2912 = vmatpush1.xpose.msra.mxu0 0.0
        %2913 = vmatprep.subr.mxu0 0.0
        %2914 = vmatpush1.xpose.msra.mxu0 0.0
        %2915 = vmatprep.subr.mxu0 0.0
        %2916 = vmatpush1.xpose.msra.mxu0 0.0
        %2917 = vmatprep.subr.mxu0 0.0
        %2918 = vmatpush1.xpose.msra.mxu0 0.0
        %2919 = vmatprep.subr.mxu0 0.0
        %2920 = vmatpush1.xpose.msra.mxu0 0.0
        %2921 = vmatprep.subr.mxu0 0.0
        %2922 = vmatpush1.xpose.msra.mxu0 0.0
        %2923 = vmatprep.subr.mxu0 0.0
        %2924 = vmatpush1.xpose.msra.mxu0 0.0
        %2925 = vmatprep.subr.mxu0 0.0
        %2926 = vmatpush1.xpose.msra.mxu0 0.0
        %2927 = vmatprep.subr.mxu0 0.0
        %2928 = vmatpush1.xpose.msra.mxu0 0.0
        %2929 = vmatprep.subr.mxu0 0.0
        %2930 = vmatpush1.xpose.msra.mxu0 0.0
        %2931 = vmatprep.subr.mxu0 0.0
        %2932 = vmatpush1.xpose.msra.mxu0 0.0
        %2933 = vmatprep.subr.mxu0 0.0
        %2934 = vmatpush1.xpose.msra.mxu0 0.0
        %2935 = vmatprep.subr.mxu0 0.0
        %2936 = vmatpush1.xpose.msra.mxu0 0.0
        %2937 = vmatprep.subr.mxu0 0.0
        %2938 = vmatpush1.xpose.msra.mxu0 0.0
        %2939 = vmatprep.subr.mxu0 0.0
        %2940 = vmatpush1.xpose.msra.mxu0 0.0
        %2941 = vmatprep.subr.mxu0 0.0
        %2942 = vmatpush1.xpose.msra.mxu0 0.0
        %2943 = vmatprep.subr.mxu0 0.0
        %2944 = vmatpush1.xpose.msra.mxu0 0.0
        %2945 = vmatprep.subr.mxu0 0.0
        %2946 = vmatpush1.xpose.msra.mxu0 0.0
        %2947 = vmatprep.subr.mxu0 0.0
        %2948 = vmatpush1.xpose.msra.mxu0 0.0
        %2949 = vmatprep.subr.mxu0 0.0
        %2950 = vmatpush1.xpose.msra.mxu0 0.0
        %2951 = vmatprep.subr.mxu0 0.0
        %2952 = vmatpush1.xpose.msra.mxu0 0.0
        %2953 = vmatprep.subr.mxu0 0.0
        %2954 = vmatpush1.xpose.msra.mxu0 0.0
        %2955 = vmatprep.subr.mxu0 0.0
        %2956 = vmatpush1.xpose.msra.mxu0 0.0
        %2957 = vmatprep.mubr.f32.mxu0 0.0
        %2958 = vmatmul.mubr.f32.gmra.mrb[0].mxu0 %v2887
        %v2959 = vpop.f32.mrb[0].mxu0
        %v2960 = vadd.f32 0.0, %v2959
        %v2961 = vpop.f32.mrb[0].mxu0
        %2962 = vdwg.mxu0
        %v2963 = vsel %vm2326, %v2960, -inf
        %2964 = vmax.xlane.f32.xlu0 %v2963
        %v2965 = vpop.xlane.xlu0 %2964
        %v2966 = vsub.f32 %v2960, %v2965
        %v2967 = vmul.f32 %v2966, 1.442695
        %v2968 = vpow.pop %v2967
        %v2969 = vsel %vm2326, %v2968, 0.0
        %2970 = vadd.xlane.f32.xlu0 %v2969
        %v2971 = vpop.xlane.xlu0 %2970
        %v2972 = vrcp.pop %v2971
        %v2973 = vmul.f32 %v2968, %v2972
        %2976 = vrot.lane.b32.xlu0 %v2710, 120
        %v2977 = vpop.permute.xlu0 %2976
        %2978 = vrot.lane.b32.xlu0 %v2715, 120
        %v2979 = vpop.permute.xlu0 %2978
        %v2983 = vsel %vm2326, %v2973, 0
        %2985 = vmatprep.subr.mxu0 0.0
        %2986 = vmatpush1.msra.mxu0 %v2977
        %2987 = vmatprep.subr.mxu0 0.0
        %2988 = vmatpush1.msra.mxu0 %v2979
        %2989 = vmatprep.subr.mxu0 0.0
        %2990 = vmatpush1.msra.mxu0 0.0
        %2991 = vmatprep.subr.mxu0 0.0
        %2992 = vmatpush1.msra.mxu0 0.0
        %2993 = vmatprep.subr.mxu0 0.0
        %2994 = vmatpush1.msra.mxu0 0.0
        %2995 = vmatprep.subr.mxu0 0.0
        %2996 = vmatpush1.msra.mxu0 0.0
        %2997 = vmatprep.subr.mxu0 0.0
        %2998 = vmatpush1.msra.mxu0 0.0
        %2999 = vmatprep.subr.mxu0 0.0
        %3000 = vmatpush1.msra.mxu0 0.0
        %3001 = vmatprep.subr.mxu0 0.0
        %3002 = vmatpush1.msra.mxu0 0.0
        %3003 = vmatprep.subr.mxu0 0.0
        %3004 = vmatpush1.msra.mxu0 0.0
        %3005 = vmatprep.subr.mxu0 0.0
        %3006 = vmatpush1.msra.mxu0 0.0
        %3007 = vmatprep.subr.mxu0 0.0
        %3008 = vmatpush1.msra.mxu0 0.0
        %3009 = vmatprep.subr.mxu0 0.0
        %3010 = vmatpush1.msra.mxu0 0.0
        %3011 = vmatprep.subr.mxu0 0.0
        %3012 = vmatpush1.msra.mxu0 0.0
        %3013 = vmatprep.subr.mxu0 0.0
        %3014 = vmatpush1.msra.mxu0 0.0
        %3015 = vmatprep.subr.mxu0 0.0
        %3016 = vmatpush1.msra.mxu0 0.0
        %3017 = vmatprep.subr.mxu0 0.0
        %3018 = vmatpush1.msra.mxu0 0.0
        %3019 = vmatprep.subr.mxu0 0.0
        %3020 = vmatpush1.msra.mxu0 0.0
        %3021 = vmatprep.subr.mxu0 0.0
        %3022 = vmatpush1.msra.mxu0 0.0
        %3023 = vmatprep.subr.mxu0 0.0
        %3024 = vmatpush1.msra.mxu0 0.0
        %3025 = vmatprep.subr.mxu0 0.0
        %3026 = vmatpush1.msra.mxu0 0.0
        %3027 = vmatprep.subr.mxu0 0.0
        %3028 = vmatpush1.msra.mxu0 0.0
        %3029 = vmatprep.subr.mxu0 0.0
        %3030 = vmatpush1.msra.mxu0 0.0
        %3031 = vmatprep.subr.mxu0 0.0
        %3032 = vmatpush1.msra.mxu0 0.0
        %3033 = vmatprep.subr.mxu0 0.0
        %3034 = vmatpush1.msra.mxu0 0.0
        %3035 = vmatprep.subr.mxu0 0.0
        %3036 = vmatpush1.msra.mxu0 0.0
        %3037 = vmatprep.subr.mxu0 0.0
        %3038 = vmatpush1.msra.mxu0 0.0
        %3039 = vmatprep.subr.mxu0 0.0
        %3040 = vmatpush1.msra.mxu0 0.0
        %3041 = vmatprep.subr.mxu0 0.0
        %3042 = vmatpush1.msra.mxu0 0.0
        %3043 = vmatprep.subr.mxu0 0.0
        %3044 = vmatpush1.msra.mxu0 0.0
        %3045 = vmatprep.subr.mxu0 0.0
        %3046 = vmatpush1.msra.mxu0 0.0
        %3047 = vmatprep.subr.mxu0 0.0
        %3048 = vmatpush1.msra.mxu0 0.0
        %3049 = vmatprep.mubr.f32.mxu0 0.0
        %3050 = vmatmul.mubr.f32.gmra.mrb[0].mxu0 %v2983
        %v3051 = vpop.f32.mrb[0].mxu0
        %v3052 = vadd.f32 0.0, %v3051
        %v3053 = vpop.f32.mrb[0].mxu0
        %3054 = vdwg.mxu0
        %3055 = vrot.lane.b32.xlu0 %v2527, 112
        %v3056 = vpop.permute.xlu0 %3055
        %3057 = vrot.lane.b32.xlu0 %v2616, 112
        %v3058 = vpop.permute.xlu0 %3057
        %3059 = vrot.lane.b32.xlu0 %v2621, 112
        %v3060 = vpop.permute.xlu0 %3059
        %v3061 = vsel %vm1658, %v3056, 0
        %v3063 = vsel %vm1658, %v3058, 0
        %v3065 = vsel %vm1658, %v3060, 0
        %3067 = vmatprep.subr.mxu0 0.0
        %3068 = vmatpush1.xpose.msra.mxu0 %v3063
        %3069 = vmatprep.subr.mxu0 0.0
        %3070 = vmatpush1.xpose.msra.mxu0 %v3065
        %3071 = vmatprep.subr.mxu0 0.0
        %3072 = vmatpush1.xpose.msra.mxu0 0.0
        %3073 = vmatprep.subr.mxu0 0.0
        %3074 = vmatpush1.xpose.msra.mxu0 0.0
        %3075 = vmatprep.subr.mxu0 0.0
        %3076 = vmatpush1.xpose.msra.mxu0 0.0
        %3077 = vmatprep.subr.mxu0 0.0
        %3078 = vmatpush1.xpose.msra.mxu0 0.0
        %3079 = vmatprep.subr.mxu0 0.0
        %3080 = vmatpush1.xpose.msra.mxu0 0.0
        %3081 = vmatprep.subr.mxu0 0.0
        %3082 = vmatpush1.xpose.msra.mxu0 0.0
        %3083 = vmatprep.subr.mxu0 0.0
        %3084 = vmatpush1.xpose.msra.mxu0 0.0
        %3085 = vmatprep.subr.mxu0 0.0
        %3086 = vmatpush1.xpose.msra.mxu0 0.0
        %3087 = vmatprep.subr.mxu0 0.0
        %3088 = vmatpush1.xpose.msra.mxu0 0.0
        %3089 = vmatprep.subr.mxu0 0.0
        %3090 = vmatpush1.xpose.msra.mxu0 0.0
        %3091 = vmatprep.subr.mxu0 0.0
        %3092 = vmatpush1.xpose.msra.mxu0 0.0
        %3093 = vmatprep.subr.mxu0 0.0
        %3094 = vmatpush1.xpose.msra.mxu0 0.0
        %3095 = vmatprep.subr.mxu0 0.0
        %3096 = vmatpush1.xpose.msra.mxu0 0.0
        %3097 = vmatprep.subr.mxu0 0.0
        %3098 = vmatpush1.xpose.msra.mxu0 0.0
        %3099 = vmatprep.subr.mxu0 0.0
        %3100 = vmatpush1.xpose.msra.mxu0 0.0
        %3101 = vmatprep.subr.mxu0 0.0
        %3102 = vmatpush1.xpose.msra.mxu0 0.0
        %3103 = vmatprep.subr.mxu0 0.0
        %3104 = vmatpush1.xpose.msra.mxu0 0.0
        %3105 = vmatprep.subr.mxu0 0.0
        %3106 = vmatpush1.xpose.msra.mxu0 0.0
        %3107 = vmatprep.subr.mxu0 0.0
        %3108 = vmatpush1.xpose.msra.mxu0 0.0
        %3109 = vmatprep.subr.mxu0 0.0
        %3110 = vmatpush1.xpose.msra.mxu0 0.0
        %3111 = vmatprep.subr.mxu0 0.0
        %3112 = vmatpush1.xpose.msra.mxu0 0.0
        %3113 = vmatprep.subr.mxu0 0.0
        %3114 = vmatpush1.xpose.msra.mxu0 0.0
        %3115 = vmatprep.subr.mxu0 0.0
        %3116 = vmatpush1.xpose.msra.mxu0 0.0
        %3117 = vmatprep.subr.mxu0 0.0
        %3118 = vmatpush1.xpose.msra.mxu0 0.0
        %3119 = vmatprep.subr.mxu0 0.0
        %3120 = vmatpush1.xpose.msra.mxu0 0.0
        %3121 = vmatprep.subr.mxu0 0.0
        %3122 = vmatpush1.xpose.msra.mxu0 0.0
        %3123 = vmatprep.subr.mxu0 0.0
        %3124 = vmatpush1.xpose.msra.mxu0 0.0
        %3125 = vmatprep.subr.mxu0 0.0
        %3126 = vmatpush1.xpose.msra.mxu0 0.0
        %3127 = vmatprep.subr.mxu0 0.0
        %3128 = vmatpush1.xpose.msra.mxu0 0.0
        %3129 = vmatprep.subr.mxu0 0.0
        %3130 = vmatpush1.xpose.msra.mxu0 0.0
        %3131 = vmatprep.mubr.f32.mxu0 0.0
        %3132 = vmatmul.mubr.f32.gmra.mrb[0].mxu0 %v3061
        %v3133 = vpop.f32.mrb[0].mxu0
        %v3134 = vadd.f32 0.0, %v3133
        %v3135 = vpop.f32.mrb[0].mxu0
        %3136 = vdwg.mxu0
        %v3137 = vsel %vm2326, %v3134, -inf
        %3138 = vmax.xlane.f32.xlu0 %v3137
        %v3139 = vpop.xlane.xlu0 %3138
        %v3140 = vsub.f32 %v3134, %v3139
        %v3141 = vmul.f32 %v3140, 1.442695
        %v3142 = vpow.pop %v3141
        %v3143 = vsel %vm2326, %v3142, 0.0
        %3144 = vadd.xlane.f32.xlu0 %v3143
        %v3145 = vpop.xlane.xlu0 %3144
        %v3146 = vrcp.pop %v3145
        %v3147 = vmul.f32 %v3142, %v3146
        %3148 = vrot.lane.b32.xlu0 %v2710, 112
        %v3149 = vpop.permute.xlu0 %3148
        %3150 = vrot.lane.b32.xlu0 %v2715, 112
        %v3151 = vpop.permute.xlu0 %3150
        %v3155 = vsel %vm2326, %v3147, 0
        %3157 = vmatprep.subr.mxu0 0.0
        %3158 = vmatpush1.msra.mxu0 %v3149
        %3159 = vmatprep.subr.mxu0 0.0
        %3160 = vmatpush1.msra.mxu0 %v3151
        %3161 = vmatprep.subr.mxu0 0.0
        %3162 = vmatpush1.msra.mxu0 0.0
        %3163 = vmatprep.subr.mxu0 0.0
        %3164 = vmatpush1.msra.mxu0 0.0
        %3165 = vmatprep.subr.mxu0 0.0
        %3166 = vmatpush1.msra.mxu0 0.0
        %3167 = vmatprep.subr.mxu0 0.0
        %3168 = vmatpush1.msra.mxu0 0.0
        %3169 = vmatprep.subr.mxu0 0.0
        %3170 = vmatpush1.msra.mxu0 0.0
        %3171 = vmatprep.subr.mxu0 0.0
        %3172 = vmatpush1.msra.mxu0 0.0
        %3173 = vmatprep.subr.mxu0 0.0
        %3174 = vmatpush1.msra.mxu0 0.0
        %3175 = vmatprep.subr.mxu0 0.0
        %3176 = vmatpush1.msra.mxu0 0.0
        %3177 = vmatprep.subr.mxu0 0.0
        %3178 = vmatpush1.msra.mxu0 0.0
        %3179 = vmatprep.subr.mxu0 0.0
        %3180 = vmatpush1.msra.mxu0 0.0
        %3181 = vmatprep.subr.mxu0 0.0
        %3182 = vmatpush1.msra.mxu0 0.0
        %3183 = vmatprep.subr.mxu0 0.0
        %3184 = vmatpush1.msra.mxu0 0.0
        %3185 = vmatprep.subr.mxu0 0.0
        %3186 = vmatpush1.msra.mxu0 0.0
        %3187 = vmatprep.subr.mxu0 0.0
        %3188 = vmatpush1.msra.mxu0 0.0
        %3189 = vmatprep.subr.mxu0 0.0
        %3190 = vmatpush1.msra.mxu0 0.0
        %3191 = vmatprep.subr.mxu0 0.0
        %3192 = vmatpush1.msra.mxu0 0.0
        %3193 = vmatprep.subr.mxu0 0.0
        %3194 = vmatpush1.msra.mxu0 0.0
        %3195 = vmatprep.subr.mxu0 0.0
        %3196 = vmatpush1.msra.mxu0 0.0
        %3197 = vmatprep.subr.mxu0 0.0
        %3198 = vmatpush1.msra.mxu0 0.0
        %3199 = vmatprep.subr.mxu0 0.0
        %3200 = vmatpush1.msra.mxu0 0.0
        %3201 = vmatprep.subr.mxu0 0.0
        %3202 = vmatpush1.msra.mxu0 0.0
        %3203 = vmatprep.subr.mxu0 0.0
        %3204 = vmatpush1.msra.mxu0 0.0
        %3205 = vmatprep.subr.mxu0 0.0
        %3206 = vmatpush1.msra.mxu0 0.0
        %3207 = vmatprep.subr.mxu0 0.0
        %3208 = vmatpush1.msra.mxu0 0.0
        %3209 = vmatprep.subr.mxu0 0.0
        %3210 = vmatpush1.msra.mxu0 0.0
        %3211 = vmatprep.subr.mxu0 0.0
        %3212 = vmatpush1.msra.mxu0 0.0
        %3213 = vmatprep.subr.mxu0 0.0
        %3214 = vmatpush1.msra.mxu0 0.0
        %3215 = vmatprep.subr.mxu0 0.0
        %3216 = vmatpush1.msra.mxu0 0.0
        %3217 = vmatprep.subr.mxu0 0.0
        %3218 = vmatpush1.msra.mxu0 0.0
        %3219 = vmatprep.subr.mxu0 0.0
        %3220 = vmatpush1.msra.mxu0 0.0
        %3221 = vmatprep.mubr.f32.mxu0 0.0
        %3222 = vmatmul.mubr.f32.gmra.mrb[0].mxu0 %v3155
        %v3223 = vpop.f32.mrb[0].mxu0
        %v3224 = vadd.f32 0.0, %v3223
        %v3225 = vpop.f32.mrb[0].mxu0
        %3226 = vdwg.mxu0
        %3227 = vrot.lane.b32.xlu0 %v2527, 104
        %v3228 = vpop.permute.xlu0 %3227
        %3229 = vrot.lane.b32.xlu0 %v2616, 104
        %v3230 = vpop.permute.xlu0 %3229
        %3231 = vrot.lane.b32.xlu0 %v2621, 104
        %v3232 = vpop.permute.xlu0 %3231
        %v3233 = vsel %vm1658, %v3228, 0
        %v3235 = vsel %vm1658, %v3230, 0
        %v3237 = vsel %vm1658, %v3232, 0
        %3239 = vmatprep.subr.mxu0 0.0
        %3240 = vmatpush1.xpose.msra.mxu0 %v3235
        %3241 = vmatprep.subr.mxu0 0.0
        %3242 = vmatpush1.xpose.msra.mxu0 %v3237
        %3243 = vmatprep.subr.mxu0 0.0
        %3244 = vmatpush1.xpose.msra.mxu0 0.0
        %3245 = vmatprep.subr.mxu0 0.0
        %3246 = vmatpush1.xpose.msra.mxu0 0.0
        %3247 = vmatprep.subr.mxu0 0.0
        %3248 = vmatpush1.xpose.msra.mxu0 0.0
        %3249 = vmatprep.subr.mxu0 0.0
        %3250 = vmatpush1.xpose.msra.mxu0 0.0
        %3251 = vmatprep.subr.mxu0 0.0
        %3252 = vmatpush1.xpose.msra.mxu0 0.0
        %3253 = vmatprep.subr.mxu0 0.0
        %3254 = vmatpush1.xpose.msra.mxu0 0.0
        %3255 = vmatprep.subr.mxu0 0.0
        %3256 = vmatpush1.xpose.msra.mxu0 0.0
        %3257 = vmatprep.subr.mxu0 0.0
        %3258 = vmatpush1.xpose.msra.mxu0 0.0
        %3259 = vmatprep.subr.mxu0 0.0
        %3260 = vmatpush1.xpose.msra.mxu0 0.0
        %3261 = vmatprep.subr.mxu0 0.0
        %3262 = vmatpush1.xpose.msra.mxu0 0.0
        %3263 = vmatprep.subr.mxu0 0.0
        %3264 = vmatpush1.xpose.msra.mxu0 0.0
        %3265 = vmatprep.subr.mxu0 0.0
        %3266 = vmatpush1.xpose.msra.mxu0 0.0
        %3267 = vmatprep.subr.mxu0 0.0
        %3268 = vmatpush1.xpose.msra.mxu0 0.0
        %3269 = vmatprep.subr.mxu0 0.0
        %3270 = vmatpush1.xpose.msra.mxu0 0.0
        %3271 = vmatprep.subr.mxu0 0.0
        %3272 = vmatpush1.xpose.msra.mxu0 0.0
        %3273 = vmatprep.subr.mxu0 0.0
        %3274 = vmatpush1.xpose.msra.mxu0 0.0
        %3275 = vmatprep.subr.mxu0 0.0
        %3276 = vmatpush1.xpose.msra.mxu0 0.0
        %3277 = vmatprep.subr.mxu0 0.0
        %3278 = vmatpush1.xpose.msra.mxu0 0.0
        %3279 = vmatprep.subr.mxu0 0.0
        %3280 = vmatpush1.xpose.msra.mxu0 0.0
        %3281 = vmatprep.subr.mxu0 0.0
        %3282 = vmatpush1.xpose.msra.mxu0 0.0
        %3283 = vmatprep.subr.mxu0 0.0
        %3284 = vmatpush1.xpose.msra.mxu0 0.0
        %3285 = vmatprep.subr.mxu0 0.0
        %3286 = vmatpush1.xpose.msra.mxu0 0.0
        %3287 = vmatprep.subr.mxu0 0.0
        %3288 = vmatpush1.xpose.msra.mxu0 0.0
        %3289 = vmatprep.subr.mxu0 0.0
        %3290 = vmatpush1.xpose.msra.mxu0 0.0
        %3291 = vmatprep.subr.mxu0 0.0
        %3292 = vmatpush1.xpose.msra.mxu0 0.0
        %3293 = vmatprep.subr.mxu0 0.0
        %3294 = vmatpush1.xpose.msra.mxu0 0.0
        %3295 = vmatprep.subr.mxu0 0.0
        %3296 = vmatpush1.xpose.msra.mxu0 0.0
        %3297 = vmatprep.subr.mxu0 0.0
        %3298 = vmatpush1.xpose.msra.mxu0 0.0
        %3299 = vmatprep.subr.mxu0 0.0
        %3300 = vmatpush1.xpose.msra.mxu0 0.0
        %3301 = vmatprep.subr.mxu0 0.0
        %3302 = vmatpush1.xpose.msra.mxu0 0.0
        %3303 = vmatprep.mubr.f32.mxu0 0.0
        %3304 = vmatmul.mubr.f32.gmra.mrb[0].mxu0 %v3233
        %v3305 = vpop.f32.mrb[0].mxu0
        %v3306 = vadd.f32 0.0, %v3305
        %v3307 = vpop.f32.mrb[0].mxu0
        %3308 = vdwg.mxu0
        %v3309 = vsel %vm2326, %v3306, -inf
        %3310 = vmax.xlane.f32.xlu0 %v3309
        %v3311 = vpop.xlane.xlu0 %3310
        %v3312 = vsub.f32 %v3306, %v3311
        %v3313 = vmul.f32 %v3312, 1.442695
        %v3314 = vpow.pop %v3313
        %v3315 = vsel %vm2326, %v3314, 0.0
        %3316 = vadd.xlane.f32.xlu0 %v3315
        %v3317 = vpop.xlane.xlu0 %3316
        %v3318 = vrcp.pop %v3317
        %v3319 = vmul.f32 %v3314, %v3318
        %3320 = vrot.lane.b32.xlu0 %v2710, 104
        %v3321 = vpop.permute.xlu0 %3320
        %3322 = vrot.lane.b32.xlu0 %v2715, 104
        %v3323 = vpop.permute.xlu0 %3322
        %v3327 = vsel %vm2326, %v3319, 0
        %3329 = vmatprep.subr.mxu0 0.0
        %3330 = vmatpush1.msra.mxu0 %v3321
        %3331 = vmatprep.subr.mxu0 0.0
        %3332 = vmatpush1.msra.mxu0 %v3323
        %3333 = vmatprep.subr.mxu0 0.0
        %3334 = vmatpush1.msra.mxu0 0.0
        %3335 = vmatprep.subr.mxu0 0.0
        %3336 = vmatpush1.msra.mxu0 0.0
        %3337 = vmatprep.subr.mxu0 0.0
        %3338 = vmatpush1.msra.mxu0 0.0
        %3339 = vmatprep.subr.mxu0 0.0
        %3340 = vmatpush1.msra.mxu0 0.0
        %3341 = vmatprep.subr.mxu0 0.0
        %3342 = vmatpush1.msra.mxu0 0.0
        %3343 = vmatprep.subr.mxu0 0.0
        %3344 = vmatpush1.msra.mxu0 0.0
        %3345 = vmatprep.subr.mxu0 0.0
        %3346 = vmatpush1.msra.mxu0 0.0
        %3347 = vmatprep.subr.mxu0 0.0
        %3348 = vmatpush1.msra.mxu0 0.0
        %3349 = vmatprep.subr.mxu0 0.0
        %3350 = vmatpush1.msra.mxu0 0.0
        %3351 = vmatprep.subr.mxu0 0.0
        %3352 = vmatpush1.msra.mxu0 0.0
        %3353 = vmatprep.subr.mxu0 0.0
        %3354 = vmatpush1.msra.mxu0 0.0
        %3355 = vmatprep.subr.mxu0 0.0
        %3356 = vmatpush1.msra.mxu0 0.0
        %3357 = vmatprep.subr.mxu0 0.0
        %3358 = vmatpush1.msra.mxu0 0.0
        %3359 = vmatprep.subr.mxu0 0.0
        %3360 = vmatpush1.msra.mxu0 0.0
        %3361 = vmatprep.subr.mxu0 0.0
        %3362 = vmatpush1.msra.mxu0 0.0
        %3363 = vmatprep.subr.mxu0 0.0
        %3364 = vmatpush1.msra.mxu0 0.0
        %3365 = vmatprep.subr.mxu0 0.0
        %3366 = vmatpush1.msra.mxu0 0.0
        %3367 = vmatprep.subr.mxu0 0.0
        %3368 = vmatpush1.msra.mxu0 0.0
        %3369 = vmatprep.subr.mxu0 0.0
        %3370 = vmatpush1.msra.mxu0 0.0
        %3371 = vmatprep.subr.mxu0 0.0
        %3372 = vmatpush1.msra.mxu0 0.0
        %3373 = vmatprep.subr.mxu0 0.0
        %3374 = vmatpush1.msra.mxu0 0.0
        %3375 = vmatprep.subr.mxu0 0.0
        %3376 = vmatpush1.msra.mxu0 0.0
        %3377 = vmatprep.subr.mxu0 0.0
        %3378 = vmatpush1.msra.mxu0 0.0
        %3379 = vmatprep.subr.mxu0 0.0
        %3380 = vmatpush1.msra.mxu0 0.0
        %3381 = vmatprep.subr.mxu0 0.0
        %3382 = vmatpush1.msra.mxu0 0.0
        %3383 = vmatprep.subr.mxu0 0.0
        %3384 = vmatpush1.msra.mxu0 0.0
        %3385 = vmatprep.subr.mxu0 0.0
        %3386 = vmatpush1.msra.mxu0 0.0
        %3387 = vmatprep.subr.mxu0 0.0
        %3388 = vmatpush1.msra.mxu0 0.0
        %3389 = vmatprep.subr.mxu0 0.0
        %3390 = vmatpush1.msra.mxu0 0.0
        %3391 = vmatprep.subr.mxu0 0.0
        %3392 = vmatpush1.msra.mxu0 0.0
        %3393 = vmatprep.mubr.f32.mxu0 0.0
        %3394 = vmatmul.mubr.f32.gmra.mrb[0].mxu0 %v3327
        %v3395 = vpop.f32.mrb[0].mxu0
        %v3396 = vadd.f32 0.0, %v3395
        %v3397 = vpop.f32.mrb[0].mxu0
        %3398 = vdwg.mxu0
        %3400 = vrot.lane.b32.xlu0 %v3052, 8
        %v3401 = vpop.permute.xlu0 %3400
        %3404 = vrot.lane.b32.xlu0 %v3224, 16
        %v3405 = vpop.permute.xlu0 %3404
        %3408 = vrot.lane.b32.xlu0 %v3396, 24
        %v3409 = vpop.permute.xlu0 %3408
        %v3411 = vsel %vm1658, %v2878, %v3401
        %v3412 = vsel %vm2326, %v3411, %v3405
        %v3413 = vsel %vm2328, %v3412, %v3409
        %v3414 = vld [vmem:[#allocation32] sm:$0xff]
        %v3415 = vld [vmem:[#allocation32 + $0x8] sm:$0xff]
        %v3416 = vld [vmem:[#allocation32 + $0x10] sm:$0xff]
        %v3417 = vld [vmem:[#allocation32 + $0x18] sm:$0xff]
        %v3418 = vld [vmem:[#allocation34] sm:$0x1]
        %v3420 = vlaneseq
        %v3421 = vshrl.u32 %v3420, 7
        %v3422 = vsub.s32 0, %v3421
        %v3423 = vrot.slane %v3418, %v3422
        %v3426 = vsel %vm1497, %v3413, 0
        %3428 = vmatprep.subr.mxu0 0.0
        %3429 = vmatpush1.msra.mxu0 %v3414
        %3430 = vmatprep.subr.mxu0 0.0
        %3431 = vmatpush1.msra.mxu0 %v3415
        %3432 = vmatprep.subr.mxu0 0.0
        %3433 = vmatpush1.msra.mxu0 %v3416
        %3434 = vmatprep.subr.mxu0 0.0
        %3435 = vmatpush1.msra.mxu0 %v3417
        %3436 = vmatprep.subr.mxu0 0.0
        %3437 = vmatpush1.msra.mxu0 0.0
        %3438 = vmatprep.subr.mxu0 0.0
        %3439 = vmatpush1.msra.mxu0 0.0
        %3440 = vmatprep.subr.mxu0 0.0
        %3441 = vmatpush1.msra.mxu0 0.0
        %3442 = vmatprep.subr.mxu0 0.0
        %3443 = vmatpush1.msra.mxu0 0.0
        %3444 = vmatprep.subr.mxu0 0.0
        %3445 = vmatpush1.msra.mxu0 0.0
        %3446 = vmatprep.subr.mxu0 0.0
        %3447 = vmatpush1.msra.mxu0 0.0
        %3448 = vmatprep.subr.mxu0 0.0
        %3449 = vmatpush1.msra.mxu0 0.0
        %3450 = vmatprep.subr.mxu0 0.0
        %3451 = vmatpush1.msra.mxu0 0.0
        %3452 = vmatprep.subr.mxu0 0.0
        %3453 = vmatpush1.msra.mxu0 0.0
        %3454 = vmatprep.subr.mxu0 0.0
        %3455 = vmatpush1.msra.mxu0 0.0
        %3456 = vmatprep.subr.mxu0 0.0
        %3457 = vmatpush1.msra.mxu0 0.0
        %3458 = vmatprep.subr.mxu0 0.0
        %3459 = vmatpush1.msra.mxu0 0.0
        %3460 = vmatprep.subr.mxu0 0.0
        %3461 = vmatpush1.msra.mxu0 0.0
        %3462 = vmatprep.subr.mxu0 0.0
        %3463 = vmatpush1.msra.mxu0 0.0
        %3464 = vmatprep.subr.mxu0 0.0
        %3465 = vmatpush1.msra.mxu0 0.0
        %3466 = vmatprep.subr.mxu0 0.0
        %3467 = vmatpush1.msra.mxu0 0.0
        %3468 = vmatprep.subr.mxu0 0.0
        %3469 = vmatpush1.msra.mxu0 0.0
        %3470 = vmatprep.subr.mxu0 0.0
        %3471 = vmatpush1.msra.mxu0 0.0
        %3472 = vmatprep.subr.mxu0 0.0
        %3473 = vmatpush1.msra.mxu0 0.0
        %3474 = vmatprep.subr.mxu0 0.0
        %3475 = vmatpush1.msra.mxu0 0.0
        %3476 = vmatprep.subr.mxu0 0.0
        %3477 = vmatpush1.msra.mxu0 0.0
        %3478 = vmatprep.subr.mxu0 0.0
        %3479 = vmatpush1.msra.mxu0 0.0
        %3480 = vmatprep.subr.mxu0 0.0
        %3481 = vmatpush1.msra.mxu0 0.0
        %3482 = vmatprep.subr.mxu0 0.0
        %3483 = vmatpush1.msra.mxu0 0.0
        %3484 = vmatprep.subr.mxu0 0.0
        %3485 = vmatpush1.msra.mxu0 0.0
        %3486 = vmatprep.subr.mxu0 0.0
        %3487 = vmatpush1.msra.mxu0 0.0
        %3488 = vmatprep.subr.mxu0 0.0
        %3489 = vmatpush1.msra.mxu0 0.0
        %3490 = vmatprep.subr.mxu0 0.0
        %3491 = vmatpush1.msra.mxu0 0.0
        %3492 = vmatprep.mubr.f32.mxu0 0.0
        %3493 = vmatmul.mubr.f32.gmra.mrb[0].mxu0 %v3426
        %v3494 = vpop.f32.mrb[0].mxu0
        %v3495 = vadd.f32 %v3423, %v3494
        %v3496 = vpop.f32.mrb[0].mxu0
        %3497 = vdwg.mxu0
        %v3498 = vadd.f32 %v2444, %v3495
        %v3499 = vld [vmem:[#allocation35] sm:$0x1]
        %v3500 = vld [vmem:[#allocation37] sm:$0x1]
        %v3501 = vsel %vm1497, %v3498, 0.0
        %3502 = vadd.xlane.f32.xlu0 %v3501
        %v3503 = vpop.xlane.xlu0 %3502
        %v3504 = vmul.f32 %v3503, %v2420
        %v3505 = vsub.f32 %v3498, %v3504
        %v3506 = vmul.f32 %v3505, %v3505
        %v3507 = vsel %vm1497, %v3506, 0.0
        %3508 = vadd.xlane.f32.xlu0 %v3507
        %v3509 = vpop.xlane.xlu0 %3508
        %v3510 = vmul.f32 %v3509, %v2420
        %v3511 = vadd.f32 %v3510, 1e-05
        %v3512 = vrsqrt.pop %v3511
        %v3513 = vmul.f32 %v3505, %v3512
        %v3515 = vlaneseq
        %v3516 = vshrl.u32 %v3515, 7
        %v3517 = vsub.s32 0, %v3516
        %v3518 = vrot.slane %v3499, %v3517
        %v3520 = vmul.f32 %v3513, %v3518
        %v3522 = vlaneseq
        %v3523 = vshrl.u32 %v3522, 7
        %v3524 = vsub.s32 0, %v3523
        %v3525 = vrot.slane %v3500, %v3524
        %v3527 = vadd.f32 %v3520, %v3525
        %v3528 = vld [vmem:[#allocation38] sm:$0xff]
        %v3529 = vld [vmem:[#allocation38 + $0x8] sm:$0xff]
        %v3530 = vld [vmem:[#allocation38 + $0x10] sm:$0xff]
        %v3531 = vld [vmem:[#allocation38 + $0x18] sm:$0xff]
        %v3532 = vld [vmem:[#allocation40] sm:$0x1]
        %v3534 = vlaneseq
        %v3535 = vshrl.u32 %v3534, 7
        %v3536 = vsub.s32 0, %v3535
        %v3537 = vrot.slane %v3532, %v3536
        %v3540 = vsel %vm1497, %v3527, 0
        %3542 = vmatprep.subr.mxu0 0.0
        %3543 = vmatpush1.msra.mxu0 %v3528
        %3544 = vmatprep.subr.mxu0 0.0
        %3545 = vmatpush1.msra.mxu0 %v3529
        %3546 = vmatprep.subr.mxu0 0.0
        %3547 = vmatpush1.msra.mxu0 %v3530
        %3548 = vmatprep.subr.mxu0 0.0
        %3549 = vmatpush1.msra.mxu0 %v3531
        %3550 = vmatprep.subr.mxu0 0.0
        %3551 = vmatpush1.msra.mxu0 0.0
        %3552 = vmatprep.subr.mxu0 0.0
        %3553 = vmatpush1.msra.mxu0 0.0
        %3554 = vmatprep.subr.mxu0 0.0
        %3555 = vmatpush1.msra.mxu0 0.0
        %3556 = vmatprep.subr.mxu0 0.0
        %3557 = vmatpush1.msra.mxu0 0.0
        %3558 = vmatprep.subr.mxu0 0.0
        %3559 = vmatpush1.msra.mxu0 0.0
        %3560 = vmatprep.subr.mxu0 0.0
        %3561 = vmatpush1.msra.mxu0 0.0
        %3562 = vmatprep.subr.mxu0 0.0
        %3563 = vmatpush1.msra.mxu0 0.0
        %3564 = vmatprep.subr.mxu0 0.0
        %3565 = vmatpush1.msra.mxu0 0.0
        %3566 = vmatprep.subr.mxu0 0.0
        %3567 = vmatpush1.msra.mxu0 0.0
        %3568 = vmatprep.subr.mxu0 0.0
        %3569 = vmatpush1.msra.mxu0 0.0
        %3570 = vmatprep.subr.mxu0 0.0
        %3571 = vmatpush1.msra.mxu0 0.0
        %3572 = vmatprep.subr.mxu0 0.0
        %3573 = vmatpush1.msra.mxu0 0.0
        %3574 = vmatprep.subr.mxu0 0.0
        %3575 = vmatpush1.msra.mxu0 0.0
        %3576 = vmatprep.subr.mxu0 0.0
        %3577 = vmatpush1.msra.mxu0 0.0
        %3578 = vmatprep.subr.mxu0 0.0
        %3579 = vmatpush1.msra.mxu0 0.0
        %3580 = vmatprep.subr.mxu0 0.0
        %3581 = vmatpush1.msra.mxu0 0.0
        %3582 = vmatprep.subr.mxu0 0.0
        %3583 = vmatpush1.msra.mxu0 0.0
        %3584 = vmatprep.subr.mxu0 0.0
        %3585 = vmatpush1.msra.mxu0 0.0
        %3586 = vmatprep.subr.mxu0 0.0
        %3587 = vmatpush1.msra.mxu0 0.0
        %3588 = vmatprep.subr.mxu0 0.0
        %3589 = vmatpush1.msra.mxu0 0.0
        %3590 = vmatprep.subr.mxu0 0.0
        %3591 = vmatpush1.msra.mxu0 0.0
        %3592 = vmatprep.subr.mxu0 0.0
        %3593 = vmatpush1.msra.mxu0 0.0
        %3594 = vmatprep.subr.mxu0 0.0
        %3595 = vmatpush1.msra.mxu0 0.0
        %3596 = vmatprep.subr.mxu0 0.0
        %3597 = vmatpush1.msra.mxu0 0.0
        %3598 = vmatprep.subr.mxu0 0.0
        %3599 = vmatpush1.msra.mxu0 0.0
        %3600 = vmatprep.subr.mxu0 0.0
        %3601 = vmatpush1.msra.mxu0 0.0
        %3602 = vmatprep.subr.mxu0 0.0
        %3603 = vmatpush1.msra.mxu0 0.0
        %3604 = vmatprep.subr.mxu0 0.0
        %3605 = vmatpush1.msra.mxu0 0.0
        %3606 = vmatprep.mubr.f32.mxu0 0.0
        %3607 = vmatmul.mubr.f32.gmra.mrb[0].mxu0 %v3540
        %v3608 = vpop.f32.mrb[0].mxu0
        %v3609 = vadd.f32 %v3537, %v3608
        %v3610 = vpop.f32.mrb[0].mxu0
        %3611 = vdwg.mxu0
        %v3612 = vmax.f32 %v3609, 0.0
        %v3613 = vld [vmem:[#allocation41] sm:$0xff]
        %v3614 = vld [vmem:[#allocation41 + $0x8] sm:$0xff]
        %v3615 = vld [vmem:[#allocation41 + $0x10] sm:$0xff]
        %v3616 = vld [vmem:[#allocation41 + $0x18] sm:$0xff]
        %v3617 = vld [vmem:[#allocation41 + $0x20] sm:$0xff]
        %v3618 = vld [vmem:[#allocation41 + $0x28] sm:$0xff]
        %v3619 = vld [vmem:[#allocation41 + $0x30] sm:$0xff]
        %v3620 = vld [vmem:[#allocation41 + $0x38] sm:$0xff]
        %vm3621 = vcmask 523264
        %v3623 = vsel %vm3621, %v3612, 0
        %3625 = vmatprep.subr.mxu0 0.0
        %3626 = vmatpush1.msra.mxu0 %v3613
        %3627 = vmatprep.subr.mxu0 0.0
        %3628 = vmatpush1.msra.mxu0 %v3614
        %3629 = vmatprep.subr.mxu0 0.0
        %3630 = vmatpush1.msra.mxu0 %v3615
        %3631 = vmatprep.subr.mxu0 0.0
        %3632 = vmatpush1.msra.mxu0 %v3616
        %3633 = vmatprep.subr.mxu0 0.0
        %3634 = vmatpush1.msra.mxu0 %v3617
        %3635 = vmatprep.subr.mxu0 0.0
        %3636 = vmatpush1.msra.mxu0 %v3618
        %3637 = vmatprep.subr.mxu0 0.0
        %3638 = vmatpush1.msra.mxu0 %v3619
        %3639 = vmatprep.subr.mxu0 0.0
        %3640 = vmatpush1.msra.mxu0 %v3620
        %3641 = vmatprep.subr.mxu0 0.0
        %3642 = vmatpush1.msra.mxu0 0.0
        %3643 = vmatprep.subr.mxu0 0.0
        %3644 = vmatpush1.msra.mxu0 0.0
        %3645 = vmatprep.subr.mxu0 0.0
        %3646 = vmatpush1.msra.mxu0 0.0
        %3647 = vmatprep.subr.mxu0 0.0
        %3648 = vmatpush1.msra.mxu0 0.0
        %3649 = vmatprep.subr.mxu0 0.0
        %3650 = vmatpush1.msra.mxu0 0.0
        %3651 = vmatprep.subr.mxu0 0.0
        %3652 = vmatpush1.msra.mxu0 0.0
        %3653 = vmatprep.subr.mxu0 0.0
        %3654 = vmatpush1.msra.mxu0 0.0
        %3655 = vmatprep.subr.mxu0 0.0
        %3656 = vmatpush1.msra.mxu0 0.0
        %3657 = vmatprep.subr.mxu0 0.0
        %3658 = vmatpush1.msra.mxu0 0.0
        %3659 = vmatprep.subr.mxu0 0.0
        %3660 = vmatpush1.msra.mxu0 0.0
        %3661 = vmatprep.subr.mxu0 0.0
        %3662 = vmatpush1.msra.mxu0 0.0
        %3663 = vmatprep.subr.mxu0 0.0
        %3664 = vmatpush1.msra.mxu0 0.0
        %3665 = vmatprep.subr.mxu0 0.0
        %3666 = vmatpush1.msra.mxu0 0.0
        %3667 = vmatprep.subr.mxu0 0.0
        %3668 = vmatpush1.msra.mxu0 0.0
        %3669 = vmatprep.subr.mxu0 0.0
        %3670 = vmatpush1.msra.mxu0 0.0
        %3671 = vmatprep.subr.mxu0 0.0
        %3672 = vmatpush1.msra.mxu0 0.0
        %3673 = vmatprep.subr.mxu0 0.0
        %3674 = vmatpush1.msra.mxu0 0.0
        %3675 = vmatprep.subr.mxu0 0.0
        %3676 = vmatpush1.msra.mxu0 0.0
        %3677 = vmatprep.subr.mxu0 0.0
        %3678 = vmatpush1.msra.mxu0 0.0
        %3679 = vmatprep.subr.mxu0 0.0
        %3680 = vmatpush1.msra.mxu0 0.0
        %3681 = vmatprep.subr.mxu0 0.0
        %3682 = vmatpush1.msra.mxu0 0.0
        %3683 = vmatprep.subr.mxu0 0.0
        %3684 = vmatpush1.msra.mxu0 0.0
        %3685 = vmatprep.subr.mxu0 0.0
        %3686 = vmatpush1.msra.mxu0 0.0
        %3687 = vmatprep.subr.mxu0 0.0
        %3688 = vmatpush1.msra.mxu0 0.0
        %3689 = vmatprep.mubr.f32.mxu0 0.0
        %3690 = vmatmul.mubr.f32.gmra.mrb[0].mxu0 %v3623
        %v3691 = vpop.f32.mrb[0].mxu0
        %v3692 = vadd.f32 0.0, %v3691
        %v3693 = vpop.f32.mrb[0].mxu0
        %3694 = vdwg.mxu0
        %v3695 = vadd.f32 %v3527, %v3692
        %v3696 = vld [vmem:[#allocation43] sm:$0x1]
        %v3698 = vlaneseq
        %v3699 = vshrl.u32 %v3698, 7
        %v3700 = vsub.s32 0, %v3699
        %v3701 = vrot.slane %v3696, %v3700
        %v3703 = vadd.f32 %v3695, %v3701
        %v3704 = vld [vmem:[#allocation44] sm:$0x1]
        %v3705 = vld [vmem:[#allocation46] sm:$0x1]
        %v3706 = vsel %vm1497, %v3703, 0.0
        %3707 = vadd.xlane.f32.xlu0 %v3706
        %v3708 = vpop.xlane.xlu0 %3707
        %v3709 = vmul.f32 %v3708, %v2420
        %v3710 = vsub.f32 %v3703, %v3709
        %v3711 = vmul.f32 %v3710, %v3710
        %v3712 = vsel %vm1497, %v3711, 0.0
        %3713 = vadd.xlane.f32.xlu0 %v3712
        %v3714 = vpop.xlane.xlu0 %3713
        %v3715 = vmul.f32 %v3714, %v2420
        %v3716 = vadd.f32 %v3715, 1e-05
        %v3717 = vrsqrt.pop %v3716
        %v3718 = vmul.f32 %v3710, %v3717
        %v3720 = vlaneseq
        %v3721 = vshrl.u32 %v3720, 7
        %v3722 = vsub.s32 0, %v3721
        %v3723 = vrot.slane %v3704, %v3722
        %v3725 = vmul.f32 %v3718, %v3723
        %v3727 = vlaneseq
        %v3728 = vshrl.u32 %v3727, 7
        %v3729 = vsub.s32 0, %v3728
        %v3730 = vrot.slane %v3705, %v3729
        %v3732 = vadd.f32 %v3725, %v3730
        %3733 = vst.msk [vmem:[%s1474] sm:$0xff] %vm1497, %v3732
        %v3734 = vld [vmem:[#allocation47] sm:$0x1]
        %v3735 = vld [vmem:[#allocation49] sm:$0x1]
        %v3736 = vsel %vm1497, %v3732, 0.0
        %3737 = vadd.xlane.f32.xlu0 %v3736
        %v3738 = vpop.xlane.xlu0 %3737
        %v3739 = vmul.f32 %v3738, %v2420
        %v3740 = vsub.f32 %v3732, %v3739
        %v3741 = vmul.f32 %v3740, %v3740
        %v3742 = vsel %vm1497, %v3741, 0.0
        %3743 = vadd.xlane.f32.xlu0 %v3742
        %v3744 = vpop.xlane.xlu0 %3743
        %v3745 = vmul.f32 %v3744, %v2420
        %v3746 = vadd.f32 %v3745, 1e-05
        %v3747 = vrsqrt.pop %v3746
        %v3748 = vmul.f32 %v3740, %v3747
        %v3750 = vlaneseq
        %v3751 = vshrl.u32 %v3750, 7
        %v3752 = vsub.s32 0, %v3751
        %v3753 = vrot.slane %v3734, %v3752
        %v3755 = vmul.f32 %v3748, %v3753
        %v3757 = vlaneseq
        %v3758 = vshrl.u32 %v3757, 7
        %v3759 = vsub.s32 0, %v3758
        %v3760 = vrot.slane %v3735, %v3759
        %v3762 = vadd.f32 %v3755, %v3760
        %3763 = vst.msk [vmem:[%s1481] sm:$0xff] %vm1497, %v3762
        %s3764 = sand.u32 %s784, 1
        %s3765 = scalar_lea.sflag [#allocation4], %s3764
        %s3766 = sand.u32 %s784, 1
        %s3767 = smul.addr %s3766, 8
        %s3768 = scalar_lea.vmem [#allocation50], %s3767
        %s3769 = sand.u32 %s810, 1
        %s3770 = scalar_lea.sflag [#allocation52], %s3769
        %s3771 = sand.u32 %s810, 1
        %s3772 = smul.addr %s3771, 8
        %s3773 = scalar_lea.vmem [#allocation51], %s3772
        // Predicated region
        $region269: #{transformer_decoder_forward.2} parent=143 // pred_check
          %p3774 = pneg %p794
        $region270: #{transformer_decoder_forward.2} parent=143 // pred_check_branch
          %3776 = sbr.rel (%p3774) target = $region272
        $region271: #{transformer_decoder_forward.2} parent=143 // pred_region
          %s3778 = ssub.s32 128, 128
          %3779 = vsyncadd %s3765, %s3778
          %s3780 = smul.addr %s105, 128
          %s3781 = scalar_lea.hbm %s63, %s3780
          %s3783 = sshll.u32 %s3768, 4
          %s3784 = int_to_ptr.vmem [resolvable:$true] %s3783
          %3786 = dma.vmem_to_hbm [thread:$0]  %s3784, 128, %s3781, %s3765
        $region272: #{transformer_decoder_forward.2} parent=143 // pred_fallthru
          _
        // Predicated region
        $region273: #{transformer_decoder_forward.2} parent=143 // pred_check
          %p3787 = pneg %p820
        $region274: #{transformer_decoder_forward.2} parent=143 // pred_check_branch
          %3789 = sbr.rel (%p3787) target = $region276
        $region275: #{transformer_decoder_forward.2} parent=143 // pred_region
          %s3791 = ssub.s32 128, 128
          %3792 = vsyncadd %s3770, %s3791
          %s3793 = smul.addr %s105, 128
          %s3794 = scalar_lea.hbm %s65, %s3793
          %s3796 = sshll.u32 %s3773, 4
          %s3797 = int_to_ptr.vmem [resolvable:$true] %s3796
          %3799 = dma.vmem_to_hbm [thread:$0]  %s3797, 128, %s3794, %s3770
        $region276: #{transformer_decoder_forward.2} parent=143 // pred_fallthru
          _
      $region144: #{transformer_decoder_forward.2} parent=5 // pred_fallthru
        _
      %p3800 = scmp.le.s32.totalorder 2, %s100
      // Predicated region
      $region277: #{transformer_decoder_forward.2} parent=5 // pred_check
        %p3801 = pneg %p3800
      $region278: #{transformer_decoder_forward.2} parent=5 // pred_check_branch
        %3803 = sbr.rel (%p3801) target = $region280
      $region279: #{transformer_decoder_forward.2} parent=5 // pred_region
        %s3804 = ssub.s32 %s100, 2
        // Predicated region
        $region281: #{transformer_decoder_forward.2} parent=279 // pred_check
          %p3805 = pneg %p800
        $region282: #{transformer_decoder_forward.2} parent=279 // pred_check_branch
          %3807 = sbr.rel (%p3805) target = $region284
        $region283: #{transformer_decoder_forward.2} parent=279 // pred_region
          %s3808 = sand.u32 %s785, 1
          %s3809 = scalar_lea.sflag [#allocation4], %s3808
          %s3810 = sand.u32 %s785, 1
          %s3811 = smul.addr %s3810, 8
          %s3812 = scalar_lea.vmem [#allocation50], %s3811
          %3813 = dma.done %s3809, 128
        $region284: #{transformer_decoder_forward.2} parent=279 // pred_fallthru
          _
        // Predicated region
        $region285: #{transformer_decoder_forward.2} parent=279 // pred_check
          %p3814 = pneg %p826
        $region286: #{transformer_decoder_forward.2} parent=279 // pred_check_branch
          %3816 = sbr.rel (%p3814) target = $region288
        $region287: #{transformer_decoder_forward.2} parent=279 // pred_region
          %s3817 = sand.u32 %s811, 1
          %s3818 = scalar_lea.sflag [#allocation52], %s3817
          %s3819 = sand.u32 %s811, 1
          %s3820 = smul.addr %s3819, 8
          %s3821 = scalar_lea.vmem [#allocation51], %s3820
          %3822 = dma.done %s3818, 128
        $region288: #{transformer_decoder_forward.2} parent=279 // pred_fallthru
          _
      $region280: #{transformer_decoder_forward.2} parent=5 // pred_fallthru
        _
    $region6: #{transformer_decoder_forward.2} parent=1 // loop_footer
      %s104 = sadd.s32 1, %s100
    $region7: #{transformer_decoder_forward.2} parent=1 // loop_footer_branch
      %99 = sbr.rel target = $region3
    $region8: #{transformer_decoder_forward.2} parent=1 // loop_exit
      _
    %3823 = vsyncpa [#allocation3], 1
    %s3824 = scalar_lea.sflag [#allocation3], 1
    %3825 = vsyncpa %s3824, 1
    %3826 = vsyncpa [#allocation6], 1
    %s3827 = scalar_lea.sflag [#allocation6], 1
    %3828 = vsyncpa %s3827, 1
    %3829 = vsyncpa [#allocation9], 1
    %s3830 = scalar_lea.sflag [#allocation9], 1
    %3831 = vsyncpa %s3830, 1
    %3832 = vsyncpa [#allocation12], 1
    %3833 = vsyncpa [#allocation15], 1
    %3834 = vsyncpa [#allocation18], 1
    %3835 = vsyncpa [#allocation21], 1
    %3836 = vsyncpa [#allocation24], 1
    %3837 = vsyncpa [#allocation27], 1
    %3838 = vsyncpa [#allocation30], 1
    %3839 = vsyncpa [#allocation33], 1
    %3840 = vsyncpa [#allocation36], 1
    %3841 = vsyncpa [#allocation39], 1
    %3842 = vsyncpa [#allocation42], 1
    %3843 = vsyncpa [#allocation45], 1
    %3844 = vsyncpa [#allocation48], 1
    %3845 = vsyncpa [#allocation4], 1
    %s3846 = scalar_lea.sflag [#allocation4], 1
    %3847 = vsyncpa %s3846, 1
    %3848 = vsyncpa [#allocation52], 1
    %s3849 = scalar_lea.sflag [#allocation52], 1
    %3850 = vsyncpa %s3849, 1

</llo_original>
